<compile_context>
chip_gen: v7x
topology: tpu7x:2x2x1
jax: 0.10.0
libtpu: 0.0.40
codegen_flags: <defaults>
</compile_context>

<pallas_src>
import math

import numpy as np
import jax
import jax.numpy as jnp
from jax import lax
from jax.experimental import pallas as pl
from jax.experimental.pallas import tpu as pltpu

# ----------------------------- config ("args") ------------------------------
PAD_IDX = 0
HIDDEN = 32          # args.hidden_dim
N_HEAD = 4           # args.n_head
D_K = HIDDEN // N_HEAD
FFN_DIM = 64         # args.feed_forward_dim
N_LAYER = 2          # args.n_layer
VOCAB = 50           # args.output_dim
VOCAB_PAD = 128      # lane-dense padded vocab width for the final projection
MAX_LEN = 16         # args.max_len
EPS = 1e-6           # matches nn.LayerNorm(hidden_dim, eps=1e-06) in the spec
MASK_BIAS = -30.0    # finite additive mask: exp(-30)~1e-13, never overflows /
                     # never produces a zero softmax denominator


# ------------------------------ fused kernel --------------------------------
def _make_decoder_kernel(batch_block, T, S):
    """Kernel factory. One grid step processes `batch_block` batch elements,
    with their rows folded into a single [batch_block*T, H] slab."""

    def kernel(emb_ref, enc_ref, tbias_ref, dbias_ref,
               ln_g_ref, ln_b_ref,
               sa_wqkv_ref, sa_wo_ref,
               ea_wq_ref, ea_wkv_ref, ea_wo_ref,
               ffn_w1_ref, ffn_b1_ref, ffn_w2_ref, ffn_b2_ref,
               fin_g_ref, fin_b_ref, wout_ref,
               logits_ref, attn_ref):
        emb = emb_ref[...]          # [Bb*T, H]   batch folded into rows
        enc = enc_ref[...]          # [Bb*S, H]
        tbias = tbias_ref[0]        # [Bb*T, Bb*T] block-diag additive mask
        dbias = dbias_ref[0]        # [Bb*T, Bb*S]

        def layernorm(x, g, b):
            # single-pass stats: var = E[x^2] - mean^2 (fewer XLU reductions)
            mean = jnp.mean(x, axis=-1, keepdims=True)
            var = jnp.mean(x * x, axis=-1, keepdims=True) - mean * mean
            return (x - mean) * lax.rsqrt(var + EPS) * g + b

        def attend(q, k, v, bias, w_o, probs=None):
            # Per-head scores over the full folded row block; the head-concat
            # is folded into W_O via sublane-aligned row-block accumulation.
            # 1/sqrt(d_k) is already folded into the Q weights.
            out = None
            for h in range(N_HEAD):
                sl = slice(h * D_K, (h + 1) * D_K)
                s = lax.dot_general(q[:, sl], k[:, sl], (((1,), (1,)), ((), ())),
                                    preferred_element_type=jnp.float32)
                # finite mask bias -> no max-subtract needed (|scores| << 30)
                p = jnp.exp(s + bias)
                p = p * pl.reciprocal(jnp.sum(p, axis=-1, keepdims=True),
                                      approx=True)
                if probs is not None:
                    probs.append(p)
                ctx = jnp.dot(p, v[:, sl], preferred_element_type=jnp.float32)
                contrib = jnp.dot(ctx, w_o[sl, :],
                                  preferred_element_type=jnp.float32)
                out = contrib if out is None else out + contrib
            return out

        target = emb
        last_probs = []
        for l in range(N_LAYER):            # static unroll (N_LAYER = 2)
            g = ln_g_ref[l]                 # [1, H] (single LayerNorm reused 3x)
            b = ln_b_ref[l]

            # Faithful quirk: every layer consumes `embedding`, not `target`.
            x = emb

            # --- self attention ---------------------------------------------
            norm_t = layernorm(x, g, b)
            qkv = jnp.dot(norm_t, sa_wqkv_ref[l],
                          preferred_element_type=jnp.float32)       # [Bb*T, 3H]
            sa = attend(qkv[:, :HIDDEN], qkv[:, HIDDEN:2 * HIDDEN],
                        qkv[:, 2 * HIDDEN:], tbias, sa_wo_ref[l])
            self_attention = x + sa

            # --- encoder attention ------------------------------------------
            norm_sa = layernorm(self_attention, g, b)
            q = jnp.dot(norm_sa, ea_wq_ref[l],
                        preferred_element_type=jnp.float32)         # [Bb*T, H]
            kv = jnp.dot(enc, ea_wkv_ref[l],
                         preferred_element_type=jnp.float32)        # [Bb*S, 2H]
            probs = last_probs if l == N_LAYER - 1 else None
            ea = attend(q, kv[:, :HIDDEN], kv[:, HIDDEN:], dbias,
                        ea_wo_ref[l], probs)
            sub = self_attention + ea

            # --- position-wise FFN ------------------------------------------
            norm_sub = layernorm(sub, g, b)
            hdn = jnp.dot(norm_sub, ffn_w1_ref[l],
                          preferred_element_type=jnp.float32) + ffn_b1_ref[l]
            hdn = jnp.maximum(hdn, 0.0)
            ffn = jnp.dot(hdn, ffn_w2_ref[l],
                          preferred_element_type=jnp.float32) + ffn_b2_ref[l]
            target = sub + ffn

        # --- final norm + tied vocab projection (lane-dense padded output) --
        tn = layernorm(target, fin_g_ref[...], fin_b_ref[...])
        logits_ref[...] = jnp.dot(tn, wout_ref[...],
                                  preferred_element_type=jnp.float32)

        # --- last-layer encoder-attention map (diagonal per-batch blocks) ---
        for h in range(N_HEAD):
            p = last_probs[h]                               # [Bb*T, Bb*S]
            for bi in range(batch_block):
                attn_ref[bi, h] = p[bi * T:(bi + 1) * T, bi * S:(bi + 1) * S]

    return kernel


# ------------------------------ forward wrapper ------------------------------
def decoder_forward(params, target_ids, source_ids, encoder_output,
                    batch_block=None):
    B, T = target_ids.shape
    S = source_ids.shape[1]

    # batch_block=None -> whole batch in one grid step (best on single-TC
    # v5e/v6e). On v7x with larger B, set batch_block=B//2 to shard the
    # "parallel" batch-block axis across both TensorCores.
    Bb = B if batch_block is None else batch_block
    assert B % Bb == 0, "batch_block must divide B"
    nb = B // Bb

    # --- masks (create_target_mask) as block-diagonal additive float biases ---
    subsequent = jnp.triu(jnp.ones((T, T), jnp.bool_), k=1)
    tgt_pad = target_ids == PAD_IDX                                  # [B, T]
    src_pad = source_ids == PAD_IDX                                  # [B, S]
    target_mask = tgt_pad[:, None, :] | subsequent[None, :, :]       # [B, T, T]
    within_t = jnp.where(target_mask, MASK_BIAS, 0.0).astype(jnp.float32)
    within_d = jnp.broadcast_to(
        jnp.where(src_pad[:, None, :], MASK_BIAS, 0.0).astype(jnp.float32),
        (B, T, S))
    same = jnp.eye(B, dtype=bool)                                    # [B, B]
    # [B,T,B,T]/[B,T,B,S]: cross-batch blocks masked, diag blocks = within-batch
    tbias_full = jnp.where(same[:, None, :, None], within_t[:, :, None, :],
                           MASK_BIAS).reshape(B * T, B * T)
    dbias_full = jnp.where(same[:, None, :, None], within_d[:, :, None, :],
                           MASK_BIAS).reshape(B * T, B * S)
    # pre-block along a leading grid axis (keeps block last-2 dims == full dims)
    idx = jnp.arange(nb)
    tbias_blk = tbias_full.reshape(nb, Bb * T, nb, Bb * T)[idx, :, idx, :]
    dbias_blk = dbias_full.reshape(nb, Bb * T, nb, Bb * S)[idx, :, idx, :]

    # --- position vector (create_position_vector): pos+1, 0 for pad tokens ---
    pos = jnp.where(tgt_pad, 0, jnp.arange(1, T + 1, dtype=jnp.int32)[None, :])

    # --- embeddings (gathers stay in JAX; dropout == identity) ---
    tok = jnp.take(params["tok_emb"], target_ids, axis=0) * (HIDDEN ** 0.5)
    pe = jnp.take(params["pos_emb"], pos, axis=0)
    emb2d = (tok + pe).reshape(B * T, HIDDEN)
    enc2d = encoder_output.reshape(B * S, HIDDEN)

    # tied output projection weight, zero-padded to a lane-dense 128 columns
    wout = jnp.zeros((HIDDEN, VOCAB_PAD), jnp.float32).at[:, :VOCAB].set(
        params["tok_emb"].T)

    L = N_LAYER
    in_specs = [
        pl.BlockSpec((Bb * T, HIDDEN), lambda i: (i, 0)),            # embedding
        pl.BlockSpec((Bb * S, HIDDEN), lambda i: (i, 0)),            # encoder out
        pl.BlockSpec((1, Bb * T, Bb * T), lambda i: (i, 0, 0)),      # tgt bias
        pl.BlockSpec((1, Bb * T, Bb * S), lambda i: (i, 0, 0)),      # dec-enc bias
        pl.BlockSpec((L, 1, HIDDEN), lambda i: (0, 0, 0)),           # ln_g
        pl.BlockSpec((L, 1, HIDDEN), lambda i: (0, 0, 0)),           # ln_b
        pl.BlockSpec((L, HIDDEN, 3 * HIDDEN), lambda i: (0, 0, 0)),  # sa_wqkv
        pl.BlockSpec((L, HIDDEN, HIDDEN), lambda i: (0, 0, 0)),      # sa_wo
        pl.BlockSpec((L, HIDDEN, HIDDEN), lambda i: (0, 0, 0)),      # ea_wq
        pl.BlockSpec((L, HIDDEN, 2 * HIDDEN), lambda i: (0, 0, 0)),  # ea_wkv
        pl.BlockSpec((L, HIDDEN, HIDDEN), lambda i: (0, 0, 0)),      # ea_wo
        pl.BlockSpec((L, HIDDEN, FFN_DIM), lambda i: (0, 0, 0)),     # ffn_w1
        pl.BlockSpec((L, 1, FFN_DIM), lambda i: (0, 0, 0)),          # ffn_b1
        pl.BlockSpec((L, FFN_DIM, HIDDEN), lambda i: (0, 0, 0)),     # ffn_w2
        pl.BlockSpec((L, 1, HIDDEN), lambda i: (0, 0, 0)),           # ffn_b2
        pl.BlockSpec((1, HIDDEN), lambda i: (0, 0)),                 # final ln_g
        pl.BlockSpec((1, HIDDEN), lambda i: (0, 0)),                 # final ln_b
        pl.BlockSpec((HIDDEN, VOCAB_PAD), lambda i: (0, 0)),         # wout (padded)
    ]
    out_specs = (
        pl.BlockSpec((Bb * T, VOCAB_PAD), lambda i: (i, 0)),
        pl.BlockSpec((Bb, N_HEAD, T, S), lambda i: (i, 0, 0, 0)),
    )

    logits_pad, attn_map = pl.pallas_call(
        _make_decoder_kernel(Bb, T, S),
        out_shape=(
            jax.ShapeDtypeStruct((B * T, VOCAB_PAD), jnp.float32),
            jax.ShapeDtypeStruct((B, N_HEAD, T, S), jnp.float32),
        ),
        grid=(nb,),
        in_specs=in_specs,
        out_specs=out_specs,
        compiler_params=pltpu.CompilerParams(dimension_semantics=("parallel",)),
    )(emb2d, enc2d, tbias_blk, dbias_blk,
      params["ln_g"], params["ln_b"],
      params["sa_wqkv"], params["sa_wo"],
      params["ea_wq"], params["ea_wkv"], params["ea_wo"],
      params["ffn_w1"], params["ffn_b1"], params["ffn_w2"], params["ffn_b2"],
      params["fin_g"], params["fin_b"], wout)

    logits = logits_pad.reshape(B, T, VOCAB_PAD)[..., :VOCAB]
    return logits, attn_map


# ------------------------------ parameter init ------------------------------
def make_position_encoding(max_len, hidden_dim):
    tbl = np.array(
        [p / np.power(10000.0, 2.0 * i / hidden_dim)
         for p in range(max_len) for i in range(hidden_dim)],
        dtype=np.float64,
    ).reshape(max_len, hidden_dim)
    tbl[:, 0::2] = np.sin(tbl[:, 0::2])
    tbl[:, 1::2] = np.cos(tbl[:, 1::2])
    tbl[0] = 0.0
    return tbl.astype(np.float32)


def init_params(key):
    k_tok, k_layers = jax.random.split(key)
    tok = jax.random.normal(k_tok, (VOCAB, HIDDEN), jnp.float32) * (HIDDEN ** -0.5)
    tok = tok.at[PAD_IDX].set(0.0)  # padding_idx row zeroed
    pos = jnp.asarray(make_position_encoding(MAX_LEN + 1, HIDDEN))

    def w(k, shape, scale=0.05):
        return jax.random.normal(k, shape, jnp.float32) * scale

    # one-time weight transform: fold the 1/sqrt(d_k) attention scale into the
    # Q-projection weights (mathematically identical forward pass).
    qscale = 1.0 / math.sqrt(D_K)

    lkeys = jax.random.split(k_layers, N_LAYER)
    sa_wqkv, sa_wo, ea_wq, ea_wkv, ea_wo, ffn_w1, ffn_w2 = ([] for _ in range(7))
    for l in range(N_LAYER):
        ks = jax.random.split(lkeys[l], 10)
        sa_wqkv.append(jnp.concatenate(
            [w(ks[0], (HIDDEN, HIDDEN)) * qscale, w(ks[1], (HIDDEN, HIDDEN)),
             w(ks[2], (HIDDEN, HIDDEN))], axis=1))                      # [H, 3H]
        sa_wo.append(w(ks[3], (HIDDEN, HIDDEN)))
        ea_wq.append(w(ks[4], (HIDDEN, HIDDEN)) * qscale)
        ea_wkv.append(jnp.concatenate(
            [w(ks[5], (HIDDEN, HIDDEN)), w(ks[6], (HIDDEN, HIDDEN))], axis=1))
        ea_wo.append(w(ks[7], (HIDDEN, HIDDEN)))
        ffn_w1.append(w(ks[8], (HIDDEN, FFN_DIM)))
        ffn_w2.append(w(ks[9], (FFN_DIM, HIDDEN)))

    return dict(
        tok_emb=tok,
        pos_emb=pos,
        # one LayerNorm per DecoderLayer, reused for all 3 norms (matches spec)
        ln_g=jnp.ones((N_LAYER, 1, HIDDEN), jnp.float32),
        ln_b=jnp.zeros((N_LAYER, 1, HIDDEN), jnp.float32),
        sa_wqkv=jnp.stack(sa_wqkv), sa_wo=jnp.stack(sa_wo),
        ea_wq=jnp.stack(ea_wq), ea_wkv=jnp.stack(ea_wkv), ea_wo=jnp.stack(ea_wo),
        ffn_w1=jnp.stack(ffn_w1),
        ffn_b1=jnp.zeros((N_LAYER, 1, FFN_DIM), jnp.float32),
        ffn_w2=jnp.stack(ffn_w2),
        ffn_b2=jnp.zeros((N_LAYER, 1, HIDDEN), jnp.float32),
        fin_g=jnp.ones((1, HIDDEN), jnp.float32),
        fin_b=jnp.zeros((1, HIDDEN), jnp.float32),
    )


# ----------------------------------- main -----------------------------------
if __name__ == "__main__":
    B, T, S = 2, 8, 8
    key = jax.random.PRNGKey(0)
    k_p, k_t, k_s, k_e = jax.random.split(key, 4)

    params = init_params(k_p)
    # token ids in [1, VOCAB) so no pad tokens (pad rows would be fully masked)
    target_ids = jax.random.randint(k_t, (B, T), 1, VOCAB, dtype=jnp.int32)
    source_ids = jax.random.randint(k_s, (B, S), 1, VOCAB, dtype=jnp.int32)
    encoder_output = jax.random.normal(k_e, (B, S, HIDDEN), jnp.float32)

    fwd = jax.jit(decoder_forward)
    logits, attn_map = fwd(params, target_ids, source_ids, encoder_output)
    jax.block_until_ready((logits, attn_map))

    assert logits.shape == (B, T, VOCAB)
    assert attn_map.shape == (B, N_HEAD, T, S)
    assert bool(jnp.all(jnp.isfinite(logits)))
    assert bool(jnp.all(jnp.isfinite(attn_map)))
    print("KERNEL_OK")
</pallas_src>

<mosaic_0001>
module attributes {stable_mosaic.version = 11 : i64} {
  func.func @kernel(%arg0: i32, %arg1: memref<16x32xf32, #tpu.memory_space<vmem>>, %arg2: memref<16x32xf32, #tpu.memory_space<vmem>>, %arg3: memref<1x16x16xf32, #tpu.memory_space<vmem>>, %arg4: memref<1x16x16xf32, #tpu.memory_space<vmem>>, %arg5: memref<2x1x32xf32, #tpu.memory_space<vmem>>, %arg6: memref<2x1x32xf32, #tpu.memory_space<vmem>>, %arg7: memref<2x32x96xf32, #tpu.memory_space<vmem>>, %arg8: memref<2x32x32xf32, #tpu.memory_space<vmem>>, %arg9: memref<2x32x32xf32, #tpu.memory_space<vmem>>, %arg10: memref<2x32x64xf32, #tpu.memory_space<vmem>>, %arg11: memref<2x32x32xf32, #tpu.memory_space<vmem>>, %arg12: memref<2x32x64xf32, #tpu.memory_space<vmem>>, %arg13: memref<2x1x64xf32, #tpu.memory_space<vmem>>, %arg14: memref<2x64x32xf32, #tpu.memory_space<vmem>>, %arg15: memref<2x1x32xf32, #tpu.memory_space<vmem>>, %arg16: memref<1x32xf32, #tpu.memory_space<vmem>>, %arg17: memref<1x32xf32, #tpu.memory_space<vmem>>, %arg18: memref<32x128xf32, #tpu.memory_space<vmem>>, %arg19: memref<16x128xf32, #tpu.memory_space<vmem>>, %arg20: memref<2x4x8x8xf32, #tpu.memory_space<vmem>>) attributes {dimension_semantics = [#tpu.dimension_semantics<parallel>], iteration_bounds = array<i64: 1>, scalar_prefetch = 0 : i64, scratch_operands = 0 : i64, tpu.core_type = #tpu.core_type<tc>, window_params = [{transform_indices = @transform_0, window_bounds = array<i64: 16, 32>}, {transform_indices = @transform_1, window_bounds = array<i64: 16, 32>}, {transform_indices = @transform_2, window_bounds = array<i64: 1, 16, 16>}, {transform_indices = @transform_3, window_bounds = array<i64: 1, 16, 16>}, {pipeline_mode = #tpu.pipeline_mode<synchronous>, transform_indices = @transform_4, window_bounds = array<i64: 2, 1, 32>}, {pipeline_mode = #tpu.pipeline_mode<synchronous>, transform_indices = @transform_5, window_bounds = array<i64: 2, 1, 32>}, {pipeline_mode = #tpu.pipeline_mode<synchronous>, transform_indices = @transform_6, window_bounds = array<i64: 2, 32, 96>}, {pipeline_mode = #tpu.pipeline_mode<synchronous>, transform_indices = @transform_7, window_bounds = array<i64: 2, 32, 32>}, {pipeline_mode = #tpu.pipeline_mode<synchronous>, transform_indices = @transform_8, window_bounds = array<i64: 2, 32, 32>}, {pipeline_mode = #tpu.pipeline_mode<synchronous>, transform_indices = @transform_9, window_bounds = array<i64: 2, 32, 64>}, {pipeline_mode = #tpu.pipeline_mode<synchronous>, transform_indices = @transform_10, window_bounds = array<i64: 2, 32, 32>}, {pipeline_mode = #tpu.pipeline_mode<synchronous>, transform_indices = @transform_11, window_bounds = array<i64: 2, 32, 64>}, {pipeline_mode = #tpu.pipeline_mode<synchronous>, transform_indices = @transform_12, window_bounds = array<i64: 2, 1, 64>}, {pipeline_mode = #tpu.pipeline_mode<synchronous>, transform_indices = @transform_13, window_bounds = array<i64: 2, 64, 32>}, {pipeline_mode = #tpu.pipeline_mode<synchronous>, transform_indices = @transform_14, window_bounds = array<i64: 2, 1, 32>}, {pipeline_mode = #tpu.pipeline_mode<synchronous>, transform_indices = @transform_15, window_bounds = array<i64: 1, 32>}, {pipeline_mode = #tpu.pipeline_mode<synchronous>, transform_indices = @transform_16, window_bounds = array<i64: 1, 32>}, {pipeline_mode = #tpu.pipeline_mode<synchronous>, transform_indices = @transform_17, window_bounds = array<i64: 32, 128>}, {transform_indices = @transform_18, window_bounds = array<i64: 16, 128>}, {transform_indices = @transform_19, window_bounds = array<i64: 2, 4, 8, 8>}]} {
    %c0 = arith.constant 0 : index
    %c0_0 = arith.constant 0 : index
    %0 = vector.load %arg1[%c0, %c0_0] : memref<16x32xf32, #tpu.memory_space<vmem>>, vector<16x32xf32>
    %c0_1 = arith.constant 0 : index
    %c0_2 = arith.constant 0 : index
    %1 = vector.load %arg2[%c0_1, %c0_2] : memref<16x32xf32, #tpu.memory_space<vmem>>, vector<16x32xf32>
    %c0_3 = arith.constant 0 : index
    %c0_4 = arith.constant 0 : index
    %c0_5 = arith.constant 0 : index
    %2 = vector.load %arg3[%c0_3, %c0_4, %c0_5] : memref<1x16x16xf32, #tpu.memory_space<vmem>>, vector<1x16x16xf32>
    %3 = vector.shape_cast %2 : vector<1x16x16xf32> to vector<16x16xf32>
    %c0_6 = arith.constant 0 : index
    %c0_7 = arith.constant 0 : index
    %c0_8 = arith.constant 0 : index
    %4 = vector.load %arg4[%c0_6, %c0_7, %c0_8] : memref<1x16x16xf32, #tpu.memory_space<vmem>>, vector<1x16x16xf32>
    %5 = vector.shape_cast %4 : vector<1x16x16xf32> to vector<16x16xf32>
    %c1 = arith.constant 1 : index
    %c0_9 = arith.constant 0 : index
    %c0_10 = arith.constant 0 : index
    %6 = vector.load %arg5[%c1, %c0_9, %c0_10] : memref<2x1x32xf32, #tpu.memory_space<vmem>>, vector<1x1x32xf32>
    %7 = vector.shape_cast %6 : vector<1x1x32xf32> to vector<1x32xf32>
    %c1_11 = arith.constant 1 : index
    %c0_12 = arith.constant 0 : index
    %c0_13 = arith.constant 0 : index
    %8 = vector.load %arg6[%c1_11, %c0_12, %c0_13] : memref<2x1x32xf32, #tpu.memory_space<vmem>>, vector<1x1x32xf32>
    %9 = vector.shape_cast %8 : vector<1x1x32xf32> to vector<1x32xf32>
    %cst = arith.constant dense<0.000000e+00> : vector<16xf32>
    %10 = vector.multi_reduction <add>, %0, %cst [1] : vector<16x32xf32> to vector<16xf32>
    %11 = vector.shape_cast %10 : vector<16xf32> to vector<16x1xf32>
    %cst_14 = arith.constant 3.200000e+01 : f32
    %12 = vector.broadcast %cst_14 : f32 to vector<16x1xf32>
    %13 = arith.divf %11, %12 : vector<16x1xf32>
    %14 = arith.mulf %0, %0 : vector<16x32xf32>
    %cst_15 = arith.constant dense<0.000000e+00> : vector<16xf32>
    %15 = vector.multi_reduction <add>, %14, %cst_15 [1] : vector<16x32xf32> to vector<16xf32>
    %16 = vector.shape_cast %15 : vector<16xf32> to vector<16x1xf32>
    %cst_16 = arith.constant 3.200000e+01 : f32
    %17 = vector.broadcast %cst_16 : f32 to vector<16x1xf32>
    %18 = arith.divf %16, %17 : vector<16x1xf32>
    %19 = arith.mulf %13, %13 : vector<16x1xf32>
    %20 = arith.subf %18, %19 : vector<16x1xf32>
    %21 = vector.broadcast %13 : vector<16x1xf32> to vector<16x32xf32>
    %22 = arith.subf %0, %21 : vector<16x32xf32>
    %cst_17 = arith.constant 9.99999997E-7 : f32
    %23 = vector.broadcast %cst_17 : f32 to vector<16x1xf32>
    %24 = arith.addf %20, %23 : vector<16x1xf32>
    %25 = math.rsqrt %24 : vector<16x1xf32>
    %26 = vector.broadcast %25 : vector<16x1xf32> to vector<16x32xf32>
    %27 = arith.mulf %22, %26 : vector<16x32xf32>
    %28 = vector.broadcast %7 : vector<1x32xf32> to vector<16x32xf32>
    %29 = arith.mulf %27, %28 : vector<16x32xf32>
    %30 = vector.broadcast %9 : vector<1x32xf32> to vector<16x32xf32>
    %31 = arith.addf %29, %30 : vector<16x32xf32>
    %c1_18 = arith.constant 1 : index
    %c0_19 = arith.constant 0 : index
    %c0_20 = arith.constant 0 : index
    %32 = vector.load %arg7[%c1_18, %c0_19, %c0_20] : memref<2x32x96xf32, #tpu.memory_space<vmem>>, vector<1x32x96xf32>
    %33 = vector.shape_cast %32 : vector<1x32x96xf32> to vector<32x96xf32>
    %cst_21 = arith.constant dense<0.000000e+00> : vector<16x96xf32>
    %34 = tpu.matmul %31, %33, %cst_21 {dimension_numbers = #tpu.dot_dimension_numbers<[1], [0], [0], [1], [0, 0, 1, 1], [], []>} : vector<16x32xf32>, vector<32x96xf32>, vector<16x96xf32> -> vector<16x96xf32>
    %35 = vector.extract_strided_slice %34 {offsets = [0, 0], sizes = [16, 32], strides = [1, 1]} : vector<16x96xf32> to vector<16x32xf32>
    %36 = vector.extract_strided_slice %34 {offsets = [0, 32], sizes = [16, 32], strides = [1, 1]} : vector<16x96xf32> to vector<16x32xf32>
    %37 = vector.extract_strided_slice %34 {offsets = [0, 64], sizes = [16, 32], strides = [1, 1]} : vector<16x96xf32> to vector<16x32xf32>
    %c1_22 = arith.constant 1 : index
    %c0_23 = arith.constant 0 : index
    %c0_24 = arith.constant 0 : index
    %38 = vector.load %arg8[%c1_22, %c0_23, %c0_24] : memref<2x32x32xf32, #tpu.memory_space<vmem>>, vector<1x32x32xf32>
    %39 = vector.shape_cast %38 : vector<1x32x32xf32> to vector<32x32xf32>
    %40 = vector.extract_strided_slice %35 {offsets = [0, 0], sizes = [16, 8], strides = [1, 1]} : vector<16x32xf32> to vector<16x8xf32>
    %41 = vector.extract_strided_slice %36 {offsets = [0, 0], sizes = [16, 8], strides = [1, 1]} : vector<16x32xf32> to vector<16x8xf32>
    %cst_25 = arith.constant dense<0.000000e+00> : vector<16x16xf32>
    %42 = tpu.matmul %40, %41, %cst_25 {dimension_numbers = #tpu.dot_dimension_numbers<[1], [1], [0], [0], [0, 0, 1, 0], [], []>} : vector<16x8xf32>, vector<16x8xf32>, vector<16x16xf32> -> vector<16x16xf32>
    %43 = arith.addf %42, %3 : vector<16x16xf32>
    %44 = math.exp %43 : vector<16x16xf32>
    %cst_26 = arith.constant dense<0.000000e+00> : vector<16xf32>
    %45 = vector.multi_reduction <add>, %44, %cst_26 [1] : vector<16x16xf32> to vector<16xf32>
    %46 = vector.shape_cast %45 : vector<16xf32> to vector<16x1xf32>
    %47 = tpu.reciprocal %46 {approx = true} : vector<16x1xf32> -> vector<16x1xf32>
    %48 = vector.broadcast %47 : vector<16x1xf32> to vector<16x16xf32>
    %49 = arith.mulf %44, %48 : vector<16x16xf32>
    %50 = vector.extract_strided_slice %37 {offsets = [0, 0], sizes = [16, 8], strides = [1, 1]} : vector<16x32xf32> to vector<16x8xf32>
    %cst_27 = arith.constant dense<0.000000e+00> : vector<16x8xf32>
    %51 = tpu.matmul %49, %50, %cst_27 {dimension_numbers = #tpu.dot_dimension_numbers<[1], [0], [0], [1], [0, 0, 1, 1], [], []>} : vector<16x16xf32>, vector<16x8xf32>, vector<16x8xf32> -> vector<16x8xf32>
    %52 = vector.extract_strided_slice %39 {offsets = [0, 0], sizes = [8, 32], strides = [1, 1]} : vector<32x32xf32> to vector<8x32xf32>
    %cst_28 = arith.constant dense<0.000000e+00> : vector<16x32xf32>
    %53 = tpu.matmul %51, %52, %cst_28 {dimension_numbers = #tpu.dot_dimension_numbers<[1], [0], [0], [1], [0, 0, 1, 1], [], []>} : vector<16x8xf32>, vector<8x32xf32>, vector<16x32xf32> -> vector<16x32xf32>
    %54 = vector.extract_strided_slice %35 {offsets = [0, 8], sizes = [16, 8], strides = [1, 1]} : vector<16x32xf32> to vector<16x8xf32>
    %55 = vector.extract_strided_slice %36 {offsets = [0, 8], sizes = [16, 8], strides = [1, 1]} : vector<16x32xf32> to vector<16x8xf32>
    %cst_29 = arith.constant dense<0.000000e+00> : vector<16x16xf32>
    %56 = tpu.matmul %54, %55, %cst_29 {dimension_numbers = #tpu.dot_dimension_numbers<[1], [1], [0], [0], [0, 0, 1, 0], [], []>} : vector<16x8xf32>, vector<16x8xf32>, vector<16x16xf32> -> vector<16x16xf32>
    %57 = arith.addf %56, %3 : vector<16x16xf32>
    %58 = math.exp %57 : vector<16x16xf32>
    %cst_30 = arith.constant dense<0.000000e+00> : vector<16xf32>
    %59 = vector.multi_reduction <add>, %58, %cst_30 [1] : vector<16x16xf32> to vector<16xf32>
    %60 = vector.shape_cast %59 : vector<16xf32> to vector<16x1xf32>
    %61 = tpu.reciprocal %60 {approx = true} : vector<16x1xf32> -> vector<16x1xf32>
    %62 = vector.broadcast %61 : vector<16x1xf32> to vector<16x16xf32>
    %63 = arith.mulf %58, %62 : vector<16x16xf32>
    %64 = vector.extract_strided_slice %37 {offsets = [0, 8], sizes = [16, 8], strides = [1, 1]} : vector<16x32xf32> to vector<16x8xf32>
    %cst_31 = arith.constant dense<0.000000e+00> : vector<16x8xf32>
    %65 = tpu.matmul %63, %64, %cst_31 {dimension_numbers = #tpu.dot_dimension_numbers<[1], [0], [0], [1], [0, 0, 1, 1], [], []>} : vector<16x16xf32>, vector<16x8xf32>, vector<16x8xf32> -> vector<16x8xf32>
    %66 = vector.extract_strided_slice %39 {offsets = [8, 0], sizes = [8, 32], strides = [1, 1]} : vector<32x32xf32> to vector<8x32xf32>
    %cst_32 = arith.constant dense<0.000000e+00> : vector<16x32xf32>
    %67 = tpu.matmul %65, %66, %cst_32 {dimension_numbers = #tpu.dot_dimension_numbers<[1], [0], [0], [1], [0, 0, 1, 1], [], []>} : vector<16x8xf32>, vector<8x32xf32>, vector<16x32xf32> -> vector<16x32xf32>
    %68 = arith.addf %53, %67 : vector<16x32xf32>
    %69 = vector.extract_strided_slice %35 {offsets = [0, 16], sizes = [16, 8], strides = [1, 1]} : vector<16x32xf32> to vector<16x8xf32>
    %70 = vector.extract_strided_slice %36 {offsets = [0, 16], sizes = [16, 8], strides = [1, 1]} : vector<16x32xf32> to vector<16x8xf32>
    %cst_33 = arith.constant dense<0.000000e+00> : vector<16x16xf32>
    %71 = tpu.matmul %69, %70, %cst_33 {dimension_numbers = #tpu.dot_dimension_numbers<[1], [1], [0], [0], [0, 0, 1, 0], [], []>} : vector<16x8xf32>, vector<16x8xf32>, vector<16x16xf32> -> vector<16x16xf32>
    %72 = arith.addf %71, %3 : vector<16x16xf32>
    %73 = math.exp %72 : vector<16x16xf32>
    %cst_34 = arith.constant dense<0.000000e+00> : vector<16xf32>
    %74 = vector.multi_reduction <add>, %73, %cst_34 [1] : vector<16x16xf32> to vector<16xf32>
    %75 = vector.shape_cast %74 : vector<16xf32> to vector<16x1xf32>
    %76 = tpu.reciprocal %75 {approx = true} : vector<16x1xf32> -> vector<16x1xf32>
    %77 = vector.broadcast %76 : vector<16x1xf32> to vector<16x16xf32>
    %78 = arith.mulf %73, %77 : vector<16x16xf32>
    %79 = vector.extract_strided_slice %37 {offsets = [0, 16], sizes = [16, 8], strides = [1, 1]} : vector<16x32xf32> to vector<16x8xf32>
    %cst_35 = arith.constant dense<0.000000e+00> : vector<16x8xf32>
    %80 = tpu.matmul %78, %79, %cst_35 {dimension_numbers = #tpu.dot_dimension_numbers<[1], [0], [0], [1], [0, 0, 1, 1], [], []>} : vector<16x16xf32>, vector<16x8xf32>, vector<16x8xf32> -> vector<16x8xf32>
    %81 = vector.extract_strided_slice %39 {offsets = [16, 0], sizes = [8, 32], strides = [1, 1]} : vector<32x32xf32> to vector<8x32xf32>
    %cst_36 = arith.constant dense<0.000000e+00> : vector<16x32xf32>
    %82 = tpu.matmul %80, %81, %cst_36 {dimension_numbers = #tpu.dot_dimension_numbers<[1], [0], [0], [1], [0, 0, 1, 1], [], []>} : vector<16x8xf32>, vector<8x32xf32>, vector<16x32xf32> -> vector<16x32xf32>
    %83 = arith.addf %68, %82 : vector<16x32xf32>
    %84 = vector.extract_strided_slice %35 {offsets = [0, 24], sizes = [16, 8], strides = [1, 1]} : vector<16x32xf32> to vector<16x8xf32>
    %85 = vector.extract_strided_slice %36 {offsets = [0, 24], sizes = [16, 8], strides = [1, 1]} : vector<16x32xf32> to vector<16x8xf32>
    %cst_37 = arith.constant dense<0.000000e+00> : vector<16x16xf32>
    %86 = tpu.matmul %84, %85, %cst_37 {dimension_numbers = #tpu.dot_dimension_numbers<[1], [1], [0], [0], [0, 0, 1, 0], [], []>} : vector<16x8xf32>, vector<16x8xf32>, vector<16x16xf32> -> vector<16x16xf32>
    %87 = arith.addf %86, %3 : vector<16x16xf32>
    %88 = math.exp %87 : vector<16x16xf32>
    %cst_38 = arith.constant dense<0.000000e+00> : vector<16xf32>
    %89 = vector.multi_reduction <add>, %88, %cst_38 [1] : vector<16x16xf32> to vector<16xf32>
    %90 = vector.shape_cast %89 : vector<16xf32> to vector<16x1xf32>
    %91 = tpu.reciprocal %90 {approx = true} : vector<16x1xf32> -> vector<16x1xf32>
    %92 = vector.broadcast %91 : vector<16x1xf32> to vector<16x16xf32>
    %93 = arith.mulf %88, %92 : vector<16x16xf32>
    %94 = vector.extract_strided_slice %37 {offsets = [0, 24], sizes = [16, 8], strides = [1, 1]} : vector<16x32xf32> to vector<16x8xf32>
    %cst_39 = arith.constant dense<0.000000e+00> : vector<16x8xf32>
    %95 = tpu.matmul %93, %94, %cst_39 {dimension_numbers = #tpu.dot_dimension_numbers<[1], [0], [0], [1], [0, 0, 1, 1], [], []>} : vector<16x16xf32>, vector<16x8xf32>, vector<16x8xf32> -> vector<16x8xf32>
    %96 = vector.extract_strided_slice %39 {offsets = [24, 0], sizes = [8, 32], strides = [1, 1]} : vector<32x32xf32> to vector<8x32xf32>
    %cst_40 = arith.constant dense<0.000000e+00> : vector<16x32xf32>
    %97 = tpu.matmul %95, %96, %cst_40 {dimension_numbers = #tpu.dot_dimension_numbers<[1], [0], [0], [1], [0, 0, 1, 1], [], []>} : vector<16x8xf32>, vector<8x32xf32>, vector<16x32xf32> -> vector<16x32xf32>
    %98 = arith.addf %83, %97 : vector<16x32xf32>
    %99 = arith.addf %0, %98 : vector<16x32xf32>
    %cst_41 = arith.constant dense<0.000000e+00> : vector<16xf32>
    %100 = vector.multi_reduction <add>, %99, %cst_41 [1] : vector<16x32xf32> to vector<16xf32>
    %101 = vector.shape_cast %100 : vector<16xf32> to vector<16x1xf32>
    %cst_42 = arith.constant 3.200000e+01 : f32
    %102 = vector.broadcast %cst_42 : f32 to vector<16x1xf32>
    %103 = arith.divf %101, %102 : vector<16x1xf32>
    %104 = arith.mulf %99, %99 : vector<16x32xf32>
    %cst_43 = arith.constant dense<0.000000e+00> : vector<16xf32>
    %105 = vector.multi_reduction <add>, %104, %cst_43 [1] : vector<16x32xf32> to vector<16xf32>
    %106 = vector.shape_cast %105 : vector<16xf32> to vector<16x1xf32>
    %cst_44 = arith.constant 3.200000e+01 : f32
    %107 = vector.broadcast %cst_44 : f32 to vector<16x1xf32>
    %108 = arith.divf %106, %107 : vector<16x1xf32>
    %109 = arith.mulf %103, %103 : vector<16x1xf32>
    %110 = arith.subf %108, %109 : vector<16x1xf32>
    %111 = vector.broadcast %103 : vector<16x1xf32> to vector<16x32xf32>
    %112 = arith.subf %99, %111 : vector<16x32xf32>
    %cst_45 = arith.constant 9.99999997E-7 : f32
    %113 = vector.broadcast %cst_45 : f32 to vector<16x1xf32>
    %114 = arith.addf %110, %113 : vector<16x1xf32>
    %115 = math.rsqrt %114 : vector<16x1xf32>
    %116 = vector.broadcast %115 : vector<16x1xf32> to vector<16x32xf32>
    %117 = arith.mulf %112, %116 : vector<16x32xf32>
    %118 = vector.broadcast %7 : vector<1x32xf32> to vector<16x32xf32>
    %119 = arith.mulf %117, %118 : vector<16x32xf32>
    %120 = vector.broadcast %9 : vector<1x32xf32> to vector<16x32xf32>
    %121 = arith.addf %119, %120 : vector<16x32xf32>
    %c1_46 = arith.constant 1 : index
    %c0_47 = arith.constant 0 : index
    %c0_48 = arith.constant 0 : index
    %122 = vector.load %arg9[%c1_46, %c0_47, %c0_48] : memref<2x32x32xf32, #tpu.memory_space<vmem>>, vector<1x32x32xf32>
    %123 = vector.shape_cast %122 : vector<1x32x32xf32> to vector<32x32xf32>
    %cst_49 = arith.constant dense<0.000000e+00> : vector<16x32xf32>
    %124 = tpu.matmul %121, %123, %cst_49 {dimension_numbers = #tpu.dot_dimension_numbers<[1], [0], [0], [1], [0, 0, 1, 1], [], []>} : vector<16x32xf32>, vector<32x32xf32>, vector<16x32xf32> -> vector<16x32xf32>
    %c1_50 = arith.constant 1 : index
    %c0_51 = arith.constant 0 : index
    %c0_52 = arith.constant 0 : index
    %125 = vector.load %arg10[%c1_50, %c0_51, %c0_52] : memref<2x32x64xf32, #tpu.memory_space<vmem>>, vector<1x32x64xf32>
    %126 = vector.shape_cast %125 : vector<1x32x64xf32> to vector<32x64xf32>
    %cst_53 = arith.constant dense<0.000000e+00> : vector<16x64xf32>
    %127 = tpu.matmul %1, %126, %cst_53 {dimension_numbers = #tpu.dot_dimension_numbers<[1], [0], [0], [1], [0, 0, 1, 1], [], []>} : vector<16x32xf32>, vector<32x64xf32>, vector<16x64xf32> -> vector<16x64xf32>
    %128 = vector.extract_strided_slice %127 {offsets = [0, 0], sizes = [16, 32], strides = [1, 1]} : vector<16x64xf32> to vector<16x32xf32>
    %129 = vector.extract_strided_slice %127 {offsets = [0, 32], sizes = [16, 32], strides = [1, 1]} : vector<16x64xf32> to vector<16x32xf32>
    %c1_54 = arith.constant 1 : index
    %c0_55 = arith.constant 0 : index
    %c0_56 = arith.constant 0 : index
    %130 = vector.load %arg11[%c1_54, %c0_55, %c0_56] : memref<2x32x32xf32, #tpu.memory_space<vmem>>, vector<1x32x32xf32>
    %131 = vector.shape_cast %130 : vector<1x32x32xf32> to vector<32x32xf32>
    %132 = vector.extract_strided_slice %124 {offsets = [0, 0], sizes = [16, 8], strides = [1, 1]} : vector<16x32xf32> to vector<16x8xf32>
    %133 = vector.extract_strided_slice %128 {offsets = [0, 0], sizes = [16, 8], strides = [1, 1]} : vector<16x32xf32> to vector<16x8xf32>
    %cst_57 = arith.constant dense<0.000000e+00> : vector<16x16xf32>
    %134 = tpu.matmul %132, %133, %cst_57 {dimension_numbers = #tpu.dot_dimension_numbers<[1], [1], [0], [0], [0, 0, 1, 0], [], []>} : vector<16x8xf32>, vector<16x8xf32>, vector<16x16xf32> -> vector<16x16xf32>
    %135 = arith.addf %134, %5 : vector<16x16xf32>
    %136 = math.exp %135 : vector<16x16xf32>
    %cst_58 = arith.constant dense<0.000000e+00> : vector<16xf32>
    %137 = vector.multi_reduction <add>, %136, %cst_58 [1] : vector<16x16xf32> to vector<16xf32>
    %138 = vector.shape_cast %137 : vector<16xf32> to vector<16x1xf32>
    %139 = tpu.reciprocal %138 {approx = true} : vector<16x1xf32> -> vector<16x1xf32>
    %140 = vector.broadcast %139 : vector<16x1xf32> to vector<16x16xf32>
    %141 = arith.mulf %136, %140 : vector<16x16xf32>
    %142 = vector.extract_strided_slice %129 {offsets = [0, 0], sizes = [16, 8], strides = [1, 1]} : vector<16x32xf32> to vector<16x8xf32>
    %cst_59 = arith.constant dense<0.000000e+00> : vector<16x8xf32>
    %143 = tpu.matmul %141, %142, %cst_59 {dimension_numbers = #tpu.dot_dimension_numbers<[1], [0], [0], [1], [0, 0, 1, 1], [], []>} : vector<16x16xf32>, vector<16x8xf32>, vector<16x8xf32> -> vector<16x8xf32>
    %144 = vector.extract_strided_slice %131 {offsets = [0, 0], sizes = [8, 32], strides = [1, 1]} : vector<32x32xf32> to vector<8x32xf32>
    %cst_60 = arith.constant dense<0.000000e+00> : vector<16x32xf32>
    %145 = tpu.matmul %143, %144, %cst_60 {dimension_numbers = #tpu.dot_dimension_numbers<[1], [0], [0], [1], [0, 0, 1, 1], [], []>} : vector<16x8xf32>, vector<8x32xf32>, vector<16x32xf32> -> vector<16x32xf32>
    %146 = vector.extract_strided_slice %124 {offsets = [0, 8], sizes = [16, 8], strides = [1, 1]} : vector<16x32xf32> to vector<16x8xf32>
    %147 = vector.extract_strided_slice %128 {offsets = [0, 8], sizes = [16, 8], strides = [1, 1]} : vector<16x32xf32> to vector<16x8xf32>
    %cst_61 = arith.constant dense<0.000000e+00> : vector<16x16xf32>
    %148 = tpu.matmul %146, %147, %cst_61 {dimension_numbers = #tpu.dot_dimension_numbers<[1], [1], [0], [0], [0, 0, 1, 0], [], []>} : vector<16x8xf32>, vector<16x8xf32>, vector<16x16xf32> -> vector<16x16xf32>
    %149 = arith.addf %148, %5 : vector<16x16xf32>
    %150 = math.exp %149 : vector<16x16xf32>
    %cst_62 = arith.constant dense<0.000000e+00> : vector<16xf32>
    %151 = vector.multi_reduction <add>, %150, %cst_62 [1] : vector<16x16xf32> to vector<16xf32>
    %152 = vector.shape_cast %151 : vector<16xf32> to vector<16x1xf32>
    %153 = tpu.reciprocal %152 {approx = true} : vector<16x1xf32> -> vector<16x1xf32>
    %154 = vector.broadcast %153 : vector<16x1xf32> to vector<16x16xf32>
    %155 = arith.mulf %150, %154 : vector<16x16xf32>
    %156 = vector.extract_strided_slice %129 {offsets = [0, 8], sizes = [16, 8], strides = [1, 1]} : vector<16x32xf32> to vector<16x8xf32>
    %cst_63 = arith.constant dense<0.000000e+00> : vector<16x8xf32>
    %157 = tpu.matmul %155, %156, %cst_63 {dimension_numbers = #tpu.dot_dimension_numbers<[1], [0], [0], [1], [0, 0, 1, 1], [], []>} : vector<16x16xf32>, vector<16x8xf32>, vector<16x8xf32> -> vector<16x8xf32>
    %158 = vector.extract_strided_slice %131 {offsets = [8, 0], sizes = [8, 32], strides = [1, 1]} : vector<32x32xf32> to vector<8x32xf32>
    %cst_64 = arith.constant dense<0.000000e+00> : vector<16x32xf32>
    %159 = tpu.matmul %157, %158, %cst_64 {dimension_numbers = #tpu.dot_dimension_numbers<[1], [0], [0], [1], [0, 0, 1, 1], [], []>} : vector<16x8xf32>, vector<8x32xf32>, vector<16x32xf32> -> vector<16x32xf32>
    %160 = arith.addf %145, %159 : vector<16x32xf32>
    %161 = vector.extract_strided_slice %124 {offsets = [0, 16], sizes = [16, 8], strides = [1, 1]} : vector<16x32xf32> to vector<16x8xf32>
    %162 = vector.extract_strided_slice %128 {offsets = [0, 16], sizes = [16, 8], strides = [1, 1]} : vector<16x32xf32> to vector<16x8xf32>
    %cst_65 = arith.constant dense<0.000000e+00> : vector<16x16xf32>
    %163 = tpu.matmul %161, %162, %cst_65 {dimension_numbers = #tpu.dot_dimension_numbers<[1], [1], [0], [0], [0, 0, 1, 0], [], []>} : vector<16x8xf32>, vector<16x8xf32>, vector<16x16xf32> -> vector<16x16xf32>
    %164 = arith.addf %163, %5 : vector<16x16xf32>
    %165 = math.exp %164 : vector<16x16xf32>
    %cst_66 = arith.constant dense<0.000000e+00> : vector<16xf32>
    %166 = vector.multi_reduction <add>, %165, %cst_66 [1] : vector<16x16xf32> to vector<16xf32>
    %167 = vector.shape_cast %166 : vector<16xf32> to vector<16x1xf32>
    %168 = tpu.reciprocal %167 {approx = true} : vector<16x1xf32> -> vector<16x1xf32>
    %169 = vector.broadcast %168 : vector<16x1xf32> to vector<16x16xf32>
    %170 = arith.mulf %165, %169 : vector<16x16xf32>
    %171 = vector.extract_strided_slice %129 {offsets = [0, 16], sizes = [16, 8], strides = [1, 1]} : vector<16x32xf32> to vector<16x8xf32>
    %cst_67 = arith.constant dense<0.000000e+00> : vector<16x8xf32>
    %172 = tpu.matmul %170, %171, %cst_67 {dimension_numbers = #tpu.dot_dimension_numbers<[1], [0], [0], [1], [0, 0, 1, 1], [], []>} : vector<16x16xf32>, vector<16x8xf32>, vector<16x8xf32> -> vector<16x8xf32>
    %173 = vector.extract_strided_slice %131 {offsets = [16, 0], sizes = [8, 32], strides = [1, 1]} : vector<32x32xf32> to vector<8x32xf32>
    %cst_68 = arith.constant dense<0.000000e+00> : vector<16x32xf32>
    %174 = tpu.matmul %172, %173, %cst_68 {dimension_numbers = #tpu.dot_dimension_numbers<[1], [0], [0], [1], [0, 0, 1, 1], [], []>} : vector<16x8xf32>, vector<8x32xf32>, vector<16x32xf32> -> vector<16x32xf32>
    %175 = arith.addf %160, %174 : vector<16x32xf32>
    %176 = vector.extract_strided_slice %124 {offsets = [0, 24], sizes = [16, 8], strides = [1, 1]} : vector<16x32xf32> to vector<16x8xf32>
    %177 = vector.extract_strided_slice %128 {offsets = [0, 24], sizes = [16, 8], strides = [1, 1]} : vector<16x32xf32> to vector<16x8xf32>
    %cst_69 = arith.constant dense<0.000000e+00> : vector<16x16xf32>
    %178 = tpu.matmul %176, %177, %cst_69 {dimension_numbers = #tpu.dot_dimension_numbers<[1], [1], [0], [0], [0, 0, 1, 0], [], []>} : vector<16x8xf32>, vector<16x8xf32>, vector<16x16xf32> -> vector<16x16xf32>
    %179 = arith.addf %178, %5 : vector<16x16xf32>
    %180 = math.exp %179 : vector<16x16xf32>
    %cst_70 = arith.constant dense<0.000000e+00> : vector<16xf32>
    %181 = vector.multi_reduction <add>, %180, %cst_70 [1] : vector<16x16xf32> to vector<16xf32>
    %182 = vector.shape_cast %181 : vector<16xf32> to vector<16x1xf32>
    %183 = tpu.reciprocal %182 {approx = true} : vector<16x1xf32> -> vector<16x1xf32>
    %184 = vector.broadcast %183 : vector<16x1xf32> to vector<16x16xf32>
    %185 = arith.mulf %180, %184 : vector<16x16xf32>
    %186 = vector.extract_strided_slice %129 {offsets = [0, 24], sizes = [16, 8], strides = [1, 1]} : vector<16x32xf32> to vector<16x8xf32>
    %cst_71 = arith.constant dense<0.000000e+00> : vector<16x8xf32>
    %187 = tpu.matmul %185, %186, %cst_71 {dimension_numbers = #tpu.dot_dimension_numbers<[1], [0], [0], [1], [0, 0, 1, 1], [], []>} : vector<16x16xf32>, vector<16x8xf32>, vector<16x8xf32> -> vector<16x8xf32>
    %188 = vector.extract_strided_slice %131 {offsets = [24, 0], sizes = [8, 32], strides = [1, 1]} : vector<32x32xf32> to vector<8x32xf32>
    %cst_72 = arith.constant dense<0.000000e+00> : vector<16x32xf32>
    %189 = tpu.matmul %187, %188, %cst_72 {dimension_numbers = #tpu.dot_dimension_numbers<[1], [0], [0], [1], [0, 0, 1, 1], [], []>} : vector<16x8xf32>, vector<8x32xf32>, vector<16x32xf32> -> vector<16x32xf32>
    %190 = arith.addf %175, %189 : vector<16x32xf32>
    %191 = arith.addf %99, %190 : vector<16x32xf32>
    %cst_73 = arith.constant dense<0.000000e+00> : vector<16xf32>
    %192 = vector.multi_reduction <add>, %191, %cst_73 [1] : vector<16x32xf32> to vector<16xf32>
    %193 = vector.shape_cast %192 : vector<16xf32> to vector<16x1xf32>
    %cst_74 = arith.constant 3.200000e+01 : f32
    %194 = vector.broadcast %cst_74 : f32 to vector<16x1xf32>
    %195 = arith.divf %193, %194 : vector<16x1xf32>
    %196 = arith.mulf %191, %191 : vector<16x32xf32>
    %cst_75 = arith.constant dense<0.000000e+00> : vector<16xf32>
    %197 = vector.multi_reduction <add>, %196, %cst_75 [1] : vector<16x32xf32> to vector<16xf32>
    %198 = vector.shape_cast %197 : vector<16xf32> to vector<16x1xf32>
    %cst_76 = arith.constant 3.200000e+01 : f32
    %199 = vector.broadcast %cst_76 : f32 to vector<16x1xf32>
    %200 = arith.divf %198, %199 : vector<16x1xf32>
    %201 = arith.mulf %195, %195 : vector<16x1xf32>
    %202 = arith.subf %200, %201 : vector<16x1xf32>
    %203 = vector.broadcast %195 : vector<16x1xf32> to vector<16x32xf32>
    %204 = arith.subf %191, %203 : vector<16x32xf32>
    %cst_77 = arith.constant 9.99999997E-7 : f32
    %205 = vector.broadcast %cst_77 : f32 to vector<16x1xf32>
    %206 = arith.addf %202, %205 : vector<16x1xf32>
    %207 = math.rsqrt %206 : vector<16x1xf32>
    %208 = vector.broadcast %207 : vector<16x1xf32> to vector<16x32xf32>
    %209 = arith.mulf %204, %208 : vector<16x32xf32>
    %210 = vector.broadcast %7 : vector<1x32xf32> to vector<16x32xf32>
    %211 = arith.mulf %209, %210 : vector<16x32xf32>
    %212 = vector.broadcast %9 : vector<1x32xf32> to vector<16x32xf32>
    %213 = arith.addf %211, %212 : vector<16x32xf32>
    %c1_78 = arith.constant 1 : index
    %c0_79 = arith.constant 0 : index
    %c0_80 = arith.constant 0 : index
    %214 = vector.load %arg12[%c1_78, %c0_79, %c0_80] : memref<2x32x64xf32, #tpu.memory_space<vmem>>, vector<1x32x64xf32>
    %215 = vector.shape_cast %214 : vector<1x32x64xf32> to vector<32x64xf32>
    %cst_81 = arith.constant dense<0.000000e+00> : vector<16x64xf32>
    %216 = tpu.matmul %213, %215, %cst_81 {dimension_numbers = #tpu.dot_dimension_numbers<[1], [0], [0], [1], [0, 0, 1, 1], [], []>} : vector<16x32xf32>, vector<32x64xf32>, vector<16x64xf32> -> vector<16x64xf32>
    %c1_82 = arith.constant 1 : index
    %c0_83 = arith.constant 0 : index
    %c0_84 = arith.constant 0 : index
    %217 = vector.load %arg13[%c1_82, %c0_83, %c0_84] : memref<2x1x64xf32, #tpu.memory_space<vmem>>, vector<1x1x64xf32>
    %218 = vector.shape_cast %217 : vector<1x1x64xf32> to vector<1x64xf32>
    %219 = vector.broadcast %218 : vector<1x64xf32> to vector<16x64xf32>
    %220 = arith.addf %216, %219 : vector<16x64xf32>
    %cst_85 = arith.constant 0.000000e+00 : f32
    %221 = vector.broadcast %cst_85 : f32 to vector<16x64xf32>
    %222 = arith.maximumf %220, %221 : vector<16x64xf32>
    %c1_86 = arith.constant 1 : index
    %c0_87 = arith.constant 0 : index
    %c0_88 = arith.constant 0 : index
    %223 = vector.load %arg14[%c1_86, %c0_87, %c0_88] : memref<2x64x32xf32, #tpu.memory_space<vmem>>, vector<1x64x32xf32>
    %224 = vector.shape_cast %223 : vector<1x64x32xf32> to vector<64x32xf32>
    %cst_89 = arith.constant dense<0.000000e+00> : vector<16x32xf32>
    %225 = tpu.matmul %222, %224, %cst_89 {dimension_numbers = #tpu.dot_dimension_numbers<[1], [0], [0], [1], [0, 0, 1, 1], [], []>} : vector<16x64xf32>, vector<64x32xf32>, vector<16x32xf32> -> vector<16x32xf32>
    %c1_90 = arith.constant 1 : index
    %c0_91 = arith.constant 0 : index
    %c0_92 = arith.constant 0 : index
    %226 = vector.load %arg15[%c1_90, %c0_91, %c0_92] : memref<2x1x32xf32, #tpu.memory_space<vmem>>, vector<1x1x32xf32>
    %227 = vector.shape_cast %226 : vector<1x1x32xf32> to vector<1x32xf32>
    %228 = vector.broadcast %227 : vector<1x32xf32> to vector<16x32xf32>
    %229 = arith.addf %225, %228 : vector<16x32xf32>
    %230 = arith.addf %191, %229 : vector<16x32xf32>
    %c0_93 = arith.constant 0 : index
    %c0_94 = arith.constant 0 : index
    %231 = vector.load %arg16[%c0_93, %c0_94] : memref<1x32xf32, #tpu.memory_space<vmem>>, vector<1x32xf32>
    %c0_95 = arith.constant 0 : index
    %c0_96 = arith.constant 0 : index
    %232 = vector.load %arg17[%c0_95, %c0_96] : memref<1x32xf32, #tpu.memory_space<vmem>>, vector<1x32xf32>
    %cst_97 = arith.constant dense<0.000000e+00> : vector<16xf32>
    %233 = vector.multi_reduction <add>, %230, %cst_97 [1] : vector<16x32xf32> to vector<16xf32>
    %234 = vector.shape_cast %233 : vector<16xf32> to vector<16x1xf32>
    %cst_98 = arith.constant 3.200000e+01 : f32
    %235 = vector.broadcast %cst_98 : f32 to vector<16x1xf32>
    %236 = arith.divf %234, %235 : vector<16x1xf32>
    %237 = arith.mulf %230, %230 : vector<16x32xf32>
    %cst_99 = arith.constant dense<0.000000e+00> : vector<16xf32>
    %238 = vector.multi_reduction <add>, %237, %cst_99 [1] : vector<16x32xf32> to vector<16xf32>
    %239 = vector.shape_cast %238 : vector<16xf32> to vector<16x1xf32>
    %cst_100 = arith.constant 3.200000e+01 : f32
    %240 = vector.broadcast %cst_100 : f32 to vector<16x1xf32>
    %241 = arith.divf %239, %240 : vector<16x1xf32>
    %242 = arith.mulf %236, %236 : vector<16x1xf32>
    %243 = arith.subf %241, %242 : vector<16x1xf32>
    %244 = vector.broadcast %236 : vector<16x1xf32> to vector<16x32xf32>
    %245 = arith.subf %230, %244 : vector<16x32xf32>
    %cst_101 = arith.constant 9.99999997E-7 : f32
    %246 = vector.broadcast %cst_101 : f32 to vector<16x1xf32>
    %247 = arith.addf %243, %246 : vector<16x1xf32>
    %248 = math.rsqrt %247 : vector<16x1xf32>
    %249 = vector.broadcast %248 : vector<16x1xf32> to vector<16x32xf32>
    %250 = arith.mulf %245, %249 : vector<16x32xf32>
    %251 = vector.broadcast %231 : vector<1x32xf32> to vector<16x32xf32>
    %252 = arith.mulf %250, %251 : vector<16x32xf32>
    %253 = vector.broadcast %232 : vector<1x32xf32> to vector<16x32xf32>
    %254 = arith.addf %252, %253 : vector<16x32xf32>
    %c0_102 = arith.constant 0 : index
    %c0_103 = arith.constant 0 : index
    %255 = vector.load %arg18[%c0_102, %c0_103] : memref<32x128xf32, #tpu.memory_space<vmem>>, vector<32x128xf32>
    %cst_104 = arith.constant dense<0.000000e+00> : vector<16x128xf32>
    %256 = tpu.matmul %254, %255, %cst_104 {dimension_numbers = #tpu.dot_dimension_numbers<[1], [0], [0], [1], [0, 0, 1, 1], [], []>} : vector<16x32xf32>, vector<32x128xf32>, vector<16x128xf32> -> vector<16x128xf32>
    %c0_105 = arith.constant 0 : index
    %c0_106 = arith.constant 0 : index
    %257 = vector.load %arg19[%c0_105, %c0_106] : memref<16x128xf32, #tpu.memory_space<vmem>>, vector<16x128xf32>
    tpu.vector_store %arg19[%c0_105, %c0_106], %256 {strides = array<i32>} : memref<16x128xf32, #tpu.memory_space<vmem>>, vector<16x128xf32>,
    %258 = vector.extract_strided_slice %141 {offsets = [0, 0], sizes = [8, 8], strides = [1, 1]} : vector<16x16xf32> to vector<8x8xf32>
    %c0_107 = arith.constant 0 : index
    %c0_108 = arith.constant 0 : index
    %c0_109 = arith.constant 0 : index
    %c0_110 = arith.constant 0 : index
    %259 = vector.load %arg20[%c0_107, %c0_108, %c0_109, %c0_110] : memref<2x4x8x8xf32, #tpu.memory_space<vmem>>, vector<1x1x8x8xf32>
    %260 = vector.shape_cast %259 : vector<1x1x8x8xf32> to vector<8x8xf32>
    %261 = vector.shape_cast %258 : vector<8x8xf32> to vector<1x1x8x8xf32>
    tpu.vector_store %arg20[%c0_107, %c0_108, %c0_109, %c0_110], %261 {strides = array<i32>} : memref<2x4x8x8xf32, #tpu.memory_space<vmem>>, vector<1x1x8x8xf32>,
    %262 = vector.extract_strided_slice %141 {offsets = [8, 8], sizes = [8, 8], strides = [1, 1]} : vector<16x16xf32> to vector<8x8xf32>
    %c1_111 = arith.constant 1 : index
    %c0_112 = arith.constant 0 : index
    %c0_113 = arith.constant 0 : index
    %c0_114 = arith.constant 0 : index
    %263 = vector.load %arg20[%c1_111, %c0_112, %c0_113, %c0_114] : memref<2x4x8x8xf32, #tpu.memory_space<vmem>>, vector<1x1x8x8xf32>
    %264 = vector.shape_cast %263 : vector<1x1x8x8xf32> to vector<8x8xf32>
    %265 = vector.shape_cast %262 : vector<8x8xf32> to vector<1x1x8x8xf32>
    tpu.vector_store %arg20[%c1_111, %c0_112, %c0_113, %c0_114], %265 {strides = array<i32>} : memref<2x4x8x8xf32, #tpu.memory_space<vmem>>, vector<1x1x8x8xf32>,
    %266 = vector.extract_strided_slice %155 {offsets = [0, 0], sizes = [8, 8], strides = [1, 1]} : vector<16x16xf32> to vector<8x8xf32>
    %c0_115 = arith.constant 0 : index
    %c1_116 = arith.constant 1 : index
    %c0_117 = arith.constant 0 : index
    %c0_118 = arith.constant 0 : index
    %267 = vector.load %arg20[%c0_115, %c1_116, %c0_117, %c0_118] : memref<2x4x8x8xf32, #tpu.memory_space<vmem>>, vector<1x1x8x8xf32>
    %268 = vector.shape_cast %267 : vector<1x1x8x8xf32> to vector<8x8xf32>
    %269 = vector.shape_cast %266 : vector<8x8xf32> to vector<1x1x8x8xf32>
    tpu.vector_store %arg20[%c0_115, %c1_116, %c0_117, %c0_118], %269 {strides = array<i32>} : memref<2x4x8x8xf32, #tpu.memory_space<vmem>>, vector<1x1x8x8xf32>,
    %270 = vector.extract_strided_slice %155 {offsets = [8, 8], sizes = [8, 8], strides = [1, 1]} : vector<16x16xf32> to vector<8x8xf32>
    %c1_119 = arith.constant 1 : index
    %c1_120 = arith.constant 1 : index
    %c0_121 = arith.constant 0 : index
    %c0_122 = arith.constant 0 : index
    %271 = vector.load %arg20[%c1_119, %c1_120, %c0_121, %c0_122] : memref<2x4x8x8xf32, #tpu.memory_space<vmem>>, vector<1x1x8x8xf32>
    %272 = vector.shape_cast %271 : vector<1x1x8x8xf32> to vector<8x8xf32>
    %273 = vector.shape_cast %270 : vector<8x8xf32> to vector<1x1x8x8xf32>
    tpu.vector_store %arg20[%c1_119, %c1_120, %c0_121, %c0_122], %273 {strides = array<i32>} : memref<2x4x8x8xf32, #tpu.memory_space<vmem>>, vector<1x1x8x8xf32>,
    %274 = vector.extract_strided_slice %170 {offsets = [0, 0], sizes = [8, 8], strides = [1, 1]} : vector<16x16xf32> to vector<8x8xf32>
    %c0_123 = arith.constant 0 : index
    %c2 = arith.constant 2 : index
    %c0_124 = arith.constant 0 : index
    %c0_125 = arith.constant 0 : index
    %275 = vector.load %arg20[%c0_123, %c2, %c0_124, %c0_125] : memref<2x4x8x8xf32, #tpu.memory_space<vmem>>, vector<1x1x8x8xf32>
    %276 = vector.shape_cast %275 : vector<1x1x8x8xf32> to vector<8x8xf32>
    %277 = vector.shape_cast %274 : vector<8x8xf32> to vector<1x1x8x8xf32>
    tpu.vector_store %arg20[%c0_123, %c2, %c0_124, %c0_125], %277 {strides = array<i32>} : memref<2x4x8x8xf32, #tpu.memory_space<vmem>>, vector<1x1x8x8xf32>,
    %278 = vector.extract_strided_slice %170 {offsets = [8, 8], sizes = [8, 8], strides = [1, 1]} : vector<16x16xf32> to vector<8x8xf32>
    %c1_126 = arith.constant 1 : index
    %c2_127 = arith.constant 2 : index
    %c0_128 = arith.constant 0 : index
    %c0_129 = arith.constant 0 : index
    %279 = vector.load %arg20[%c1_126, %c2_127, %c0_128, %c0_129] : memref<2x4x8x8xf32, #tpu.memory_space<vmem>>, vector<1x1x8x8xf32>
    %280 = vector.shape_cast %279 : vector<1x1x8x8xf32> to vector<8x8xf32>
    %281 = vector.shape_cast %278 : vector<8x8xf32> to vector<1x1x8x8xf32>
    tpu.vector_store %arg20[%c1_126, %c2_127, %c0_128, %c0_129], %281 {strides = array<i32>} : memref<2x4x8x8xf32, #tpu.memory_space<vmem>>, vector<1x1x8x8xf32>,
    %282 = vector.extract_strided_slice %185 {offsets = [0, 0], sizes = [8, 8], strides = [1, 1]} : vector<16x16xf32> to vector<8x8xf32>
    %c0_130 = arith.constant 0 : index
    %c3 = arith.constant 3 : index
    %c0_131 = arith.constant 0 : index
    %c0_132 = arith.constant 0 : index
    %283 = vector.load %arg20[%c0_130, %c3, %c0_131, %c0_132] : memref<2x4x8x8xf32, #tpu.memory_space<vmem>>, vector<1x1x8x8xf32>
    %284 = vector.shape_cast %283 : vector<1x1x8x8xf32> to vector<8x8xf32>
    %285 = vector.shape_cast %282 : vector<8x8xf32> to vector<1x1x8x8xf32>
    tpu.vector_store %arg20[%c0_130, %c3, %c0_131, %c0_132], %285 {strides = array<i32>} : memref<2x4x8x8xf32, #tpu.memory_space<vmem>>, vector<1x1x8x8xf32>,
    %286 = vector.extract_strided_slice %185 {offsets = [8, 8], sizes = [8, 8], strides = [1, 1]} : vector<16x16xf32> to vector<8x8xf32>
    %c1_133 = arith.constant 1 : index
    %c3_134 = arith.constant 3 : index
    %c0_135 = arith.constant 0 : index
    %c0_136 = arith.constant 0 : index
    %287 = vector.load %arg20[%c1_133, %c3_134, %c0_135, %c0_136] : memref<2x4x8x8xf32, #tpu.memory_space<vmem>>, vector<1x1x8x8xf32>
    %288 = vector.shape_cast %287 : vector<1x1x8x8xf32> to vector<8x8xf32>
    %289 = vector.shape_cast %286 : vector<8x8xf32> to vector<1x1x8x8xf32>
    tpu.vector_store %arg20[%c1_133, %c3_134, %c0_135, %c0_136], %289 {strides = array<i32>} : memref<2x4x8x8xf32, #tpu.memory_space<vmem>>, vector<1x1x8x8xf32>,
    return
  }
  func.func @transform_0(%arg0: i32) -> (i32, i32) {
    %c0_i32 = arith.constant 0 : i32
    %c0_i32_0 = arith.constant 0 : i32
    return %arg0, %c0_i32 : i32, i32
  }
  func.func @transform_1(%arg0: i32) -> (i32, i32) {
    %c0_i32 = arith.constant 0 : i32
    %c0_i32_0 = arith.constant 0 : i32
    return %arg0, %c0_i32 : i32, i32
  }
  func.func @transform_2(%arg0: i32) -> (i32, i32, i32) {
    %c0_i32 = arith.constant 0 : i32
    %c0_i32_0 = arith.constant 0 : i32
    %c0_i32_1 = arith.constant 0 : i32
    return %arg0, %c0_i32, %c0_i32_0 : i32, i32, i32
  }
  func.func @transform_3(%arg0: i32) -> (i32, i32, i32) {
    %c0_i32 = arith.constant 0 : i32
    %c0_i32_0 = arith.constant 0 : i32
    %c0_i32_1 = arith.constant 0 : i32
    return %arg0, %c0_i32, %c0_i32_0 : i32, i32, i32
  }
  func.func @transform_4(%arg0: i32) -> (i32, i32, i32) {
    %c0_i32 = arith.constant 0 : i32
    %c0_i32_0 = arith.constant 0 : i32
    %c0_i32_1 = arith.constant 0 : i32
    %c0_i32_2 = arith.constant 0 : i32
    return %c0_i32, %c0_i32_0, %c0_i32_1 : i32, i32, i32
  }
  func.func @transform_5(%arg0: i32) -> (i32, i32, i32) {
    %c0_i32 = arith.constant 0 : i32
    %c0_i32_0 = arith.constant 0 : i32
    %c0_i32_1 = arith.constant 0 : i32
    %c0_i32_2 = arith.constant 0 : i32
    return %c0_i32, %c0_i32_0, %c0_i32_1 : i32, i32, i32
  }
  func.func @transform_6(%arg0: i32) -> (i32, i32, i32) {
    %c0_i32 = arith.constant 0 : i32
    %c0_i32_0 = arith.constant 0 : i32
    %c0_i32_1 = arith.constant 0 : i32
    %c0_i32_2 = arith.constant 0 : i32
    return %c0_i32, %c0_i32_0, %c0_i32_1 : i32, i32, i32
  }
  func.func @transform_7(%arg0: i32) -> (i32, i32, i32) {
    %c0_i32 = arith.constant 0 : i32
    %c0_i32_0 = arith.constant 0 : i32
    %c0_i32_1 = arith.constant 0 : i32
    %c0_i32_2 = arith.constant 0 : i32
    return %c0_i32, %c0_i32_0, %c0_i32_1 : i32, i32, i32
  }
  func.func @transform_8(%arg0: i32) -> (i32, i32, i32) {
    %c0_i32 = arith.constant 0 : i32
    %c0_i32_0 = arith.constant 0 : i32
    %c0_i32_1 = arith.constant 0 : i32
    %c0_i32_2 = arith.constant 0 : i32
    return %c0_i32, %c0_i32_0, %c0_i32_1 : i32, i32, i32
  }
  func.func @transform_9(%arg0: i32) -> (i32, i32, i32) {
    %c0_i32 = arith.constant 0 : i32
    %c0_i32_0 = arith.constant 0 : i32
    %c0_i32_1 = arith.constant 0 : i32
    %c0_i32_2 = arith.constant 0 : i32
    return %c0_i32, %c0_i32_0, %c0_i32_1 : i32, i32, i32
  }
  func.func @transform_10(%arg0: i32) -> (i32, i32, i32) {
    %c0_i32 = arith.constant 0 : i32
    %c0_i32_0 = arith.constant 0 : i32
    %c0_i32_1 = arith.constant 0 : i32
    %c0_i32_2 = arith.constant 0 : i32
    return %c0_i32, %c0_i32_0, %c0_i32_1 : i32, i32, i32
  }
  func.func @transform_11(%arg0: i32) -> (i32, i32, i32) {
    %c0_i32 = arith.constant 0 : i32
    %c0_i32_0 = arith.constant 0 : i32
    %c0_i32_1 = arith.constant 0 : i32
    %c0_i32_2 = arith.constant 0 : i32
    return %c0_i32, %c0_i32_0, %c0_i32_1 : i32, i32, i32
  }
  func.func @transform_12(%arg0: i32) -> (i32, i32, i32) {
    %c0_i32 = arith.constant 0 : i32
    %c0_i32_0 = arith.constant 0 : i32
    %c0_i32_1 = arith.constant 0 : i32
    %c0_i32_2 = arith.constant 0 : i32
    return %c0_i32, %c0_i32_0, %c0_i32_1 : i32, i32, i32
  }
  func.func @transform_13(%arg0: i32) -> (i32, i32, i32) {
    %c0_i32 = arith.constant 0 : i32
    %c0_i32_0 = arith.constant 0 : i32
    %c0_i32_1 = arith.constant 0 : i32
    %c0_i32_2 = arith.constant 0 : i32
    return %c0_i32, %c0_i32_0, %c0_i32_1 : i32, i32, i32
  }
  func.func @transform_14(%arg0: i32) -> (i32, i32, i32) {
    %c0_i32 = arith.constant 0 : i32
    %c0_i32_0 = arith.constant 0 : i32
    %c0_i32_1 = arith.constant 0 : i32
    %c0_i32_2 = arith.constant 0 : i32
    return %c0_i32, %c0_i32_0, %c0_i32_1 : i32, i32, i32
  }
  func.func @transform_15(%arg0: i32) -> (i32, i32) {
    %c0_i32 = arith.constant 0 : i32
    %c0_i32_0 = arith.constant 0 : i32
    %c0_i32_1 = arith.constant 0 : i32
    return %c0_i32, %c0_i32_0 : i32, i32
  }
  func.func @transform_16(%arg0: i32) -> (i32, i32) {
    %c0_i32 = arith.constant 0 : i32
    %c0_i32_0 = arith.constant 0 : i32
    %c0_i32_1 = arith.constant 0 : i32
    return %c0_i32, %c0_i32_0 : i32, i32
  }
  func.func @transform_17(%arg0: i32) -> (i32, i32) {
    %c0_i32 = arith.constant 0 : i32
    %c0_i32_0 = arith.constant 0 : i32
    %c0_i32_1 = arith.constant 0 : i32
    return %c0_i32, %c0_i32_0 : i32, i32
  }
  func.func @transform_18(%arg0: i32) -> (i32, i32) {
    %c0_i32 = arith.constant 0 : i32
    %c0_i32_0 = arith.constant 0 : i32
    return %arg0, %c0_i32 : i32, i32
  }
  func.func @transform_19(%arg0: i32) -> (i32, i32, i32, i32) {
    %c0_i32 = arith.constant 0 : i32
    %c0_i32_0 = arith.constant 0 : i32
    %c0_i32_1 = arith.constant 0 : i32
    %c0_i32_2 = arith.constant 0 : i32
    return %arg0, %c0_i32, %c0_i32_0, %c0_i32_1 : i32, i32, i32, i32
  }
}

</mosaic_0001>

<llo_original>
// kernel: decoder_forward.1
$region0: #{decoder_forward.1}
  #allocation0 [shape = 'u32[]', space=smem, size = 0x4, offset = 0x4, fixed_abs, tag = 'smem constant byte address 0x4 - core index']
  #allocation1 [shape = 'u32[144,128]{1,0:T(1,128)}', space=vmem, size = 0x12000, scoped, tag = 'internal scratch']
  %s0 = inlined_call_operand.vmem [shape: f32[16,32], index: 0, kind: input, shape index: {}]
  %s1 = inlined_call_operand.vmem [shape: f32[16,32], index: 1, kind: input, shape index: {}]
  %s2 = inlined_call_operand.vmem [shape: f32[1,16,16], index: 2, kind: input, shape index: {}]
  %s3 = inlined_call_operand.vmem [shape: f32[1,16,16], index: 3, kind: input, shape index: {}]
  %s4 = inlined_call_operand.vmem [shape: f32[2,1,32], index: 4, kind: input, shape index: {}]
  %s5 = inlined_call_operand.vmem [shape: f32[2,1,32], index: 5, kind: input, shape index: {}]
  %s6 = inlined_call_operand.vmem [shape: f32[2,32,96], index: 6, kind: input, shape index: {}]
  %s7 = inlined_call_operand.vmem [shape: f32[2,32,32], index: 7, kind: input, shape index: {}]
  %s8 = inlined_call_operand.vmem [shape: f32[2,32,32], index: 8, kind: input, shape index: {}]
  %s9 = inlined_call_operand.vmem [shape: f32[2,32,64], index: 9, kind: input, shape index: {}]
  %s10 = inlined_call_operand.vmem [shape: f32[2,32,32], index: 10, kind: input, shape index: {}]
  %s11 = inlined_call_operand.vmem [shape: f32[2,32,64], index: 11, kind: input, shape index: {}]
  %s12 = inlined_call_operand.vmem [shape: f32[2,1,64], index: 12, kind: input, shape index: {}]
  %s13 = inlined_call_operand.vmem [shape: f32[2,64,32], index: 13, kind: input, shape index: {}]
  %s14 = inlined_call_operand.vmem [shape: f32[2,1,32], index: 14, kind: input, shape index: {}]
  %s15 = inlined_call_operand.vmem [shape: f32[1,32], index: 15, kind: input, shape index: {}]
  %s16 = inlined_call_operand.vmem [shape: f32[1,32], index: 16, kind: input, shape index: {}]
  %s17 = inlined_call_operand.vmem [shape: f32[32,128], index: 17, kind: input, shape index: {}]
  %s18 = inlined_call_operand.hbm [shape: f32[16,128], index: 18, kind: output, shape index: {0}]
  %s19 = inlined_call_operand.hbm [shape: f32[2,4,8,8], index: 19, kind: output, shape index: {1}]
  %20 = xla_tuple %s18, %s19
  %s21 = sld [smem:[#allocation0]]
  $region90: #{decoder_forward.1} parent=0
    _
  %s23 = ssub.s32 1, %s21
  %s24 = scalar_select 0, %s23, %s21
  $region1: #{decoder_forward.1} parent=0
    #allocation2 [shape = 'u8[8192]{0}', space=vmem, size = 0x2000, scoped, tag = 'output window, operand 0, single buffered']
    #allocation3 [shape = 's32[1]{0}', space=sflag, size = 0x4, scoped, tag = 'scoped memory for decoder_forward.1']
    #allocation4 [shape = 'u8[32768]{0}', space=vmem, size = 0x8000, scoped, tag = 'output window, operand 1, single buffered']
    #allocation5 [shape = 's32[1]{0}', space=sflag, size = 0x4, scoped, tag = 'scoped memory for decoder_forward.1']
    %25 = vsyncpa [#allocation3], 0
    %26 = vsyncpa [#allocation5], 0
    // Predicated region
    $region2: #{decoder_forward.1} parent=1 // pred_check
      _
    $region3: #{decoder_forward.1} parent=1 // pred_check_branch
      %28 = sbr.rel (0) target = $region5
    $region4: #{decoder_forward.1} parent=1 // pred_region
      _
    $region5: #{decoder_forward.1} parent=1 // pred_fallthru
      _
    // Predicated region
    $region6: #{decoder_forward.1} parent=1 // pred_check
      _
    $region7: #{decoder_forward.1} parent=1 // pred_check_branch
      %30 = sbr.rel (0) target = $region9
    $region8: #{decoder_forward.1} parent=1 // pred_region
      _
    $region9: #{decoder_forward.1} parent=1 // pred_fallthru
      _
    // Predicated region
    $region10: #{decoder_forward.1} parent=1 // pred_check
      _
    $region11: #{decoder_forward.1} parent=1 // pred_check_branch
      %32 = sbr.rel (0) target = $region13
    $region12: #{decoder_forward.1} parent=1 // pred_region
      _
    $region13: #{decoder_forward.1} parent=1 // pred_fallthru
      _
    // Predicated region
    $region14: #{decoder_forward.1} parent=1 // pred_check
      _
    $region15: #{decoder_forward.1} parent=1 // pred_check_branch
      %34 = sbr.rel (0) target = $region17
    $region16: #{decoder_forward.1} parent=1 // pred_region
      _
    $region17: #{decoder_forward.1} parent=1 // pred_fallthru
      _
    // Predicated region
    $region18: #{decoder_forward.1} parent=1 // pred_check
      _
    $region19: #{decoder_forward.1} parent=1 // pred_check_branch
      %36 = sbr.rel (0) target = $region21
    $region20: #{decoder_forward.1} parent=1 // pred_region
      _
    $region21: #{decoder_forward.1} parent=1 // pred_fallthru
      _
    // Predicated region
    $region22: #{decoder_forward.1} parent=1 // pred_check
      _
    $region23: #{decoder_forward.1} parent=1 // pred_check_branch
      %38 = sbr.rel (0) target = $region25
    $region24: #{decoder_forward.1} parent=1 // pred_region
      _
    $region25: #{decoder_forward.1} parent=1 // pred_fallthru
      _
    // Predicated region
    $region26: #{decoder_forward.1} parent=1 // pred_check
      _
    $region27: #{decoder_forward.1} parent=1 // pred_check_branch
      %40 = sbr.rel (0) target = $region29
    $region28: #{decoder_forward.1} parent=1 // pred_region
      _
    $region29: #{decoder_forward.1} parent=1 // pred_fallthru
      _
    // Predicated region
    $region30: #{decoder_forward.1} parent=1 // pred_check
      _
    $region31: #{decoder_forward.1} parent=1 // pred_check_branch
      %42 = sbr.rel (0) target = $region33
    $region32: #{decoder_forward.1} parent=1 // pred_region
      _
    $region33: #{decoder_forward.1} parent=1 // pred_fallthru
      _
    // Predicated region
    $region34: #{decoder_forward.1} parent=1 // pred_check
      _
    $region35: #{decoder_forward.1} parent=1 // pred_check_branch
      %44 = sbr.rel (0) target = $region37
    $region36: #{decoder_forward.1} parent=1 // pred_region
      _
    $region37: #{decoder_forward.1} parent=1 // pred_fallthru
      _
    // Predicated region
    $region38: #{decoder_forward.1} parent=1 // pred_check
      _
    $region39: #{decoder_forward.1} parent=1 // pred_check_branch
      %46 = sbr.rel (0) target = $region41
    $region40: #{decoder_forward.1} parent=1 // pred_region
      _
    $region41: #{decoder_forward.1} parent=1 // pred_fallthru
      _
    // Predicated region
    $region42: #{decoder_forward.1} parent=1 // pred_check
      _
    $region43: #{decoder_forward.1} parent=1 // pred_check_branch
      %48 = sbr.rel (0) target = $region45
    $region44: #{decoder_forward.1} parent=1 // pred_region
      _
    $region45: #{decoder_forward.1} parent=1 // pred_fallthru
      _
    // Predicated region
    $region46: #{decoder_forward.1} parent=1 // pred_check
      _
    $region47: #{decoder_forward.1} parent=1 // pred_check_branch
      %50 = sbr.rel (0) target = $region49
    $region48: #{decoder_forward.1} parent=1 // pred_region
      _
    $region49: #{decoder_forward.1} parent=1 // pred_fallthru
      _
    // Predicated region
    $region50: #{decoder_forward.1} parent=1 // pred_check
      _
    $region51: #{decoder_forward.1} parent=1 // pred_check_branch
      %52 = sbr.rel (0) target = $region53
    $region52: #{decoder_forward.1} parent=1 // pred_region
      _
    $region53: #{decoder_forward.1} parent=1 // pred_fallthru
      _
    // Predicated region
    $region54: #{decoder_forward.1} parent=1 // pred_check
      _
    $region55: #{decoder_forward.1} parent=1 // pred_check_branch
      %54 = sbr.rel (0) target = $region57
    $region56: #{decoder_forward.1} parent=1 // pred_region
      _
    $region57: #{decoder_forward.1} parent=1 // pred_fallthru
      _
    // Predicated region
    $region58: #{decoder_forward.1} parent=1 // pred_check
      _
    $region59: #{decoder_forward.1} parent=1 // pred_check_branch
      %56 = sbr.rel (0) target = $region61
    $region60: #{decoder_forward.1} parent=1 // pred_region
      _
    $region61: #{decoder_forward.1} parent=1 // pred_fallthru
      _
    // Predicated region
    $region62: #{decoder_forward.1} parent=1 // pred_check
      _
    $region63: #{decoder_forward.1} parent=1 // pred_check_branch
      %58 = sbr.rel (0) target = $region65
    $region64: #{decoder_forward.1} parent=1 // pred_region
      _
    $region65: #{decoder_forward.1} parent=1 // pred_fallthru
      _
    // Predicated region
    $region66: #{decoder_forward.1} parent=1 // pred_check
      _
    $region67: #{decoder_forward.1} parent=1 // pred_check_branch
      %60 = sbr.rel (0) target = $region69
    $region68: #{decoder_forward.1} parent=1 // pred_region
      _
    $region69: #{decoder_forward.1} parent=1 // pred_fallthru
      _
    // Predicated region
    $region70: #{decoder_forward.1} parent=1 // pred_check
      _
    $region71: #{decoder_forward.1} parent=1 // pred_check_branch
      %62 = sbr.rel (0) target = $region73
    $region72: #{decoder_forward.1} parent=1 // pred_region
      _
    $region73: #{decoder_forward.1} parent=1 // pred_fallthru
      _
    %v63 = vld [vmem:[%s0] sm:$0xff]
    %v64 = vld [vmem:[%s0 + $0x8] sm:$0xff]
    %v65 = vld [vmem:[%s1] sm:$0xff]
    %v66 = vld [vmem:[%s1 + $0x8] sm:$0xff]
    %v67 = vld [vmem:[%s2] sm:$0xff]
    %v68 = vld [vmem:[%s2 + $0x8] sm:$0xff]
    %v69 = vld [vmem:[%s3] sm:$0xff]
    %v70 = vld [vmem:[%s3 + $0x8] sm:$0xff]
    %s71 = scalar_lea.vmem %s4, 1
    %v72 = vld [vmem:[%s71] sm:$0x1]
    %s73 = scalar_lea.vmem %s5, 1
    %v74 = vld [vmem:[%s73] sm:$0x1]
    %vm75 = vcmask 261120
    %v76 = vsel %vm75, %v63, 0.0
    %77 = vadd.xlane.f32.xlu0 %v76
    %v78 = vpop.xlane.xlu0 %77
    %v79 = vsel %vm75, %v64, 0.0
    %80 = vadd.xlane.f32.xlu0 %v79
    %v81 = vpop.xlane.xlu0 %80
    %v82 = vrcp.pop 32.0
    %v83 = vmul.f32 %v78, %v82
    %v84 = vmul.f32 %v81, %v82
    %v85 = vmul.f32 %v63, %v63
    %v86 = vmul.f32 %v64, %v64
    %v87 = vsel %vm75, %v85, 0.0
    %88 = vadd.xlane.f32.xlu0 %v87
    %v89 = vpop.xlane.xlu0 %88
    %v90 = vsel %vm75, %v86, 0.0
    %91 = vadd.xlane.f32.xlu0 %v90
    %v92 = vpop.xlane.xlu0 %91
    %v93 = vmul.f32 %v89, %v82
    %v94 = vmul.f32 %v92, %v82
    %v95 = vmul.f32 %v83, %v83
    %v96 = vmul.f32 %v84, %v84
    %v97 = vsub.f32 %v93, %v95
    %v98 = vsub.f32 %v94, %v96
    %v99 = vsub.f32 %v63, %v83
    %v100 = vsub.f32 %v64, %v84
    %v101 = vadd.f32 %v97, 1e-06
    %v102 = vadd.f32 %v98, 1e-06
    %v103 = vrsqrt.pop %v101
    %v104 = vrsqrt.pop %v102
    %v105 = vmul.f32 %v99, %v103
    %v106 = vmul.f32 %v100, %v104
    %v108 = vlaneseq
    %v109 = vshrl.u32 %v108, 7
    %v110 = vsub.s32 0, %v109
    %v111 = vrot.slane %v72, %v110
    %v113 = vmul.f32 %v105, %v111
    %v114 = vmul.f32 %v106, %v111
    %v116 = vlaneseq
    %v117 = vshrl.u32 %v116, 7
    %v118 = vsub.s32 0, %v117
    %v119 = vrot.slane %v74, %v118
    %v121 = vadd.f32 %v113, %v119
    %v122 = vadd.f32 %v114, %v119
    %s123 = scalar_lea.vmem %s6, 32
    %v124 = vld [vmem:[%s123] sm:$0xff]
    %v125 = vld [vmem:[%s123 + $0x8] sm:$0xff]
    %v126 = vld [vmem:[%s123 + $0x10] sm:$0xff]
    %v127 = vld [vmem:[%s123 + $0x18] sm:$0xff]
    %v129 = vsel %vm75, %v121, 0
    %v132 = vsel %vm75, %v122, 0
    %134 = vmatprep.subr.mxu0 0.0
    %135 = vmatpush1.msra.mxu0 %v124
    %136 = vmatprep.subr.mxu0 0.0
    %137 = vmatpush1.msra.mxu0 %v125
    %138 = vmatprep.subr.mxu0 0.0
    %139 = vmatpush1.msra.mxu0 %v126
    %140 = vmatprep.subr.mxu0 0.0
    %141 = vmatpush1.msra.mxu0 %v127
    %142 = vmatprep.subr.mxu0 0.0
    %143 = vmatpush1.msra.mxu0 0.0
    %144 = vmatprep.subr.mxu0 0.0
    %145 = vmatpush1.msra.mxu0 0.0
    %146 = vmatprep.subr.mxu0 0.0
    %147 = vmatpush1.msra.mxu0 0.0
    %148 = vmatprep.subr.mxu0 0.0
    %149 = vmatpush1.msra.mxu0 0.0
    %150 = vmatprep.subr.mxu0 0.0
    %151 = vmatpush1.msra.mxu0 0.0
    %152 = vmatprep.subr.mxu0 0.0
    %153 = vmatpush1.msra.mxu0 0.0
    %154 = vmatprep.subr.mxu0 0.0
    %155 = vmatpush1.msra.mxu0 0.0
    %156 = vmatprep.subr.mxu0 0.0
    %157 = vmatpush1.msra.mxu0 0.0
    %158 = vmatprep.subr.mxu0 0.0
    %159 = vmatpush1.msra.mxu0 0.0
    %160 = vmatprep.subr.mxu0 0.0
    %161 = vmatpush1.msra.mxu0 0.0
    %162 = vmatprep.subr.mxu0 0.0
    %163 = vmatpush1.msra.mxu0 0.0
    %164 = vmatprep.subr.mxu0 0.0
    %165 = vmatpush1.msra.mxu0 0.0
    %166 = vmatprep.subr.mxu0 0.0
    %167 = vmatpush1.msra.mxu0 0.0
    %168 = vmatprep.subr.mxu0 0.0
    %169 = vmatpush1.msra.mxu0 0.0
    %170 = vmatprep.subr.mxu0 0.0
    %171 = vmatpush1.msra.mxu0 0.0
    %172 = vmatprep.subr.mxu0 0.0
    %173 = vmatpush1.msra.mxu0 0.0
    %174 = vmatprep.subr.mxu0 0.0
    %175 = vmatpush1.msra.mxu0 0.0
    %176 = vmatprep.subr.mxu0 0.0
    %177 = vmatpush1.msra.mxu0 0.0
    %178 = vmatprep.subr.mxu0 0.0
    %179 = vmatpush1.msra.mxu0 0.0
    %180 = vmatprep.subr.mxu0 0.0
    %181 = vmatpush1.msra.mxu0 0.0
    %182 = vmatprep.subr.mxu0 0.0
    %183 = vmatpush1.msra.mxu0 0.0
    %184 = vmatprep.subr.mxu0 0.0
    %185 = vmatpush1.msra.mxu0 0.0
    %186 = vmatprep.subr.mxu0 0.0
    %187 = vmatpush1.msra.mxu0 0.0
    %188 = vmatprep.subr.mxu0 0.0
    %189 = vmatpush1.msra.mxu0 0.0
    %190 = vmatprep.subr.mxu0 0.0
    %191 = vmatpush1.msra.mxu0 0.0
    %192 = vmatprep.subr.mxu0 0.0
    %193 = vmatpush1.msra.mxu0 0.0
    %194 = vmatprep.subr.mxu0 0.0
    %195 = vmatpush1.msra.mxu0 0.0
    %196 = vmatprep.subr.mxu0 0.0
    %197 = vmatpush1.msra.mxu0 0.0
    %198 = vmatprep.mubr.f32.mxu0 0.0
    %199 = vmatmul.mubr.f32.gmra.mrb[0].mxu0 %v129
    %v200 = vpop.f32.mrb[0].mxu0
    %v201 = vadd.f32 0.0, %v200
    %v202 = vpop.f32.mrb[0].mxu0
    %203 = vmatprep.mubr.f32.mxu0 0.0
    %204 = vmatmul.mubr.f32.gmra.mrb[0].mxu0 %v132
    %v205 = vpop.f32.mrb[0].mxu0
    %v206 = vadd.f32 0.0, %v205
    %v207 = vpop.f32.mrb[0].mxu0
    %208 = vdwg.mxu0
    %s209 = scalar_lea.vmem %s7, 32
    %v210 = vld [vmem:[%s209] sm:$0xff]
    %v211 = vld [vmem:[%s209 + $0x8] sm:$0xff]
    %v212 = vld [vmem:[%s209 + $0x10] sm:$0xff]
    %v213 = vld [vmem:[%s209 + $0x18] sm:$0xff]
    %216 = vrot.lane.b32.xlu0 %v201, 96
    %v217 = vpop.permute.xlu0 %216
    %218 = vrot.lane.b32.xlu0 %v206, 96
    %v219 = vpop.permute.xlu0 %218
    %vm220 = vcmask 64512
    %v221 = vsel %vm220, %v201, 0
    %v223 = vsel %vm220, %v206, 0
    %v225 = vsel %vm220, %v217, 0
    %v227 = vsel %vm220, %v219, 0
    %229 = vmatprep.subr.mxu0 0.0
    %230 = vmatpush1.xpose.msra.mxu0 %v225
    %231 = vmatprep.subr.mxu0 0.0
    %232 = vmatpush1.xpose.msra.mxu0 %v227
    %233 = vmatprep.subr.mxu0 0.0
    %234 = vmatpush1.xpose.msra.mxu0 0.0
    %235 = vmatprep.subr.mxu0 0.0
    %236 = vmatpush1.xpose.msra.mxu0 0.0
    %237 = vmatprep.subr.mxu0 0.0
    %238 = vmatpush1.xpose.msra.mxu0 0.0
    %239 = vmatprep.subr.mxu0 0.0
    %240 = vmatpush1.xpose.msra.mxu0 0.0
    %241 = vmatprep.subr.mxu0 0.0
    %242 = vmatpush1.xpose.msra.mxu0 0.0
    %243 = vmatprep.subr.mxu0 0.0
    %244 = vmatpush1.xpose.msra.mxu0 0.0
    %245 = vmatprep.subr.mxu0 0.0
    %246 = vmatpush1.xpose.msra.mxu0 0.0
    %247 = vmatprep.subr.mxu0 0.0
    %248 = vmatpush1.xpose.msra.mxu0 0.0
    %249 = vmatprep.subr.mxu0 0.0
    %250 = vmatpush1.xpose.msra.mxu0 0.0
    %251 = vmatprep.subr.mxu0 0.0
    %252 = vmatpush1.xpose.msra.mxu0 0.0
    %253 = vmatprep.subr.mxu0 0.0
    %254 = vmatpush1.xpose.msra.mxu0 0.0
    %255 = vmatprep.subr.mxu0 0.0
    %256 = vmatpush1.xpose.msra.mxu0 0.0
    %257 = vmatprep.subr.mxu0 0.0
    %258 = vmatpush1.xpose.msra.mxu0 0.0
    %259 = vmatprep.subr.mxu0 0.0
    %260 = vmatpush1.xpose.msra.mxu0 0.0
    %261 = vmatprep.subr.mxu0 0.0
    %262 = vmatpush1.xpose.msra.mxu0 0.0
    %263 = vmatprep.subr.mxu0 0.0
    %264 = vmatpush1.xpose.msra.mxu0 0.0
    %265 = vmatprep.subr.mxu0 0.0
    %266 = vmatpush1.xpose.msra.mxu0 0.0
    %267 = vmatprep.subr.mxu0 0.0
    %268 = vmatpush1.xpose.msra.mxu0 0.0
    %269 = vmatprep.subr.mxu0 0.0
    %270 = vmatpush1.xpose.msra.mxu0 0.0
    %271 = vmatprep.subr.mxu0 0.0
    %272 = vmatpush1.xpose.msra.mxu0 0.0
    %273 = vmatprep.subr.mxu0 0.0
    %274 = vmatpush1.xpose.msra.mxu0 0.0
    %275 = vmatprep.subr.mxu0 0.0
    %276 = vmatpush1.xpose.msra.mxu0 0.0
    %277 = vmatprep.subr.mxu0 0.0
    %278 = vmatpush1.xpose.msra.mxu0 0.0
    %279 = vmatprep.subr.mxu0 0.0
    %280 = vmatpush1.xpose.msra.mxu0 0.0
    %281 = vmatprep.subr.mxu0 0.0
    %282 = vmatpush1.xpose.msra.mxu0 0.0
    %283 = vmatprep.subr.mxu0 0.0
    %284 = vmatpush1.xpose.msra.mxu0 0.0
    %285 = vmatprep.subr.mxu0 0.0
    %286 = vmatpush1.xpose.msra.mxu0 0.0
    %287 = vmatprep.subr.mxu0 0.0
    %288 = vmatpush1.xpose.msra.mxu0 0.0
    %289 = vmatprep.subr.mxu0 0.0
    %290 = vmatpush1.xpose.msra.mxu0 0.0
    %291 = vmatprep.subr.mxu0 0.0
    %292 = vmatpush1.xpose.msra.mxu0 0.0
    %293 = vmatprep.mubr.f32.mxu0 0.0
    %294 = vmatmul.mubr.f32.gmra.mrb[0].mxu0 %v221
    %v295 = vpop.f32.mrb[0].mxu0
    %v296 = vadd.f32 %v67, %v295
    %v297 = vpop.f32.mrb[0].mxu0
    %298 = vmatprep.mubr.f32.mxu0 0.0
    %299 = vmatmul.mubr.f32.gmra.mrb[0].mxu0 %v223
    %v300 = vpop.f32.mrb[0].mxu0
    %v301 = vadd.f32 %v68, %v300
    %v302 = vpop.f32.mrb[0].mxu0
    %303 = vdwg.mxu0
    %v304 = vmul.f32 %v296, 1.442695
    %v305 = vpow.pop %v304
    %v306 = vmul.f32 %v301, 1.442695
    %v307 = vpow.pop %v306
    %vm308 = vcmask 130048
    %v309 = vsel %vm308, %v305, 0.0
    %310 = vadd.xlane.f32.xlu0 %v309
    %v311 = vpop.xlane.xlu0 %310
    %v312 = vsel %vm308, %v307, 0.0
    %313 = vadd.xlane.f32.xlu0 %v312
    %v314 = vpop.xlane.xlu0 %313
    %v315 = vrcp.pop %v311
    %v316 = vrcp.pop %v314
    %v317 = vmul.f32 %v305, %v315
    %v318 = vmul.f32 %v307, %v316
    %319 = vrot.lane.b32.xlu0 %v201, 64
    %v320 = vpop.permute.xlu0 %319
    %321 = vrot.lane.b32.xlu0 %v206, 64
    %v322 = vpop.permute.xlu0 %321
    %v326 = vsel %vm308, %v317, 0
    %v329 = vsel %vm308, %v318, 0
    %331 = vmatprep.subr.mxu0 0.0
    %332 = vmatpush1.msra.mxu0 %v320
    %333 = vmatprep.subr.mxu0 0.0
    %334 = vmatpush1.msra.mxu0 %v322
    %335 = vmatprep.subr.mxu0 0.0
    %336 = vmatpush1.msra.mxu0 0.0
    %337 = vmatprep.subr.mxu0 0.0
    %338 = vmatpush1.msra.mxu0 0.0
    %339 = vmatprep.subr.mxu0 0.0
    %340 = vmatpush1.msra.mxu0 0.0
    %341 = vmatprep.subr.mxu0 0.0
    %342 = vmatpush1.msra.mxu0 0.0
    %343 = vmatprep.subr.mxu0 0.0
    %344 = vmatpush1.msra.mxu0 0.0
    %345 = vmatprep.subr.mxu0 0.0
    %346 = vmatpush1.msra.mxu0 0.0
    %347 = vmatprep.subr.mxu0 0.0
    %348 = vmatpush1.msra.mxu0 0.0
    %349 = vmatprep.subr.mxu0 0.0
    %350 = vmatpush1.msra.mxu0 0.0
    %351 = vmatprep.subr.mxu0 0.0
    %352 = vmatpush1.msra.mxu0 0.0
    %353 = vmatprep.subr.mxu0 0.0
    %354 = vmatpush1.msra.mxu0 0.0
    %355 = vmatprep.subr.mxu0 0.0
    %356 = vmatpush1.msra.mxu0 0.0
    %357 = vmatprep.subr.mxu0 0.0
    %358 = vmatpush1.msra.mxu0 0.0
    %359 = vmatprep.subr.mxu0 0.0
    %360 = vmatpush1.msra.mxu0 0.0
    %361 = vmatprep.subr.mxu0 0.0
    %362 = vmatpush1.msra.mxu0 0.0
    %363 = vmatprep.subr.mxu0 0.0
    %364 = vmatpush1.msra.mxu0 0.0
    %365 = vmatprep.subr.mxu0 0.0
    %366 = vmatpush1.msra.mxu0 0.0
    %367 = vmatprep.subr.mxu0 0.0
    %368 = vmatpush1.msra.mxu0 0.0
    %369 = vmatprep.subr.mxu0 0.0
    %370 = vmatpush1.msra.mxu0 0.0
    %371 = vmatprep.subr.mxu0 0.0
    %372 = vmatpush1.msra.mxu0 0.0
    %373 = vmatprep.subr.mxu0 0.0
    %374 = vmatpush1.msra.mxu0 0.0
    %375 = vmatprep.subr.mxu0 0.0
    %376 = vmatpush1.msra.mxu0 0.0
    %377 = vmatprep.subr.mxu0 0.0
    %378 = vmatpush1.msra.mxu0 0.0
    %379 = vmatprep.subr.mxu0 0.0
    %380 = vmatpush1.msra.mxu0 0.0
    %381 = vmatprep.subr.mxu0 0.0
    %382 = vmatpush1.msra.mxu0 0.0
    %383 = vmatprep.subr.mxu0 0.0
    %384 = vmatpush1.msra.mxu0 0.0
    %385 = vmatprep.subr.mxu0 0.0
    %386 = vmatpush1.msra.mxu0 0.0
    %387 = vmatprep.subr.mxu0 0.0
    %388 = vmatpush1.msra.mxu0 0.0
    %389 = vmatprep.subr.mxu0 0.0
    %390 = vmatpush1.msra.mxu0 0.0
    %391 = vmatprep.subr.mxu0 0.0
    %392 = vmatpush1.msra.mxu0 0.0
    %393 = vmatprep.subr.mxu0 0.0
    %394 = vmatpush1.msra.mxu0 0.0
    %395 = vmatprep.mubr.f32.mxu0 0.0
    %396 = vmatmul.mubr.f32.gmra.mrb[0].mxu0 %v326
    %v397 = vpop.f32.mrb[0].mxu0
    %v398 = vadd.f32 0.0, %v397
    %v399 = vpop.f32.mrb[0].mxu0
    %400 = vmatprep.mubr.f32.mxu0 0.0
    %401 = vmatmul.mubr.f32.gmra.mrb[0].mxu0 %v329
    %v402 = vpop.f32.mrb[0].mxu0
    %v403 = vadd.f32 0.0, %v402
    %v404 = vpop.f32.mrb[0].mxu0
    %405 = vdwg.mxu0
    %406 = vrot.lane.b32.xlu0 %v201, 120
    %v407 = vpop.permute.xlu0 %406
    %408 = vrot.lane.b32.xlu0 %v206, 120
    %v409 = vpop.permute.xlu0 %408
    %410 = vrot.lane.b32.xlu0 %v201, 88
    %v411 = vpop.permute.xlu0 %410
    %412 = vrot.lane.b32.xlu0 %v206, 88
    %v413 = vpop.permute.xlu0 %412
    %v414 = vsel %vm220, %v407, 0
    %v416 = vsel %vm220, %v409, 0
    %v418 = vsel %vm220, %v411, 0
    %v420 = vsel %vm220, %v413, 0
    %422 = vmatprep.subr.mxu0 0.0
    %423 = vmatpush1.xpose.msra.mxu0 %v418
    %424 = vmatprep.subr.mxu0 0.0
    %425 = vmatpush1.xpose.msra.mxu0 %v420
    %426 = vmatprep.subr.mxu0 0.0
    %427 = vmatpush1.xpose.msra.mxu0 0.0
    %428 = vmatprep.subr.mxu0 0.0
    %429 = vmatpush1.xpose.msra.mxu0 0.0
    %430 = vmatprep.subr.mxu0 0.0
    %431 = vmatpush1.xpose.msra.mxu0 0.0
    %432 = vmatprep.subr.mxu0 0.0
    %433 = vmatpush1.xpose.msra.mxu0 0.0
    %434 = vmatprep.subr.mxu0 0.0
    %435 = vmatpush1.xpose.msra.mxu0 0.0
    %436 = vmatprep.subr.mxu0 0.0
    %437 = vmatpush1.xpose.msra.mxu0 0.0
    %438 = vmatprep.subr.mxu0 0.0
    %439 = vmatpush1.xpose.msra.mxu0 0.0
    %440 = vmatprep.subr.mxu0 0.0
    %441 = vmatpush1.xpose.msra.mxu0 0.0
    %442 = vmatprep.subr.mxu0 0.0
    %443 = vmatpush1.xpose.msra.mxu0 0.0
    %444 = vmatprep.subr.mxu0 0.0
    %445 = vmatpush1.xpose.msra.mxu0 0.0
    %446 = vmatprep.subr.mxu0 0.0
    %447 = vmatpush1.xpose.msra.mxu0 0.0
    %448 = vmatprep.subr.mxu0 0.0
    %449 = vmatpush1.xpose.msra.mxu0 0.0
    %450 = vmatprep.subr.mxu0 0.0
    %451 = vmatpush1.xpose.msra.mxu0 0.0
    %452 = vmatprep.subr.mxu0 0.0
    %453 = vmatpush1.xpose.msra.mxu0 0.0
    %454 = vmatprep.subr.mxu0 0.0
    %455 = vmatpush1.xpose.msra.mxu0 0.0
    %456 = vmatprep.subr.mxu0 0.0
    %457 = vmatpush1.xpose.msra.mxu0 0.0
    %458 = vmatprep.subr.mxu0 0.0
    %459 = vmatpush1.xpose.msra.mxu0 0.0
    %460 = vmatprep.subr.mxu0 0.0
    %461 = vmatpush1.xpose.msra.mxu0 0.0
    %462 = vmatprep.subr.mxu0 0.0
    %463 = vmatpush1.xpose.msra.mxu0 0.0
    %464 = vmatprep.subr.mxu0 0.0
    %465 = vmatpush1.xpose.msra.mxu0 0.0
    %466 = vmatprep.subr.mxu0 0.0
    %467 = vmatpush1.xpose.msra.mxu0 0.0
    %468 = vmatprep.subr.mxu0 0.0
    %469 = vmatpush1.xpose.msra.mxu0 0.0
    %470 = vmatprep.subr.mxu0 0.0
    %471 = vmatpush1.xpose.msra.mxu0 0.0
    %472 = vmatprep.subr.mxu0 0.0
    %473 = vmatpush1.xpose.msra.mxu0 0.0
    %474 = vmatprep.subr.mxu0 0.0
    %475 = vmatpush1.xpose.msra.mxu0 0.0
    %476 = vmatprep.subr.mxu0 0.0
    %477 = vmatpush1.xpose.msra.mxu0 0.0
    %478 = vmatprep.subr.mxu0 0.0
    %479 = vmatpush1.xpose.msra.mxu0 0.0
    %480 = vmatprep.subr.mxu0 0.0
    %481 = vmatpush1.xpose.msra.mxu0 0.0
    %482 = vmatprep.subr.mxu0 0.0
    %483 = vmatpush1.xpose.msra.mxu0 0.0
    %484 = vmatprep.subr.mxu0 0.0
    %485 = vmatpush1.xpose.msra.mxu0 0.0
    %486 = vmatprep.mubr.f32.mxu0 0.0
    %487 = vmatmul.mubr.f32.gmra.mrb[0].mxu0 %v414
    %v488 = vpop.f32.mrb[0].mxu0
    %v489 = vadd.f32 %v67, %v488
    %v490 = vpop.f32.mrb[0].mxu0
    %491 = vmatprep.mubr.f32.mxu0 0.0
    %492 = vmatmul.mubr.f32.gmra.mrb[0].mxu0 %v416
    %v493 = vpop.f32.mrb[0].mxu0
    %v494 = vadd.f32 %v68, %v493
    %v495 = vpop.f32.mrb[0].mxu0
    %496 = vdwg.mxu0
    %v497 = vmul.f32 %v489, 1.442695
    %v498 = vpow.pop %v497
    %v499 = vmul.f32 %v494, 1.442695
    %v500 = vpow.pop %v499
    %v501 = vsel %vm308, %v498, 0.0
    %502 = vadd.xlane.f32.xlu0 %v501
    %v503 = vpop.xlane.xlu0 %502
    %v504 = vsel %vm308, %v500, 0.0
    %505 = vadd.xlane.f32.xlu0 %v504
    %v506 = vpop.xlane.xlu0 %505
    %v507 = vrcp.pop %v503
    %v508 = vrcp.pop %v506
    %v509 = vmul.f32 %v498, %v507
    %v510 = vmul.f32 %v500, %v508
    %511 = vrot.lane.b32.xlu0 %v201, 56
    %v512 = vpop.permute.xlu0 %511
    %513 = vrot.lane.b32.xlu0 %v206, 56
    %v514 = vpop.permute.xlu0 %513
    %v518 = vsel %vm308, %v509, 0
    %v521 = vsel %vm308, %v510, 0
    %523 = vmatprep.subr.mxu0 0.0
    %524 = vmatpush1.msra.mxu0 %v512
    %525 = vmatprep.subr.mxu0 0.0
    %526 = vmatpush1.msra.mxu0 %v514
    %527 = vmatprep.subr.mxu0 0.0
    %528 = vmatpush1.msra.mxu0 0.0
    %529 = vmatprep.subr.mxu0 0.0
    %530 = vmatpush1.msra.mxu0 0.0
    %531 = vmatprep.subr.mxu0 0.0
    %532 = vmatpush1.msra.mxu0 0.0
    %533 = vmatprep.subr.mxu0 0.0
    %534 = vmatpush1.msra.mxu0 0.0
    %535 = vmatprep.subr.mxu0 0.0
    %536 = vmatpush1.msra.mxu0 0.0
    %537 = vmatprep.subr.mxu0 0.0
    %538 = vmatpush1.msra.mxu0 0.0
    %539 = vmatprep.subr.mxu0 0.0
    %540 = vmatpush1.msra.mxu0 0.0
    %541 = vmatprep.subr.mxu0 0.0
    %542 = vmatpush1.msra.mxu0 0.0
    %543 = vmatprep.subr.mxu0 0.0
    %544 = vmatpush1.msra.mxu0 0.0
    %545 = vmatprep.subr.mxu0 0.0
    %546 = vmatpush1.msra.mxu0 0.0
    %547 = vmatprep.subr.mxu0 0.0
    %548 = vmatpush1.msra.mxu0 0.0
    %549 = vmatprep.subr.mxu0 0.0
    %550 = vmatpush1.msra.mxu0 0.0
    %551 = vmatprep.subr.mxu0 0.0
    %552 = vmatpush1.msra.mxu0 0.0
    %553 = vmatprep.subr.mxu0 0.0
    %554 = vmatpush1.msra.mxu0 0.0
    %555 = vmatprep.subr.mxu0 0.0
    %556 = vmatpush1.msra.mxu0 0.0
    %557 = vmatprep.subr.mxu0 0.0
    %558 = vmatpush1.msra.mxu0 0.0
    %559 = vmatprep.subr.mxu0 0.0
    %560 = vmatpush1.msra.mxu0 0.0
    %561 = vmatprep.subr.mxu0 0.0
    %562 = vmatpush1.msra.mxu0 0.0
    %563 = vmatprep.subr.mxu0 0.0
    %564 = vmatpush1.msra.mxu0 0.0
    %565 = vmatprep.subr.mxu0 0.0
    %566 = vmatpush1.msra.mxu0 0.0
    %567 = vmatprep.subr.mxu0 0.0
    %568 = vmatpush1.msra.mxu0 0.0
    %569 = vmatprep.subr.mxu0 0.0
    %570 = vmatpush1.msra.mxu0 0.0
    %571 = vmatprep.subr.mxu0 0.0
    %572 = vmatpush1.msra.mxu0 0.0
    %573 = vmatprep.subr.mxu0 0.0
    %574 = vmatpush1.msra.mxu0 0.0
    %575 = vmatprep.subr.mxu0 0.0
    %576 = vmatpush1.msra.mxu0 0.0
    %577 = vmatprep.subr.mxu0 0.0
    %578 = vmatpush1.msra.mxu0 0.0
    %579 = vmatprep.subr.mxu0 0.0
    %580 = vmatpush1.msra.mxu0 0.0
    %581 = vmatprep.subr.mxu0 0.0
    %582 = vmatpush1.msra.mxu0 0.0
    %583 = vmatprep.subr.mxu0 0.0
    %584 = vmatpush1.msra.mxu0 0.0
    %585 = vmatprep.subr.mxu0 0.0
    %586 = vmatpush1.msra.mxu0 0.0
    %587 = vmatprep.mubr.f32.mxu0 0.0
    %588 = vmatmul.mubr.f32.gmra.mrb[0].mxu0 %v518
    %v589 = vpop.f32.mrb[0].mxu0
    %v590 = vadd.f32 0.0, %v589
    %v591 = vpop.f32.mrb[0].mxu0
    %592 = vmatprep.mubr.f32.mxu0 0.0
    %593 = vmatmul.mubr.f32.gmra.mrb[0].mxu0 %v521
    %v594 = vpop.f32.mrb[0].mxu0
    %v595 = vadd.f32 0.0, %v594
    %v596 = vpop.f32.mrb[0].mxu0
    %597 = vdwg.mxu0
    %v599 = vsel %vm220, %v590, 0
    %v602 = vsel %vm220, %v595, 0
    %604 = vmatprep.subr.mxu0 0.0
    %605 = vmatpush1.msra.mxu0 %v211
    %606 = vmatprep.subr.mxu0 0.0
    %607 = vmatpush1.msra.mxu0 0.0
    %608 = vmatprep.subr.mxu0 0.0
    %609 = vmatpush1.msra.mxu0 0.0
    %610 = vmatprep.subr.mxu0 0.0
    %611 = vmatpush1.msra.mxu0 0.0
    %612 = vmatprep.subr.mxu0 0.0
    %613 = vmatpush1.msra.mxu0 0.0
    %614 = vmatprep.subr.mxu0 0.0
    %615 = vmatpush1.msra.mxu0 0.0
    %616 = vmatprep.subr.mxu0 0.0
    %617 = vmatpush1.msra.mxu0 0.0
    %618 = vmatprep.subr.mxu0 0.0
    %619 = vmatpush1.msra.mxu0 0.0
    %620 = vmatprep.subr.mxu0 0.0
    %621 = vmatpush1.msra.mxu0 0.0
    %622 = vmatprep.subr.mxu0 0.0
    %623 = vmatpush1.msra.mxu0 0.0
    %624 = vmatprep.subr.mxu0 0.0
    %625 = vmatpush1.msra.mxu0 0.0
    %626 = vmatprep.subr.mxu0 0.0
    %627 = vmatpush1.msra.mxu0 0.0
    %628 = vmatprep.subr.mxu0 0.0
    %629 = vmatpush1.msra.mxu0 0.0
    %630 = vmatprep.subr.mxu0 0.0
    %631 = vmatpush1.msra.mxu0 0.0
    %632 = vmatprep.subr.mxu0 0.0
    %633 = vmatpush1.msra.mxu0 0.0
    %634 = vmatprep.subr.mxu0 0.0
    %635 = vmatpush1.msra.mxu0 0.0
    %636 = vmatprep.subr.mxu0 0.0
    %637 = vmatpush1.msra.mxu0 0.0
    %638 = vmatprep.subr.mxu0 0.0
    %639 = vmatpush1.msra.mxu0 0.0
    %640 = vmatprep.subr.mxu0 0.0
    %641 = vmatpush1.msra.mxu0 0.0
    %642 = vmatprep.subr.mxu0 0.0
    %643 = vmatpush1.msra.mxu0 0.0
    %644 = vmatprep.subr.mxu0 0.0
    %645 = vmatpush1.msra.mxu0 0.0
    %646 = vmatprep.subr.mxu0 0.0
    %647 = vmatpush1.msra.mxu0 0.0
    %648 = vmatprep.subr.mxu0 0.0
    %649 = vmatpush1.msra.mxu0 0.0
    %650 = vmatprep.subr.mxu0 0.0
    %651 = vmatpush1.msra.mxu0 0.0
    %652 = vmatprep.subr.mxu0 0.0
    %653 = vmatpush1.msra.mxu0 0.0
    %654 = vmatprep.subr.mxu0 0.0
    %655 = vmatpush1.msra.mxu0 0.0
    %656 = vmatprep.subr.mxu0 0.0
    %657 = vmatpush1.msra.mxu0 0.0
    %658 = vmatprep.subr.mxu0 0.0
    %659 = vmatpush1.msra.mxu0 0.0
    %660 = vmatprep.subr.mxu0 0.0
    %661 = vmatpush1.msra.mxu0 0.0
    %662 = vmatprep.subr.mxu0 0.0
    %663 = vmatpush1.msra.mxu0 0.0
    %664 = vmatprep.subr.mxu0 0.0
    %665 = vmatpush1.msra.mxu0 0.0
    %666 = vmatprep.subr.mxu0 0.0
    %667 = vmatpush1.msra.mxu0 0.0
    %668 = vmatprep.mubr.f32.mxu0 0.0
    %669 = vmatmul.mubr.f32.gmra.mrb[0].mxu0 %v599
    %v670 = vpop.f32.mrb[0].mxu0
    %v671 = vadd.f32 0.0, %v670
    %v672 = vpop.f32.mrb[0].mxu0
    %673 = vmatprep.mubr.f32.mxu0 0.0
    %674 = vmatmul.mubr.f32.gmra.mrb[0].mxu0 %v602
    %v675 = vpop.f32.mrb[0].mxu0
    %v676 = vadd.f32 0.0, %v675
    %v677 = vpop.f32.mrb[0].mxu0
    %678 = vdwg.mxu0
    %v680 = vsel %vm220, %v398, 0
    %v683 = vsel %vm220, %v403, 0
    %685 = vmatprep.subr.mxu0 0.0
    %686 = vmatpush1.msra.mxu0 %v210
    %687 = vmatprep.subr.mxu0 0.0
    %688 = vmatpush1.msra.mxu0 0.0
    %689 = vmatprep.subr.mxu0 0.0
    %690 = vmatpush1.msra.mxu0 0.0
    %691 = vmatprep.subr.mxu0 0.0
    %692 = vmatpush1.msra.mxu0 0.0
    %693 = vmatprep.subr.mxu0 0.0
    %694 = vmatpush1.msra.mxu0 0.0
    %695 = vmatprep.subr.mxu0 0.0
    %696 = vmatpush1.msra.mxu0 0.0
    %697 = vmatprep.subr.mxu0 0.0
    %698 = vmatpush1.msra.mxu0 0.0
    %699 = vmatprep.subr.mxu0 0.0
    %700 = vmatpush1.msra.mxu0 0.0
    %701 = vmatprep.subr.mxu0 0.0
    %702 = vmatpush1.msra.mxu0 0.0
    %703 = vmatprep.subr.mxu0 0.0
    %704 = vmatpush1.msra.mxu0 0.0
    %705 = vmatprep.subr.mxu0 0.0
    %706 = vmatpush1.msra.mxu0 0.0
    %707 = vmatprep.subr.mxu0 0.0
    %708 = vmatpush1.msra.mxu0 0.0
    %709 = vmatprep.subr.mxu0 0.0
    %710 = vmatpush1.msra.mxu0 0.0
    %711 = vmatprep.subr.mxu0 0.0
    %712 = vmatpush1.msra.mxu0 0.0
    %713 = vmatprep.subr.mxu0 0.0
    %714 = vmatpush1.msra.mxu0 0.0
    %715 = vmatprep.subr.mxu0 0.0
    %716 = vmatpush1.msra.mxu0 0.0
    %717 = vmatprep.subr.mxu0 0.0
    %718 = vmatpush1.msra.mxu0 0.0
    %719 = vmatprep.subr.mxu0 0.0
    %720 = vmatpush1.msra.mxu0 0.0
    %721 = vmatprep.subr.mxu0 0.0
    %722 = vmatpush1.msra.mxu0 0.0
    %723 = vmatprep.subr.mxu0 0.0
    %724 = vmatpush1.msra.mxu0 0.0
    %725 = vmatprep.subr.mxu0 0.0
    %726 = vmatpush1.msra.mxu0 0.0
    %727 = vmatprep.subr.mxu0 0.0
    %728 = vmatpush1.msra.mxu0 0.0
    %729 = vmatprep.subr.mxu0 0.0
    %730 = vmatpush1.msra.mxu0 0.0
    %731 = vmatprep.subr.mxu0 0.0
    %732 = vmatpush1.msra.mxu0 0.0
    %733 = vmatprep.subr.mxu0 0.0
    %734 = vmatpush1.msra.mxu0 0.0
    %735 = vmatprep.subr.mxu0 0.0
    %736 = vmatpush1.msra.mxu0 0.0
    %737 = vmatprep.subr.mxu0 0.0
    %738 = vmatpush1.msra.mxu0 0.0
    %739 = vmatprep.subr.mxu0 0.0
    %740 = vmatpush1.msra.mxu0 0.0
    %741 = vmatprep.subr.mxu0 0.0
    %742 = vmatpush1.msra.mxu0 0.0
    %743 = vmatprep.subr.mxu0 0.0
    %744 = vmatpush1.msra.mxu0 0.0
    %745 = vmatprep.subr.mxu0 0.0
    %746 = vmatpush1.msra.mxu0 0.0
    %747 = vmatprep.subr.mxu0 0.0
    %748 = vmatpush1.msra.mxu0 0.0
    %749 = vmatprep.mubr.f32.mxu0 0.0
    %750 = vmatmul.mubr.f32.gmra.mrb[0].mxu0 %v680
    %v751 = vpop.f32.mrb[0].mxu0
    %v752 = vadd.f32 %v671, %v751
    %v753 = vpop.f32.mrb[0].mxu0
    %754 = vmatprep.mubr.f32.mxu0 0.0
    %755 = vmatmul.mubr.f32.gmra.mrb[0].mxu0 %v683
    %v756 = vpop.f32.mrb[0].mxu0
    %v757 = vadd.f32 %v676, %v756
    %v758 = vpop.f32.mrb[0].mxu0
    %759 = vdwg.mxu0
    %760 = vrot.lane.b32.xlu0 %v201, 112
    %v761 = vpop.permute.xlu0 %760
    %762 = vrot.lane.b32.xlu0 %v206, 112
    %v763 = vpop.permute.xlu0 %762
    %764 = vrot.lane.b32.xlu0 %v201, 80
    %v765 = vpop.permute.xlu0 %764
    %766 = vrot.lane.b32.xlu0 %v206, 80
    %v767 = vpop.permute.xlu0 %766
    %v768 = vsel %vm220, %v761, 0
    %v770 = vsel %vm220, %v763, 0
    %v772 = vsel %vm220, %v765, 0
    %v774 = vsel %vm220, %v767, 0
    %776 = vmatprep.subr.mxu0 0.0
    %777 = vmatpush1.xpose.msra.mxu0 %v772
    %778 = vmatprep.subr.mxu0 0.0
    %779 = vmatpush1.xpose.msra.mxu0 %v774
    %780 = vmatprep.subr.mxu0 0.0
    %781 = vmatpush1.xpose.msra.mxu0 0.0
    %782 = vmatprep.subr.mxu0 0.0
    %783 = vmatpush1.xpose.msra.mxu0 0.0
    %784 = vmatprep.subr.mxu0 0.0
    %785 = vmatpush1.xpose.msra.mxu0 0.0
    %786 = vmatprep.subr.mxu0 0.0
    %787 = vmatpush1.xpose.msra.mxu0 0.0
    %788 = vmatprep.subr.mxu0 0.0
    %789 = vmatpush1.xpose.msra.mxu0 0.0
    %790 = vmatprep.subr.mxu0 0.0
    %791 = vmatpush1.xpose.msra.mxu0 0.0
    %792 = vmatprep.subr.mxu0 0.0
    %793 = vmatpush1.xpose.msra.mxu0 0.0
    %794 = vmatprep.subr.mxu0 0.0
    %795 = vmatpush1.xpose.msra.mxu0 0.0
    %796 = vmatprep.subr.mxu0 0.0
    %797 = vmatpush1.xpose.msra.mxu0 0.0
    %798 = vmatprep.subr.mxu0 0.0
    %799 = vmatpush1.xpose.msra.mxu0 0.0
    %800 = vmatprep.subr.mxu0 0.0
    %801 = vmatpush1.xpose.msra.mxu0 0.0
    %802 = vmatprep.subr.mxu0 0.0
    %803 = vmatpush1.xpose.msra.mxu0 0.0
    %804 = vmatprep.subr.mxu0 0.0
    %805 = vmatpush1.xpose.msra.mxu0 0.0
    %806 = vmatprep.subr.mxu0 0.0
    %807 = vmatpush1.xpose.msra.mxu0 0.0
    %808 = vmatprep.subr.mxu0 0.0
    %809 = vmatpush1.xpose.msra.mxu0 0.0
    %810 = vmatprep.subr.mxu0 0.0
    %811 = vmatpush1.xpose.msra.mxu0 0.0
    %812 = vmatprep.subr.mxu0 0.0
    %813 = vmatpush1.xpose.msra.mxu0 0.0
    %814 = vmatprep.subr.mxu0 0.0
    %815 = vmatpush1.xpose.msra.mxu0 0.0
    %816 = vmatprep.subr.mxu0 0.0
    %817 = vmatpush1.xpose.msra.mxu0 0.0
    %818 = vmatprep.subr.mxu0 0.0
    %819 = vmatpush1.xpose.msra.mxu0 0.0
    %820 = vmatprep.subr.mxu0 0.0
    %821 = vmatpush1.xpose.msra.mxu0 0.0
    %822 = vmatprep.subr.mxu0 0.0
    %823 = vmatpush1.xpose.msra.mxu0 0.0
    %824 = vmatprep.subr.mxu0 0.0
    %825 = vmatpush1.xpose.msra.mxu0 0.0
    %826 = vmatprep.subr.mxu0 0.0
    %827 = vmatpush1.xpose.msra.mxu0 0.0
    %828 = vmatprep.subr.mxu0 0.0
    %829 = vmatpush1.xpose.msra.mxu0 0.0
    %830 = vmatprep.subr.mxu0 0.0
    %831 = vmatpush1.xpose.msra.mxu0 0.0
    %832 = vmatprep.subr.mxu0 0.0
    %833 = vmatpush1.xpose.msra.mxu0 0.0
    %834 = vmatprep.subr.mxu0 0.0
    %835 = vmatpush1.xpose.msra.mxu0 0.0
    %836 = vmatprep.subr.mxu0 0.0
    %837 = vmatpush1.xpose.msra.mxu0 0.0
    %838 = vmatprep.subr.mxu0 0.0
    %839 = vmatpush1.xpose.msra.mxu0 0.0
    %840 = vmatprep.mubr.f32.mxu0 0.0
    %841 = vmatmul.mubr.f32.gmra.mrb[0].mxu0 %v768
    %v842 = vpop.f32.mrb[0].mxu0
    %v843 = vadd.f32 %v67, %v842
    %v844 = vpop.f32.mrb[0].mxu0
    %845 = vmatprep.mubr.f32.mxu0 0.0
    %846 = vmatmul.mubr.f32.gmra.mrb[0].mxu0 %v770
    %v847 = vpop.f32.mrb[0].mxu0
    %v848 = vadd.f32 %v68, %v847
    %v849 = vpop.f32.mrb[0].mxu0
    %850 = vdwg.mxu0
    %v851 = vmul.f32 %v843, 1.442695
    %v852 = vpow.pop %v851
    %v853 = vmul.f32 %v848, 1.442695
    %v854 = vpow.pop %v853
    %v855 = vsel %vm308, %v852, 0.0
    %856 = vadd.xlane.f32.xlu0 %v855
    %v857 = vpop.xlane.xlu0 %856
    %v858 = vsel %vm308, %v854, 0.0
    %859 = vadd.xlane.f32.xlu0 %v858
    %v860 = vpop.xlane.xlu0 %859
    %v861 = vrcp.pop %v857
    %v862 = vrcp.pop %v860
    %v863 = vmul.f32 %v852, %v861
    %v864 = vmul.f32 %v854, %v862
    %865 = vrot.lane.b32.xlu0 %v201, 48
    %v866 = vpop.permute.xlu0 %865
    %867 = vrot.lane.b32.xlu0 %v206, 48
    %v868 = vpop.permute.xlu0 %867
    %v872 = vsel %vm308, %v863, 0
    %v875 = vsel %vm308, %v864, 0
    %877 = vmatprep.subr.mxu0 0.0
    %878 = vmatpush1.msra.mxu0 %v866
    %879 = vmatprep.subr.mxu0 0.0
    %880 = vmatpush1.msra.mxu0 %v868
    %881 = vmatprep.subr.mxu0 0.0
    %882 = vmatpush1.msra.mxu0 0.0
    %883 = vmatprep.subr.mxu0 0.0
    %884 = vmatpush1.msra.mxu0 0.0
    %885 = vmatprep.subr.mxu0 0.0
    %886 = vmatpush1.msra.mxu0 0.0
    %887 = vmatprep.subr.mxu0 0.0
    %888 = vmatpush1.msra.mxu0 0.0
    %889 = vmatprep.subr.mxu0 0.0
    %890 = vmatpush1.msra.mxu0 0.0
    %891 = vmatprep.subr.mxu0 0.0
    %892 = vmatpush1.msra.mxu0 0.0
    %893 = vmatprep.subr.mxu0 0.0
    %894 = vmatpush1.msra.mxu0 0.0
    %895 = vmatprep.subr.mxu0 0.0
    %896 = vmatpush1.msra.mxu0 0.0
    %897 = vmatprep.subr.mxu0 0.0
    %898 = vmatpush1.msra.mxu0 0.0
    %899 = vmatprep.subr.mxu0 0.0
    %900 = vmatpush1.msra.mxu0 0.0
    %901 = vmatprep.subr.mxu0 0.0
    %902 = vmatpush1.msra.mxu0 0.0
    %903 = vmatprep.subr.mxu0 0.0
    %904 = vmatpush1.msra.mxu0 0.0
    %905 = vmatprep.subr.mxu0 0.0
    %906 = vmatpush1.msra.mxu0 0.0
    %907 = vmatprep.subr.mxu0 0.0
    %908 = vmatpush1.msra.mxu0 0.0
    %909 = vmatprep.subr.mxu0 0.0
    %910 = vmatpush1.msra.mxu0 0.0
    %911 = vmatprep.subr.mxu0 0.0
    %912 = vmatpush1.msra.mxu0 0.0
    %913 = vmatprep.subr.mxu0 0.0
    %914 = vmatpush1.msra.mxu0 0.0
    %915 = vmatprep.subr.mxu0 0.0
    %916 = vmatpush1.msra.mxu0 0.0
    %917 = vmatprep.subr.mxu0 0.0
    %918 = vmatpush1.msra.mxu0 0.0
    %919 = vmatprep.subr.mxu0 0.0
    %920 = vmatpush1.msra.mxu0 0.0
    %921 = vmatprep.subr.mxu0 0.0
    %922 = vmatpush1.msra.mxu0 0.0
    %923 = vmatprep.subr.mxu0 0.0
    %924 = vmatpush1.msra.mxu0 0.0
    %925 = vmatprep.subr.mxu0 0.0
    %926 = vmatpush1.msra.mxu0 0.0
    %927 = vmatprep.subr.mxu0 0.0
    %928 = vmatpush1.msra.mxu0 0.0
    %929 = vmatprep.subr.mxu0 0.0
    %930 = vmatpush1.msra.mxu0 0.0
    %931 = vmatprep.subr.mxu0 0.0
    %932 = vmatpush1.msra.mxu0 0.0
    %933 = vmatprep.subr.mxu0 0.0
    %934 = vmatpush1.msra.mxu0 0.0
    %935 = vmatprep.subr.mxu0 0.0
    %936 = vmatpush1.msra.mxu0 0.0
    %937 = vmatprep.subr.mxu0 0.0
    %938 = vmatpush1.msra.mxu0 0.0
    %939 = vmatprep.subr.mxu0 0.0
    %940 = vmatpush1.msra.mxu0 0.0
    %941 = vmatprep.mubr.f32.mxu0 0.0
    %942 = vmatmul.mubr.f32.gmra.mrb[0].mxu0 %v872
    %v943 = vpop.f32.mrb[0].mxu0
    %v944 = vadd.f32 0.0, %v943
    %v945 = vpop.f32.mrb[0].mxu0
    %946 = vmatprep.mubr.f32.mxu0 0.0
    %947 = vmatmul.mubr.f32.gmra.mrb[0].mxu0 %v875
    %v948 = vpop.f32.mrb[0].mxu0
    %v949 = vadd.f32 0.0, %v948
    %v950 = vpop.f32.mrb[0].mxu0
    %951 = vdwg.mxu0
    %v953 = vsel %vm220, %v944, 0
    %v956 = vsel %vm220, %v949, 0
    %958 = vmatprep.subr.mxu0 0.0
    %959 = vmatpush1.msra.mxu0 %v212
    %960 = vmatprep.subr.mxu0 0.0
    %961 = vmatpush1.msra.mxu0 0.0
    %962 = vmatprep.subr.mxu0 0.0
    %963 = vmatpush1.msra.mxu0 0.0
    %964 = vmatprep.subr.mxu0 0.0
    %965 = vmatpush1.msra.mxu0 0.0
    %966 = vmatprep.subr.mxu0 0.0
    %967 = vmatpush1.msra.mxu0 0.0
    %968 = vmatprep.subr.mxu0 0.0
    %969 = vmatpush1.msra.mxu0 0.0
    %970 = vmatprep.subr.mxu0 0.0
    %971 = vmatpush1.msra.mxu0 0.0
    %972 = vmatprep.subr.mxu0 0.0
    %973 = vmatpush1.msra.mxu0 0.0
    %974 = vmatprep.subr.mxu0 0.0
    %975 = vmatpush1.msra.mxu0 0.0
    %976 = vmatprep.subr.mxu0 0.0
    %977 = vmatpush1.msra.mxu0 0.0
    %978 = vmatprep.subr.mxu0 0.0
    %979 = vmatpush1.msra.mxu0 0.0
    %980 = vmatprep.subr.mxu0 0.0
    %981 = vmatpush1.msra.mxu0 0.0
    %982 = vmatprep.subr.mxu0 0.0
    %983 = vmatpush1.msra.mxu0 0.0
    %984 = vmatprep.subr.mxu0 0.0
    %985 = vmatpush1.msra.mxu0 0.0
    %986 = vmatprep.subr.mxu0 0.0
    %987 = vmatpush1.msra.mxu0 0.0
    %988 = vmatprep.subr.mxu0 0.0
    %989 = vmatpush1.msra.mxu0 0.0
    %990 = vmatprep.subr.mxu0 0.0
    %991 = vmatpush1.msra.mxu0 0.0
    %992 = vmatprep.subr.mxu0 0.0
    %993 = vmatpush1.msra.mxu0 0.0
    %994 = vmatprep.subr.mxu0 0.0
    %995 = vmatpush1.msra.mxu0 0.0
    %996 = vmatprep.subr.mxu0 0.0
    %997 = vmatpush1.msra.mxu0 0.0
    %998 = vmatprep.subr.mxu0 0.0
    %999 = vmatpush1.msra.mxu0 0.0
    %1000 = vmatprep.subr.mxu0 0.0
    %1001 = vmatpush1.msra.mxu0 0.0
    %1002 = vmatprep.subr.mxu0 0.0
    %1003 = vmatpush1.msra.mxu0 0.0
    %1004 = vmatprep.subr.mxu0 0.0
    %1005 = vmatpush1.msra.mxu0 0.0
    %1006 = vmatprep.subr.mxu0 0.0
    %1007 = vmatpush1.msra.mxu0 0.0
    %1008 = vmatprep.subr.mxu0 0.0
    %1009 = vmatpush1.msra.mxu0 0.0
    %1010 = vmatprep.subr.mxu0 0.0
    %1011 = vmatpush1.msra.mxu0 0.0
    %1012 = vmatprep.subr.mxu0 0.0
    %1013 = vmatpush1.msra.mxu0 0.0
    %1014 = vmatprep.subr.mxu0 0.0
    %1015 = vmatpush1.msra.mxu0 0.0
    %1016 = vmatprep.subr.mxu0 0.0
    %1017 = vmatpush1.msra.mxu0 0.0
    %1018 = vmatprep.subr.mxu0 0.0
    %1019 = vmatpush1.msra.mxu0 0.0
    %1020 = vmatprep.subr.mxu0 0.0
    %1021 = vmatpush1.msra.mxu0 0.0
    %1022 = vmatprep.mubr.f32.mxu0 0.0
    %1023 = vmatmul.mubr.f32.gmra.mrb[0].mxu0 %v953
    %v1024 = vpop.f32.mrb[0].mxu0
    %v1025 = vadd.f32 0.0, %v1024
    %v1026 = vpop.f32.mrb[0].mxu0
    %1027 = vmatprep.mubr.f32.mxu0 0.0
    %1028 = vmatmul.mubr.f32.gmra.mrb[0].mxu0 %v956
    %v1029 = vpop.f32.mrb[0].mxu0
    %v1030 = vadd.f32 0.0, %v1029
    %v1031 = vpop.f32.mrb[0].mxu0
    %1032 = vdwg.mxu0
    %v1033 = vadd.f32 %v752, %v1025
    %v1034 = vadd.f32 %v757, %v1030
    %1035 = vrot.lane.b32.xlu0 %v201, 104
    %v1036 = vpop.permute.xlu0 %1035
    %1037 = vrot.lane.b32.xlu0 %v206, 104
    %v1038 = vpop.permute.xlu0 %1037
    %1039 = vrot.lane.b32.xlu0 %v201, 72
    %v1040 = vpop.permute.xlu0 %1039
    %1041 = vrot.lane.b32.xlu0 %v206, 72
    %v1042 = vpop.permute.xlu0 %1041
    %v1043 = vsel %vm220, %v1036, 0
    %v1045 = vsel %vm220, %v1038, 0
    %v1047 = vsel %vm220, %v1040, 0
    %v1049 = vsel %vm220, %v1042, 0
    %1051 = vmatprep.subr.mxu0 0.0
    %1052 = vmatpush1.xpose.msra.mxu0 %v1047
    %1053 = vmatprep.subr.mxu0 0.0
    %1054 = vmatpush1.xpose.msra.mxu0 %v1049
    %1055 = vmatprep.subr.mxu0 0.0
    %1056 = vmatpush1.xpose.msra.mxu0 0.0
    %1057 = vmatprep.subr.mxu0 0.0
    %1058 = vmatpush1.xpose.msra.mxu0 0.0
    %1059 = vmatprep.subr.mxu0 0.0
    %1060 = vmatpush1.xpose.msra.mxu0 0.0
    %1061 = vmatprep.subr.mxu0 0.0
    %1062 = vmatpush1.xpose.msra.mxu0 0.0
    %1063 = vmatprep.subr.mxu0 0.0
    %1064 = vmatpush1.xpose.msra.mxu0 0.0
    %1065 = vmatprep.subr.mxu0 0.0
    %1066 = vmatpush1.xpose.msra.mxu0 0.0
    %1067 = vmatprep.subr.mxu0 0.0
    %1068 = vmatpush1.xpose.msra.mxu0 0.0
    %1069 = vmatprep.subr.mxu0 0.0
    %1070 = vmatpush1.xpose.msra.mxu0 0.0
    %1071 = vmatprep.subr.mxu0 0.0
    %1072 = vmatpush1.xpose.msra.mxu0 0.0
    %1073 = vmatprep.subr.mxu0 0.0
    %1074 = vmatpush1.xpose.msra.mxu0 0.0
    %1075 = vmatprep.subr.mxu0 0.0
    %1076 = vmatpush1.xpose.msra.mxu0 0.0
    %1077 = vmatprep.subr.mxu0 0.0
    %1078 = vmatpush1.xpose.msra.mxu0 0.0
    %1079 = vmatprep.subr.mxu0 0.0
    %1080 = vmatpush1.xpose.msra.mxu0 0.0
    %1081 = vmatprep.subr.mxu0 0.0
    %1082 = vmatpush1.xpose.msra.mxu0 0.0
    %1083 = vmatprep.subr.mxu0 0.0
    %1084 = vmatpush1.xpose.msra.mxu0 0.0
    %1085 = vmatprep.subr.mxu0 0.0
    %1086 = vmatpush1.xpose.msra.mxu0 0.0
    %1087 = vmatprep.subr.mxu0 0.0
    %1088 = vmatpush1.xpose.msra.mxu0 0.0
    %1089 = vmatprep.subr.mxu0 0.0
    %1090 = vmatpush1.xpose.msra.mxu0 0.0
    %1091 = vmatprep.subr.mxu0 0.0
    %1092 = vmatpush1.xpose.msra.mxu0 0.0
    %1093 = vmatprep.subr.mxu0 0.0
    %1094 = vmatpush1.xpose.msra.mxu0 0.0
    %1095 = vmatprep.subr.mxu0 0.0
    %1096 = vmatpush1.xpose.msra.mxu0 0.0
    %1097 = vmatprep.subr.mxu0 0.0
    %1098 = vmatpush1.xpose.msra.mxu0 0.0
    %1099 = vmatprep.subr.mxu0 0.0
    %1100 = vmatpush1.xpose.msra.mxu0 0.0
    %1101 = vmatprep.subr.mxu0 0.0
    %1102 = vmatpush1.xpose.msra.mxu0 0.0
    %1103 = vmatprep.subr.mxu0 0.0
    %1104 = vmatpush1.xpose.msra.mxu0 0.0
    %1105 = vmatprep.subr.mxu0 0.0
    %1106 = vmatpush1.xpose.msra.mxu0 0.0
    %1107 = vmatprep.subr.mxu0 0.0
    %1108 = vmatpush1.xpose.msra.mxu0 0.0
    %1109 = vmatprep.subr.mxu0 0.0
    %1110 = vmatpush1.xpose.msra.mxu0 0.0
    %1111 = vmatprep.subr.mxu0 0.0
    %1112 = vmatpush1.xpose.msra.mxu0 0.0
    %1113 = vmatprep.subr.mxu0 0.0
    %1114 = vmatpush1.xpose.msra.mxu0 0.0
    %1115 = vmatprep.mubr.f32.mxu0 0.0
    %1116 = vmatmul.mubr.f32.gmra.mrb[0].mxu0 %v1043
    %v1117 = vpop.f32.mrb[0].mxu0
    %v1118 = vadd.f32 %v67, %v1117
    %v1119 = vpop.f32.mrb[0].mxu0
    %1120 = vmatprep.mubr.f32.mxu0 0.0
    %1121 = vmatmul.mubr.f32.gmra.mrb[0].mxu0 %v1045
    %v1122 = vpop.f32.mrb[0].mxu0
    %v1123 = vadd.f32 %v68, %v1122
    %v1124 = vpop.f32.mrb[0].mxu0
    %1125 = vdwg.mxu0
    %v1126 = vmul.f32 %v1118, 1.442695
    %v1127 = vpow.pop %v1126
    %v1128 = vmul.f32 %v1123, 1.442695
    %v1129 = vpow.pop %v1128
    %v1130 = vsel %vm308, %v1127, 0.0
    %1131 = vadd.xlane.f32.xlu0 %v1130
    %v1132 = vpop.xlane.xlu0 %1131
    %v1133 = vsel %vm308, %v1129, 0.0
    %1134 = vadd.xlane.f32.xlu0 %v1133
    %v1135 = vpop.xlane.xlu0 %1134
    %v1136 = vrcp.pop %v1132
    %v1137 = vrcp.pop %v1135
    %v1138 = vmul.f32 %v1127, %v1136
    %v1139 = vmul.f32 %v1129, %v1137
    %1140 = vrot.lane.b32.xlu0 %v201, 40
    %v1141 = vpop.permute.xlu0 %1140
    %1142 = vrot.lane.b32.xlu0 %v206, 40
    %v1143 = vpop.permute.xlu0 %1142
    %v1147 = vsel %vm308, %v1138, 0
    %v1150 = vsel %vm308, %v1139, 0
    %1152 = vmatprep.subr.mxu0 0.0
    %1153 = vmatpush1.msra.mxu0 %v1141
    %1154 = vmatprep.subr.mxu0 0.0
    %1155 = vmatpush1.msra.mxu0 %v1143
    %1156 = vmatprep.subr.mxu0 0.0
    %1157 = vmatpush1.msra.mxu0 0.0
    %1158 = vmatprep.subr.mxu0 0.0
    %1159 = vmatpush1.msra.mxu0 0.0
    %1160 = vmatprep.subr.mxu0 0.0
    %1161 = vmatpush1.msra.mxu0 0.0
    %1162 = vmatprep.subr.mxu0 0.0
    %1163 = vmatpush1.msra.mxu0 0.0
    %1164 = vmatprep.subr.mxu0 0.0
    %1165 = vmatpush1.msra.mxu0 0.0
    %1166 = vmatprep.subr.mxu0 0.0
    %1167 = vmatpush1.msra.mxu0 0.0
    %1168 = vmatprep.subr.mxu0 0.0
    %1169 = vmatpush1.msra.mxu0 0.0
    %1170 = vmatprep.subr.mxu0 0.0
    %1171 = vmatpush1.msra.mxu0 0.0
    %1172 = vmatprep.subr.mxu0 0.0
    %1173 = vmatpush1.msra.mxu0 0.0
    %1174 = vmatprep.subr.mxu0 0.0
    %1175 = vmatpush1.msra.mxu0 0.0
    %1176 = vmatprep.subr.mxu0 0.0
    %1177 = vmatpush1.msra.mxu0 0.0
    %1178 = vmatprep.subr.mxu0 0.0
    %1179 = vmatpush1.msra.mxu0 0.0
    %1180 = vmatprep.subr.mxu0 0.0
    %1181 = vmatpush1.msra.mxu0 0.0
    %1182 = vmatprep.subr.mxu0 0.0
    %1183 = vmatpush1.msra.mxu0 0.0
    %1184 = vmatprep.subr.mxu0 0.0
    %1185 = vmatpush1.msra.mxu0 0.0
    %1186 = vmatprep.subr.mxu0 0.0
    %1187 = vmatpush1.msra.mxu0 0.0
    %1188 = vmatprep.subr.mxu0 0.0
    %1189 = vmatpush1.msra.mxu0 0.0
    %1190 = vmatprep.subr.mxu0 0.0
    %1191 = vmatpush1.msra.mxu0 0.0
    %1192 = vmatprep.subr.mxu0 0.0
    %1193 = vmatpush1.msra.mxu0 0.0
    %1194 = vmatprep.subr.mxu0 0.0
    %1195 = vmatpush1.msra.mxu0 0.0
    %1196 = vmatprep.subr.mxu0 0.0
    %1197 = vmatpush1.msra.mxu0 0.0
    %1198 = vmatprep.subr.mxu0 0.0
    %1199 = vmatpush1.msra.mxu0 0.0
    %1200 = vmatprep.subr.mxu0 0.0
    %1201 = vmatpush1.msra.mxu0 0.0
    %1202 = vmatprep.subr.mxu0 0.0
    %1203 = vmatpush1.msra.mxu0 0.0
    %1204 = vmatprep.subr.mxu0 0.0
    %1205 = vmatpush1.msra.mxu0 0.0
    %1206 = vmatprep.subr.mxu0 0.0
    %1207 = vmatpush1.msra.mxu0 0.0
    %1208 = vmatprep.subr.mxu0 0.0
    %1209 = vmatpush1.msra.mxu0 0.0
    %1210 = vmatprep.subr.mxu0 0.0
    %1211 = vmatpush1.msra.mxu0 0.0
    %1212 = vmatprep.subr.mxu0 0.0
    %1213 = vmatpush1.msra.mxu0 0.0
    %1214 = vmatprep.subr.mxu0 0.0
    %1215 = vmatpush1.msra.mxu0 0.0
    %1216 = vmatprep.mubr.f32.mxu0 0.0
    %1217 = vmatmul.mubr.f32.gmra.mrb[0].mxu0 %v1147
    %v1218 = vpop.f32.mrb[0].mxu0
    %v1219 = vadd.f32 0.0, %v1218
    %v1220 = vpop.f32.mrb[0].mxu0
    %1221 = vmatprep.mubr.f32.mxu0 0.0
    %1222 = vmatmul.mubr.f32.gmra.mrb[0].mxu0 %v1150
    %v1223 = vpop.f32.mrb[0].mxu0
    %v1224 = vadd.f32 0.0, %v1223
    %v1225 = vpop.f32.mrb[0].mxu0
    %1226 = vdwg.mxu0
    %v1228 = vsel %vm220, %v1219, 0
    %v1231 = vsel %vm220, %v1224, 0
    %1233 = vmatprep.subr.mxu0 0.0
    %1234 = vmatpush1.msra.mxu0 %v213
    %1235 = vmatprep.subr.mxu0 0.0
    %1236 = vmatpush1.msra.mxu0 0.0
    %1237 = vmatprep.subr.mxu0 0.0
    %1238 = vmatpush1.msra.mxu0 0.0
    %1239 = vmatprep.subr.mxu0 0.0
    %1240 = vmatpush1.msra.mxu0 0.0
    %1241 = vmatprep.subr.mxu0 0.0
    %1242 = vmatpush1.msra.mxu0 0.0
    %1243 = vmatprep.subr.mxu0 0.0
    %1244 = vmatpush1.msra.mxu0 0.0
    %1245 = vmatprep.subr.mxu0 0.0
    %1246 = vmatpush1.msra.mxu0 0.0
    %1247 = vmatprep.subr.mxu0 0.0
    %1248 = vmatpush1.msra.mxu0 0.0
    %1249 = vmatprep.subr.mxu0 0.0
    %1250 = vmatpush1.msra.mxu0 0.0
    %1251 = vmatprep.subr.mxu0 0.0
    %1252 = vmatpush1.msra.mxu0 0.0
    %1253 = vmatprep.subr.mxu0 0.0
    %1254 = vmatpush1.msra.mxu0 0.0
    %1255 = vmatprep.subr.mxu0 0.0
    %1256 = vmatpush1.msra.mxu0 0.0
    %1257 = vmatprep.subr.mxu0 0.0
    %1258 = vmatpush1.msra.mxu0 0.0
    %1259 = vmatprep.subr.mxu0 0.0
    %1260 = vmatpush1.msra.mxu0 0.0
    %1261 = vmatprep.subr.mxu0 0.0
    %1262 = vmatpush1.msra.mxu0 0.0
    %1263 = vmatprep.subr.mxu0 0.0
    %1264 = vmatpush1.msra.mxu0 0.0
    %1265 = vmatprep.subr.mxu0 0.0
    %1266 = vmatpush1.msra.mxu0 0.0
    %1267 = vmatprep.subr.mxu0 0.0
    %1268 = vmatpush1.msra.mxu0 0.0
    %1269 = vmatprep.subr.mxu0 0.0
    %1270 = vmatpush1.msra.mxu0 0.0
    %1271 = vmatprep.subr.mxu0 0.0
    %1272 = vmatpush1.msra.mxu0 0.0
    %1273 = vmatprep.subr.mxu0 0.0
    %1274 = vmatpush1.msra.mxu0 0.0
    %1275 = vmatprep.subr.mxu0 0.0
    %1276 = vmatpush1.msra.mxu0 0.0
    %1277 = vmatprep.subr.mxu0 0.0
    %1278 = vmatpush1.msra.mxu0 0.0
    %1279 = vmatprep.subr.mxu0 0.0
    %1280 = vmatpush1.msra.mxu0 0.0
    %1281 = vmatprep.subr.mxu0 0.0
    %1282 = vmatpush1.msra.mxu0 0.0
    %1283 = vmatprep.subr.mxu0 0.0
    %1284 = vmatpush1.msra.mxu0 0.0
    %1285 = vmatprep.subr.mxu0 0.0
    %1286 = vmatpush1.msra.mxu0 0.0
    %1287 = vmatprep.subr.mxu0 0.0
    %1288 = vmatpush1.msra.mxu0 0.0
    %1289 = vmatprep.subr.mxu0 0.0
    %1290 = vmatpush1.msra.mxu0 0.0
    %1291 = vmatprep.subr.mxu0 0.0
    %1292 = vmatpush1.msra.mxu0 0.0
    %1293 = vmatprep.subr.mxu0 0.0
    %1294 = vmatpush1.msra.mxu0 0.0
    %1295 = vmatprep.subr.mxu0 0.0
    %1296 = vmatpush1.msra.mxu0 0.0
    %1297 = vmatprep.mubr.f32.mxu0 0.0
    %1298 = vmatmul.mubr.f32.gmra.mrb[0].mxu0 %v1228
    %v1299 = vpop.f32.mrb[0].mxu0
    %v1300 = vadd.f32 0.0, %v1299
    %v1301 = vpop.f32.mrb[0].mxu0
    %1302 = vmatprep.mubr.f32.mxu0 0.0
    %1303 = vmatmul.mubr.f32.gmra.mrb[0].mxu0 %v1231
    %v1304 = vpop.f32.mrb[0].mxu0
    %v1305 = vadd.f32 0.0, %v1304
    %v1306 = vpop.f32.mrb[0].mxu0
    %1307 = vdwg.mxu0
    %v1308 = vadd.f32 %v1033, %v1300
    %v1309 = vadd.f32 %v1034, %v1305
    %v1310 = vadd.f32 %v63, %v1308
    %v1311 = vadd.f32 %v64, %v1309
    %v1312 = vsel %vm75, %v1310, 0.0
    %1313 = vadd.xlane.f32.xlu0 %v1312
    %v1314 = vpop.xlane.xlu0 %1313
    %v1315 = vsel %vm75, %v1311, 0.0
    %1316 = vadd.xlane.f32.xlu0 %v1315
    %v1317 = vpop.xlane.xlu0 %1316
    %v1318 = vmul.f32 %v1314, %v82
    %v1319 = vmul.f32 %v1317, %v82
    %v1320 = vmul.f32 %v1310, %v1310
    %v1321 = vmul.f32 %v1311, %v1311
    %v1322 = vsel %vm75, %v1320, 0.0
    %1323 = vadd.xlane.f32.xlu0 %v1322
    %v1324 = vpop.xlane.xlu0 %1323
    %v1325 = vsel %vm75, %v1321, 0.0
    %1326 = vadd.xlane.f32.xlu0 %v1325
    %v1327 = vpop.xlane.xlu0 %1326
    %v1328 = vmul.f32 %v1324, %v82
    %v1329 = vmul.f32 %v1327, %v82
    %v1330 = vmul.f32 %v1318, %v1318
    %v1331 = vmul.f32 %v1319, %v1319
    %v1332 = vsub.f32 %v1328, %v1330
    %v1333 = vsub.f32 %v1329, %v1331
    %v1334 = vsub.f32 %v1310, %v1318
    %v1335 = vsub.f32 %v1311, %v1319
    %v1336 = vadd.f32 %v1332, 1e-06
    %v1337 = vadd.f32 %v1333, 1e-06
    %v1338 = vrsqrt.pop %v1336
    %v1339 = vrsqrt.pop %v1337
    %v1340 = vmul.f32 %v1334, %v1338
    %v1341 = vmul.f32 %v1335, %v1339
    %v1342 = vmul.f32 %v1340, %v111
    %v1343 = vmul.f32 %v1341, %v111
    %v1344 = vadd.f32 %v1342, %v119
    %v1345 = vadd.f32 %v1343, %v119
    %s1346 = scalar_lea.vmem %s8, 32
    %v1347 = vld [vmem:[%s1346] sm:$0xff]
    %v1348 = vld [vmem:[%s1346 + $0x8] sm:$0xff]
    %v1349 = vld [vmem:[%s1346 + $0x10] sm:$0xff]
    %v1350 = vld [vmem:[%s1346 + $0x18] sm:$0xff]
    %v1352 = vsel %vm75, %v1344, 0
    %v1355 = vsel %vm75, %v1345, 0
    %1357 = vmatprep.subr.mxu0 0.0
    %1358 = vmatpush1.msra.mxu0 %v1347
    %1359 = vmatprep.subr.mxu0 0.0
    %1360 = vmatpush1.msra.mxu0 %v1348
    %1361 = vmatprep.subr.mxu0 0.0
    %1362 = vmatpush1.msra.mxu0 %v1349
    %1363 = vmatprep.subr.mxu0 0.0
    %1364 = vmatpush1.msra.mxu0 %v1350
    %1365 = vmatprep.subr.mxu0 0.0
    %1366 = vmatpush1.msra.mxu0 0.0
    %1367 = vmatprep.subr.mxu0 0.0
    %1368 = vmatpush1.msra.mxu0 0.0
    %1369 = vmatprep.subr.mxu0 0.0
    %1370 = vmatpush1.msra.mxu0 0.0
    %1371 = vmatprep.subr.mxu0 0.0
    %1372 = vmatpush1.msra.mxu0 0.0
    %1373 = vmatprep.subr.mxu0 0.0
    %1374 = vmatpush1.msra.mxu0 0.0
    %1375 = vmatprep.subr.mxu0 0.0
    %1376 = vmatpush1.msra.mxu0 0.0
    %1377 = vmatprep.subr.mxu0 0.0
    %1378 = vmatpush1.msra.mxu0 0.0
    %1379 = vmatprep.subr.mxu0 0.0
    %1380 = vmatpush1.msra.mxu0 0.0
    %1381 = vmatprep.subr.mxu0 0.0
    %1382 = vmatpush1.msra.mxu0 0.0
    %1383 = vmatprep.subr.mxu0 0.0
    %1384 = vmatpush1.msra.mxu0 0.0
    %1385 = vmatprep.subr.mxu0 0.0
    %1386 = vmatpush1.msra.mxu0 0.0
    %1387 = vmatprep.subr.mxu0 0.0
    %1388 = vmatpush1.msra.mxu0 0.0
    %1389 = vmatprep.subr.mxu0 0.0
    %1390 = vmatpush1.msra.mxu0 0.0
    %1391 = vmatprep.subr.mxu0 0.0
    %1392 = vmatpush1.msra.mxu0 0.0
    %1393 = vmatprep.subr.mxu0 0.0
    %1394 = vmatpush1.msra.mxu0 0.0
    %1395 = vmatprep.subr.mxu0 0.0
    %1396 = vmatpush1.msra.mxu0 0.0
    %1397 = vmatprep.subr.mxu0 0.0
    %1398 = vmatpush1.msra.mxu0 0.0
    %1399 = vmatprep.subr.mxu0 0.0
    %1400 = vmatpush1.msra.mxu0 0.0
    %1401 = vmatprep.subr.mxu0 0.0
    %1402 = vmatpush1.msra.mxu0 0.0
    %1403 = vmatprep.subr.mxu0 0.0
    %1404 = vmatpush1.msra.mxu0 0.0
    %1405 = vmatprep.subr.mxu0 0.0
    %1406 = vmatpush1.msra.mxu0 0.0
    %1407 = vmatprep.subr.mxu0 0.0
    %1408 = vmatpush1.msra.mxu0 0.0
    %1409 = vmatprep.subr.mxu0 0.0
    %1410 = vmatpush1.msra.mxu0 0.0
    %1411 = vmatprep.subr.mxu0 0.0
    %1412 = vmatpush1.msra.mxu0 0.0
    %1413 = vmatprep.subr.mxu0 0.0
    %1414 = vmatpush1.msra.mxu0 0.0
    %1415 = vmatprep.subr.mxu0 0.0
    %1416 = vmatpush1.msra.mxu0 0.0
    %1417 = vmatprep.subr.mxu0 0.0
    %1418 = vmatpush1.msra.mxu0 0.0
    %1419 = vmatprep.subr.mxu0 0.0
    %1420 = vmatpush1.msra.mxu0 0.0
    %1421 = vmatprep.mubr.f32.mxu0 0.0
    %1422 = vmatmul.mubr.f32.gmra.mrb[0].mxu0 %v1352
    %v1423 = vpop.f32.mrb[0].mxu0
    %v1424 = vadd.f32 0.0, %v1423
    %v1425 = vpop.f32.mrb[0].mxu0
    %1426 = vmatprep.mubr.f32.mxu0 0.0
    %1427 = vmatmul.mubr.f32.gmra.mrb[0].mxu0 %v1355
    %v1428 = vpop.f32.mrb[0].mxu0
    %v1429 = vadd.f32 0.0, %v1428
    %v1430 = vpop.f32.mrb[0].mxu0
    %1431 = vdwg.mxu0
    %s1432 = scalar_lea.vmem %s9, 32
    %v1433 = vld [vmem:[%s1432] sm:$0xff]
    %v1434 = vld [vmem:[%s1432 + $0x8] sm:$0xff]
    %v1435 = vld [vmem:[%s1432 + $0x10] sm:$0xff]
    %v1436 = vld [vmem:[%s1432 + $0x18] sm:$0xff]
    %v1438 = vsel %vm75, %v65, 0
    %v1441 = vsel %vm75, %v66, 0
    %1443 = vmatprep.subr.mxu0 0.0
    %1444 = vmatpush1.msra.mxu0 %v1433
    %1445 = vmatprep.subr.mxu0 0.0
    %1446 = vmatpush1.msra.mxu0 %v1434
    %1447 = vmatprep.subr.mxu0 0.0
    %1448 = vmatpush1.msra.mxu0 %v1435
    %1449 = vmatprep.subr.mxu0 0.0
    %1450 = vmatpush1.msra.mxu0 %v1436
    %1451 = vmatprep.subr.mxu0 0.0
    %1452 = vmatpush1.msra.mxu0 0.0
    %1453 = vmatprep.subr.mxu0 0.0
    %1454 = vmatpush1.msra.mxu0 0.0
    %1455 = vmatprep.subr.mxu0 0.0
    %1456 = vmatpush1.msra.mxu0 0.0
    %1457 = vmatprep.subr.mxu0 0.0
    %1458 = vmatpush1.msra.mxu0 0.0
    %1459 = vmatprep.subr.mxu0 0.0
    %1460 = vmatpush1.msra.mxu0 0.0
    %1461 = vmatprep.subr.mxu0 0.0
    %1462 = vmatpush1.msra.mxu0 0.0
    %1463 = vmatprep.subr.mxu0 0.0
    %1464 = vmatpush1.msra.mxu0 0.0
    %1465 = vmatprep.subr.mxu0 0.0
    %1466 = vmatpush1.msra.mxu0 0.0
    %1467 = vmatprep.subr.mxu0 0.0
    %1468 = vmatpush1.msra.mxu0 0.0
    %1469 = vmatprep.subr.mxu0 0.0
    %1470 = vmatpush1.msra.mxu0 0.0
    %1471 = vmatprep.subr.mxu0 0.0
    %1472 = vmatpush1.msra.mxu0 0.0
    %1473 = vmatprep.subr.mxu0 0.0
    %1474 = vmatpush1.msra.mxu0 0.0
    %1475 = vmatprep.subr.mxu0 0.0
    %1476 = vmatpush1.msra.mxu0 0.0
    %1477 = vmatprep.subr.mxu0 0.0
    %1478 = vmatpush1.msra.mxu0 0.0
    %1479 = vmatprep.subr.mxu0 0.0
    %1480 = vmatpush1.msra.mxu0 0.0
    %1481 = vmatprep.subr.mxu0 0.0
    %1482 = vmatpush1.msra.mxu0 0.0
    %1483 = vmatprep.subr.mxu0 0.0
    %1484 = vmatpush1.msra.mxu0 0.0
    %1485 = vmatprep.subr.mxu0 0.0
    %1486 = vmatpush1.msra.mxu0 0.0
    %1487 = vmatprep.subr.mxu0 0.0
    %1488 = vmatpush1.msra.mxu0 0.0
    %1489 = vmatprep.subr.mxu0 0.0
    %1490 = vmatpush1.msra.mxu0 0.0
    %1491 = vmatprep.subr.mxu0 0.0
    %1492 = vmatpush1.msra.mxu0 0.0
    %1493 = vmatprep.subr.mxu0 0.0
    %1494 = vmatpush1.msra.mxu0 0.0
    %1495 = vmatprep.subr.mxu0 0.0
    %1496 = vmatpush1.msra.mxu0 0.0
    %1497 = vmatprep.subr.mxu0 0.0
    %1498 = vmatpush1.msra.mxu0 0.0
    %1499 = vmatprep.subr.mxu0 0.0
    %1500 = vmatpush1.msra.mxu0 0.0
    %1501 = vmatprep.subr.mxu0 0.0
    %1502 = vmatpush1.msra.mxu0 0.0
    %1503 = vmatprep.subr.mxu0 0.0
    %1504 = vmatpush1.msra.mxu0 0.0
    %1505 = vmatprep.subr.mxu0 0.0
    %1506 = vmatpush1.msra.mxu0 0.0
    %1507 = vmatprep.mubr.f32.mxu0 0.0
    %1508 = vmatmul.mubr.f32.gmra.mrb[0].mxu0 %v1438
    %v1509 = vpop.f32.mrb[0].mxu0
    %v1510 = vadd.f32 0.0, %v1509
    %v1511 = vpop.f32.mrb[0].mxu0
    %1512 = vmatprep.mubr.f32.mxu0 0.0
    %1513 = vmatmul.mubr.f32.gmra.mrb[0].mxu0 %v1441
    %v1514 = vpop.f32.mrb[0].mxu0
    %v1515 = vadd.f32 0.0, %v1514
    %v1516 = vpop.f32.mrb[0].mxu0
    %1517 = vdwg.mxu0
    %s1518 = scalar_lea.vmem %s10, 32
    %v1519 = vld [vmem:[%s1518] sm:$0xff]
    %v1520 = vld [vmem:[%s1518 + $0x8] sm:$0xff]
    %v1521 = vld [vmem:[%s1518 + $0x10] sm:$0xff]
    %v1522 = vld [vmem:[%s1518 + $0x18] sm:$0xff]
    %v1524 = vsel %vm220, %v1424, 0
    %v1527 = vsel %vm220, %v1429, 0
    %v1530 = vsel %vm220, %v1510, 0
    %v1533 = vsel %vm220, %v1515, 0
    %1535 = vmatprep.subr.mxu0 0.0
    %1536 = vmatpush1.xpose.msra.mxu0 %v1530
    %1537 = vmatprep.subr.mxu0 0.0
    %1538 = vmatpush1.xpose.msra.mxu0 %v1533
    %1539 = vmatprep.subr.mxu0 0.0
    %1540 = vmatpush1.xpose.msra.mxu0 0.0
    %1541 = vmatprep.subr.mxu0 0.0
    %1542 = vmatpush1.xpose.msra.mxu0 0.0
    %1543 = vmatprep.subr.mxu0 0.0
    %1544 = vmatpush1.xpose.msra.mxu0 0.0
    %1545 = vmatprep.subr.mxu0 0.0
    %1546 = vmatpush1.xpose.msra.mxu0 0.0
    %1547 = vmatprep.subr.mxu0 0.0
    %1548 = vmatpush1.xpose.msra.mxu0 0.0
    %1549 = vmatprep.subr.mxu0 0.0
    %1550 = vmatpush1.xpose.msra.mxu0 0.0
    %1551 = vmatprep.subr.mxu0 0.0
    %1552 = vmatpush1.xpose.msra.mxu0 0.0
    %1553 = vmatprep.subr.mxu0 0.0
    %1554 = vmatpush1.xpose.msra.mxu0 0.0
    %1555 = vmatprep.subr.mxu0 0.0
    %1556 = vmatpush1.xpose.msra.mxu0 0.0
    %1557 = vmatprep.subr.mxu0 0.0
    %1558 = vmatpush1.xpose.msra.mxu0 0.0
    %1559 = vmatprep.subr.mxu0 0.0
    %1560 = vmatpush1.xpose.msra.mxu0 0.0
    %1561 = vmatprep.subr.mxu0 0.0
    %1562 = vmatpush1.xpose.msra.mxu0 0.0
    %1563 = vmatprep.subr.mxu0 0.0
    %1564 = vmatpush1.xpose.msra.mxu0 0.0
    %1565 = vmatprep.subr.mxu0 0.0
    %1566 = vmatpush1.xpose.msra.mxu0 0.0
    %1567 = vmatprep.subr.mxu0 0.0
    %1568 = vmatpush1.xpose.msra.mxu0 0.0
    %1569 = vmatprep.subr.mxu0 0.0
    %1570 = vmatpush1.xpose.msra.mxu0 0.0
    %1571 = vmatprep.subr.mxu0 0.0
    %1572 = vmatpush1.xpose.msra.mxu0 0.0
    %1573 = vmatprep.subr.mxu0 0.0
    %1574 = vmatpush1.xpose.msra.mxu0 0.0
    %1575 = vmatprep.subr.mxu0 0.0
    %1576 = vmatpush1.xpose.msra.mxu0 0.0
    %1577 = vmatprep.subr.mxu0 0.0
    %1578 = vmatpush1.xpose.msra.mxu0 0.0
    %1579 = vmatprep.subr.mxu0 0.0
    %1580 = vmatpush1.xpose.msra.mxu0 0.0
    %1581 = vmatprep.subr.mxu0 0.0
    %1582 = vmatpush1.xpose.msra.mxu0 0.0
    %1583 = vmatprep.subr.mxu0 0.0
    %1584 = vmatpush1.xpose.msra.mxu0 0.0
    %1585 = vmatprep.subr.mxu0 0.0
    %1586 = vmatpush1.xpose.msra.mxu0 0.0
    %1587 = vmatprep.subr.mxu0 0.0
    %1588 = vmatpush1.xpose.msra.mxu0 0.0
    %1589 = vmatprep.subr.mxu0 0.0
    %1590 = vmatpush1.xpose.msra.mxu0 0.0
    %1591 = vmatprep.subr.mxu0 0.0
    %1592 = vmatpush1.xpose.msra.mxu0 0.0
    %1593 = vmatprep.subr.mxu0 0.0
    %1594 = vmatpush1.xpose.msra.mxu0 0.0
    %1595 = vmatprep.subr.mxu0 0.0
    %1596 = vmatpush1.xpose.msra.mxu0 0.0
    %1597 = vmatprep.subr.mxu0 0.0
    %1598 = vmatpush1.xpose.msra.mxu0 0.0
    %1599 = vmatprep.mubr.f32.mxu0 0.0
    %1600 = vmatmul.mubr.f32.gmra.mrb[0].mxu0 %v1524
    %v1601 = vpop.f32.mrb[0].mxu0
    %v1602 = vadd.f32 %v69, %v1601
    %v1603 = vpop.f32.mrb[0].mxu0
    %1604 = vmatprep.mubr.f32.mxu0 0.0
    %1605 = vmatmul.mubr.f32.gmra.mrb[0].mxu0 %v1527
    %v1606 = vpop.f32.mrb[0].mxu0
    %v1607 = vadd.f32 %v70, %v1606
    %v1608 = vpop.f32.mrb[0].mxu0
    %1609 = vdwg.mxu0
    %v1610 = vmul.f32 %v1602, 1.442695
    %v1611 = vpow.pop %v1610
    %v1612 = vmul.f32 %v1607, 1.442695
    %v1613 = vpow.pop %v1612
    %v1614 = vsel %vm308, %v1611, 0.0
    %1615 = vadd.xlane.f32.xlu0 %v1614
    %v1616 = vpop.xlane.xlu0 %1615
    %v1617 = vsel %vm308, %v1613, 0.0
    %1618 = vadd.xlane.f32.xlu0 %v1617
    %v1619 = vpop.xlane.xlu0 %1618
    %v1620 = vrcp.pop %v1616
    %v1621 = vrcp.pop %v1619
    %v1622 = vmul.f32 %v1611, %v1620
    %v1623 = vmul.f32 %v1613, %v1621
    %1624 = vrot.lane.b32.xlu0 %v1510, 96
    %v1625 = vpop.permute.xlu0 %1624
    %1626 = vrot.lane.b32.xlu0 %v1515, 96
    %v1627 = vpop.permute.xlu0 %1626
    %v1631 = vsel %vm308, %v1622, 0
    %v1634 = vsel %vm308, %v1623, 0
    %1636 = vmatprep.subr.mxu0 0.0
    %1637 = vmatpush1.msra.mxu0 %v1625
    %1638 = vmatprep.subr.mxu0 0.0
    %1639 = vmatpush1.msra.mxu0 %v1627
    %1640 = vmatprep.subr.mxu0 0.0
    %1641 = vmatpush1.msra.mxu0 0.0
    %1642 = vmatprep.subr.mxu0 0.0
    %1643 = vmatpush1.msra.mxu0 0.0
    %1644 = vmatprep.subr.mxu0 0.0
    %1645 = vmatpush1.msra.mxu0 0.0
    %1646 = vmatprep.subr.mxu0 0.0
    %1647 = vmatpush1.msra.mxu0 0.0
    %1648 = vmatprep.subr.mxu0 0.0
    %1649 = vmatpush1.msra.mxu0 0.0
    %1650 = vmatprep.subr.mxu0 0.0
    %1651 = vmatpush1.msra.mxu0 0.0
    %1652 = vmatprep.subr.mxu0 0.0
    %1653 = vmatpush1.msra.mxu0 0.0
    %1654 = vmatprep.subr.mxu0 0.0
    %1655 = vmatpush1.msra.mxu0 0.0
    %1656 = vmatprep.subr.mxu0 0.0
    %1657 = vmatpush1.msra.mxu0 0.0
    %1658 = vmatprep.subr.mxu0 0.0
    %1659 = vmatpush1.msra.mxu0 0.0
    %1660 = vmatprep.subr.mxu0 0.0
    %1661 = vmatpush1.msra.mxu0 0.0
    %1662 = vmatprep.subr.mxu0 0.0
    %1663 = vmatpush1.msra.mxu0 0.0
    %1664 = vmatprep.subr.mxu0 0.0
    %1665 = vmatpush1.msra.mxu0 0.0
    %1666 = vmatprep.subr.mxu0 0.0
    %1667 = vmatpush1.msra.mxu0 0.0
    %1668 = vmatprep.subr.mxu0 0.0
    %1669 = vmatpush1.msra.mxu0 0.0
    %1670 = vmatprep.subr.mxu0 0.0
    %1671 = vmatpush1.msra.mxu0 0.0
    %1672 = vmatprep.subr.mxu0 0.0
    %1673 = vmatpush1.msra.mxu0 0.0
    %1674 = vmatprep.subr.mxu0 0.0
    %1675 = vmatpush1.msra.mxu0 0.0
    %1676 = vmatprep.subr.mxu0 0.0
    %1677 = vmatpush1.msra.mxu0 0.0
    %1678 = vmatprep.subr.mxu0 0.0
    %1679 = vmatpush1.msra.mxu0 0.0
    %1680 = vmatprep.subr.mxu0 0.0
    %1681 = vmatpush1.msra.mxu0 0.0
    %1682 = vmatprep.subr.mxu0 0.0
    %1683 = vmatpush1.msra.mxu0 0.0
    %1684 = vmatprep.subr.mxu0 0.0
    %1685 = vmatpush1.msra.mxu0 0.0
    %1686 = vmatprep.subr.mxu0 0.0
    %1687 = vmatpush1.msra.mxu0 0.0
    %1688 = vmatprep.subr.mxu0 0.0
    %1689 = vmatpush1.msra.mxu0 0.0
    %1690 = vmatprep.subr.mxu0 0.0
    %1691 = vmatpush1.msra.mxu0 0.0
    %1692 = vmatprep.subr.mxu0 0.0
    %1693 = vmatpush1.msra.mxu0 0.0
    %1694 = vmatprep.subr.mxu0 0.0
    %1695 = vmatpush1.msra.mxu0 0.0
    %1696 = vmatprep.subr.mxu0 0.0
    %1697 = vmatpush1.msra.mxu0 0.0
    %1698 = vmatprep.subr.mxu0 0.0
    %1699 = vmatpush1.msra.mxu0 0.0
    %1700 = vmatprep.mubr.f32.mxu0 0.0
    %1701 = vmatmul.mubr.f32.gmra.mrb[0].mxu0 %v1631
    %v1702 = vpop.f32.mrb[0].mxu0
    %v1703 = vadd.f32 0.0, %v1702
    %v1704 = vpop.f32.mrb[0].mxu0
    %1705 = vmatprep.mubr.f32.mxu0 0.0
    %1706 = vmatmul.mubr.f32.gmra.mrb[0].mxu0 %v1634
    %v1707 = vpop.f32.mrb[0].mxu0
    %v1708 = vadd.f32 0.0, %v1707
    %v1709 = vpop.f32.mrb[0].mxu0
    %1710 = vdwg.mxu0
    %1711 = vrot.lane.b32.xlu0 %v1424, 120
    %v1712 = vpop.permute.xlu0 %1711
    %1713 = vrot.lane.b32.xlu0 %v1429, 120
    %v1714 = vpop.permute.xlu0 %1713
    %1715 = vrot.lane.b32.xlu0 %v1510, 120
    %v1716 = vpop.permute.xlu0 %1715
    %1717 = vrot.lane.b32.xlu0 %v1515, 120
    %v1718 = vpop.permute.xlu0 %1717
    %v1719 = vsel %vm220, %v1712, 0
    %v1721 = vsel %vm220, %v1714, 0
    %v1723 = vsel %vm220, %v1716, 0
    %v1725 = vsel %vm220, %v1718, 0
    %1727 = vmatprep.subr.mxu0 0.0
    %1728 = vmatpush1.xpose.msra.mxu0 %v1723
    %1729 = vmatprep.subr.mxu0 0.0
    %1730 = vmatpush1.xpose.msra.mxu0 %v1725
    %1731 = vmatprep.subr.mxu0 0.0
    %1732 = vmatpush1.xpose.msra.mxu0 0.0
    %1733 = vmatprep.subr.mxu0 0.0
    %1734 = vmatpush1.xpose.msra.mxu0 0.0
    %1735 = vmatprep.subr.mxu0 0.0
    %1736 = vmatpush1.xpose.msra.mxu0 0.0
    %1737 = vmatprep.subr.mxu0 0.0
    %1738 = vmatpush1.xpose.msra.mxu0 0.0
    %1739 = vmatprep.subr.mxu0 0.0
    %1740 = vmatpush1.xpose.msra.mxu0 0.0
    %1741 = vmatprep.subr.mxu0 0.0
    %1742 = vmatpush1.xpose.msra.mxu0 0.0
    %1743 = vmatprep.subr.mxu0 0.0
    %1744 = vmatpush1.xpose.msra.mxu0 0.0
    %1745 = vmatprep.subr.mxu0 0.0
    %1746 = vmatpush1.xpose.msra.mxu0 0.0
    %1747 = vmatprep.subr.mxu0 0.0
    %1748 = vmatpush1.xpose.msra.mxu0 0.0
    %1749 = vmatprep.subr.mxu0 0.0
    %1750 = vmatpush1.xpose.msra.mxu0 0.0
    %1751 = vmatprep.subr.mxu0 0.0
    %1752 = vmatpush1.xpose.msra.mxu0 0.0
    %1753 = vmatprep.subr.mxu0 0.0
    %1754 = vmatpush1.xpose.msra.mxu0 0.0
    %1755 = vmatprep.subr.mxu0 0.0
    %1756 = vmatpush1.xpose.msra.mxu0 0.0
    %1757 = vmatprep.subr.mxu0 0.0
    %1758 = vmatpush1.xpose.msra.mxu0 0.0
    %1759 = vmatprep.subr.mxu0 0.0
    %1760 = vmatpush1.xpose.msra.mxu0 0.0
    %1761 = vmatprep.subr.mxu0 0.0
    %1762 = vmatpush1.xpose.msra.mxu0 0.0
    %1763 = vmatprep.subr.mxu0 0.0
    %1764 = vmatpush1.xpose.msra.mxu0 0.0
    %1765 = vmatprep.subr.mxu0 0.0
    %1766 = vmatpush1.xpose.msra.mxu0 0.0
    %1767 = vmatprep.subr.mxu0 0.0
    %1768 = vmatpush1.xpose.msra.mxu0 0.0
    %1769 = vmatprep.subr.mxu0 0.0
    %1770 = vmatpush1.xpose.msra.mxu0 0.0
    %1771 = vmatprep.subr.mxu0 0.0
    %1772 = vmatpush1.xpose.msra.mxu0 0.0
    %1773 = vmatprep.subr.mxu0 0.0
    %1774 = vmatpush1.xpose.msra.mxu0 0.0
    %1775 = vmatprep.subr.mxu0 0.0
    %1776 = vmatpush1.xpose.msra.mxu0 0.0
    %1777 = vmatprep.subr.mxu0 0.0
    %1778 = vmatpush1.xpose.msra.mxu0 0.0
    %1779 = vmatprep.subr.mxu0 0.0
    %1780 = vmatpush1.xpose.msra.mxu0 0.0
    %1781 = vmatprep.subr.mxu0 0.0
    %1782 = vmatpush1.xpose.msra.mxu0 0.0
    %1783 = vmatprep.subr.mxu0 0.0
    %1784 = vmatpush1.xpose.msra.mxu0 0.0
    %1785 = vmatprep.subr.mxu0 0.0
    %1786 = vmatpush1.xpose.msra.mxu0 0.0
    %1787 = vmatprep.subr.mxu0 0.0
    %1788 = vmatpush1.xpose.msra.mxu0 0.0
    %1789 = vmatprep.subr.mxu0 0.0
    %1790 = vmatpush1.xpose.msra.mxu0 0.0
    %1791 = vmatprep.mubr.f32.mxu0 0.0
    %1792 = vmatmul.mubr.f32.gmra.mrb[0].mxu0 %v1719
    %v1793 = vpop.f32.mrb[0].mxu0
    %v1794 = vadd.f32 %v69, %v1793
    %v1795 = vpop.f32.mrb[0].mxu0
    %1796 = vmatprep.mubr.f32.mxu0 0.0
    %1797 = vmatmul.mubr.f32.gmra.mrb[0].mxu0 %v1721
    %v1798 = vpop.f32.mrb[0].mxu0
    %v1799 = vadd.f32 %v70, %v1798
    %v1800 = vpop.f32.mrb[0].mxu0
    %1801 = vdwg.mxu0
    %v1802 = vmul.f32 %v1794, 1.442695
    %v1803 = vpow.pop %v1802
    %v1804 = vmul.f32 %v1799, 1.442695
    %v1805 = vpow.pop %v1804
    %v1806 = vsel %vm308, %v1803, 0.0
    %1807 = vadd.xlane.f32.xlu0 %v1806
    %v1808 = vpop.xlane.xlu0 %1807
    %v1809 = vsel %vm308, %v1805, 0.0
    %1810 = vadd.xlane.f32.xlu0 %v1809
    %v1811 = vpop.xlane.xlu0 %1810
    %v1812 = vrcp.pop %v1808
    %v1813 = vrcp.pop %v1811
    %v1814 = vmul.f32 %v1803, %v1812
    %v1815 = vmul.f32 %v1805, %v1813
    %1816 = vrot.lane.b32.xlu0 %v1510, 88
    %v1817 = vpop.permute.xlu0 %1816
    %1818 = vrot.lane.b32.xlu0 %v1515, 88
    %v1819 = vpop.permute.xlu0 %1818
    %v1823 = vsel %vm308, %v1814, 0
    %v1826 = vsel %vm308, %v1815, 0
    %1828 = vmatprep.subr.mxu0 0.0
    %1829 = vmatpush1.msra.mxu0 %v1817
    %1830 = vmatprep.subr.mxu0 0.0
    %1831 = vmatpush1.msra.mxu0 %v1819
    %1832 = vmatprep.subr.mxu0 0.0
    %1833 = vmatpush1.msra.mxu0 0.0
    %1834 = vmatprep.subr.mxu0 0.0
    %1835 = vmatpush1.msra.mxu0 0.0
    %1836 = vmatprep.subr.mxu0 0.0
    %1837 = vmatpush1.msra.mxu0 0.0
    %1838 = vmatprep.subr.mxu0 0.0
    %1839 = vmatpush1.msra.mxu0 0.0
    %1840 = vmatprep.subr.mxu0 0.0
    %1841 = vmatpush1.msra.mxu0 0.0
    %1842 = vmatprep.subr.mxu0 0.0
    %1843 = vmatpush1.msra.mxu0 0.0
    %1844 = vmatprep.subr.mxu0 0.0
    %1845 = vmatpush1.msra.mxu0 0.0
    %1846 = vmatprep.subr.mxu0 0.0
    %1847 = vmatpush1.msra.mxu0 0.0
    %1848 = vmatprep.subr.mxu0 0.0
    %1849 = vmatpush1.msra.mxu0 0.0
    %1850 = vmatprep.subr.mxu0 0.0
    %1851 = vmatpush1.msra.mxu0 0.0
    %1852 = vmatprep.subr.mxu0 0.0
    %1853 = vmatpush1.msra.mxu0 0.0
    %1854 = vmatprep.subr.mxu0 0.0
    %1855 = vmatpush1.msra.mxu0 0.0
    %1856 = vmatprep.subr.mxu0 0.0
    %1857 = vmatpush1.msra.mxu0 0.0
    %1858 = vmatprep.subr.mxu0 0.0
    %1859 = vmatpush1.msra.mxu0 0.0
    %1860 = vmatprep.subr.mxu0 0.0
    %1861 = vmatpush1.msra.mxu0 0.0
    %1862 = vmatprep.subr.mxu0 0.0
    %1863 = vmatpush1.msra.mxu0 0.0
    %1864 = vmatprep.subr.mxu0 0.0
    %1865 = vmatpush1.msra.mxu0 0.0
    %1866 = vmatprep.subr.mxu0 0.0
    %1867 = vmatpush1.msra.mxu0 0.0
    %1868 = vmatprep.subr.mxu0 0.0
    %1869 = vmatpush1.msra.mxu0 0.0
    %1870 = vmatprep.subr.mxu0 0.0
    %1871 = vmatpush1.msra.mxu0 0.0
    %1872 = vmatprep.subr.mxu0 0.0
    %1873 = vmatpush1.msra.mxu0 0.0
    %1874 = vmatprep.subr.mxu0 0.0
    %1875 = vmatpush1.msra.mxu0 0.0
    %1876 = vmatprep.subr.mxu0 0.0
    %1877 = vmatpush1.msra.mxu0 0.0
    %1878 = vmatprep.subr.mxu0 0.0
    %1879 = vmatpush1.msra.mxu0 0.0
    %1880 = vmatprep.subr.mxu0 0.0
    %1881 = vmatpush1.msra.mxu0 0.0
    %1882 = vmatprep.subr.mxu0 0.0
    %1883 = vmatpush1.msra.mxu0 0.0
    %1884 = vmatprep.subr.mxu0 0.0
    %1885 = vmatpush1.msra.mxu0 0.0
    %1886 = vmatprep.subr.mxu0 0.0
    %1887 = vmatpush1.msra.mxu0 0.0
    %1888 = vmatprep.subr.mxu0 0.0
    %1889 = vmatpush1.msra.mxu0 0.0
    %1890 = vmatprep.subr.mxu0 0.0
    %1891 = vmatpush1.msra.mxu0 0.0
    %1892 = vmatprep.mubr.f32.mxu0 0.0
    %1893 = vmatmul.mubr.f32.gmra.mrb[0].mxu0 %v1823
    %v1894 = vpop.f32.mrb[0].mxu0
    %v1895 = vadd.f32 0.0, %v1894
    %v1896 = vpop.f32.mrb[0].mxu0
    %1897 = vmatprep.mubr.f32.mxu0 0.0
    %1898 = vmatmul.mubr.f32.gmra.mrb[0].mxu0 %v1826
    %v1899 = vpop.f32.mrb[0].mxu0
    %v1900 = vadd.f32 0.0, %v1899
    %v1901 = vpop.f32.mrb[0].mxu0
    %1902 = vdwg.mxu0
    %v1904 = vsel %vm220, %v1895, 0
    %v1907 = vsel %vm220, %v1900, 0
    %1909 = vmatprep.subr.mxu0 0.0
    %1910 = vmatpush1.msra.mxu0 %v1520
    %1911 = vmatprep.subr.mxu0 0.0
    %1912 = vmatpush1.msra.mxu0 0.0
    %1913 = vmatprep.subr.mxu0 0.0
    %1914 = vmatpush1.msra.mxu0 0.0
    %1915 = vmatprep.subr.mxu0 0.0
    %1916 = vmatpush1.msra.mxu0 0.0
    %1917 = vmatprep.subr.mxu0 0.0
    %1918 = vmatpush1.msra.mxu0 0.0
    %1919 = vmatprep.subr.mxu0 0.0
    %1920 = vmatpush1.msra.mxu0 0.0
    %1921 = vmatprep.subr.mxu0 0.0
    %1922 = vmatpush1.msra.mxu0 0.0
    %1923 = vmatprep.subr.mxu0 0.0
    %1924 = vmatpush1.msra.mxu0 0.0
    %1925 = vmatprep.subr.mxu0 0.0
    %1926 = vmatpush1.msra.mxu0 0.0
    %1927 = vmatprep.subr.mxu0 0.0
    %1928 = vmatpush1.msra.mxu0 0.0
    %1929 = vmatprep.subr.mxu0 0.0
    %1930 = vmatpush1.msra.mxu0 0.0
    %1931 = vmatprep.subr.mxu0 0.0
    %1932 = vmatpush1.msra.mxu0 0.0
    %1933 = vmatprep.subr.mxu0 0.0
    %1934 = vmatpush1.msra.mxu0 0.0
    %1935 = vmatprep.subr.mxu0 0.0
    %1936 = vmatpush1.msra.mxu0 0.0
    %1937 = vmatprep.subr.mxu0 0.0
    %1938 = vmatpush1.msra.mxu0 0.0
    %1939 = vmatprep.subr.mxu0 0.0
    %1940 = vmatpush1.msra.mxu0 0.0
    %1941 = vmatprep.subr.mxu0 0.0
    %1942 = vmatpush1.msra.mxu0 0.0
    %1943 = vmatprep.subr.mxu0 0.0
    %1944 = vmatpush1.msra.mxu0 0.0
    %1945 = vmatprep.subr.mxu0 0.0
    %1946 = vmatpush1.msra.mxu0 0.0
    %1947 = vmatprep.subr.mxu0 0.0
    %1948 = vmatpush1.msra.mxu0 0.0
    %1949 = vmatprep.subr.mxu0 0.0
    %1950 = vmatpush1.msra.mxu0 0.0
    %1951 = vmatprep.subr.mxu0 0.0
    %1952 = vmatpush1.msra.mxu0 0.0
    %1953 = vmatprep.subr.mxu0 0.0
    %1954 = vmatpush1.msra.mxu0 0.0
    %1955 = vmatprep.subr.mxu0 0.0
    %1956 = vmatpush1.msra.mxu0 0.0
    %1957 = vmatprep.subr.mxu0 0.0
    %1958 = vmatpush1.msra.mxu0 0.0
    %1959 = vmatprep.subr.mxu0 0.0
    %1960 = vmatpush1.msra.mxu0 0.0
    %1961 = vmatprep.subr.mxu0 0.0
    %1962 = vmatpush1.msra.mxu0 0.0
    %1963 = vmatprep.subr.mxu0 0.0
    %1964 = vmatpush1.msra.mxu0 0.0
    %1965 = vmatprep.subr.mxu0 0.0
    %1966 = vmatpush1.msra.mxu0 0.0
    %1967 = vmatprep.subr.mxu0 0.0
    %1968 = vmatpush1.msra.mxu0 0.0
    %1969 = vmatprep.subr.mxu0 0.0
    %1970 = vmatpush1.msra.mxu0 0.0
    %1971 = vmatprep.subr.mxu0 0.0
    %1972 = vmatpush1.msra.mxu0 0.0
    %1973 = vmatprep.mubr.f32.mxu0 0.0
    %1974 = vmatmul.mubr.f32.gmra.mrb[0].mxu0 %v1904
    %v1975 = vpop.f32.mrb[0].mxu0
    %v1976 = vadd.f32 0.0, %v1975
    %v1977 = vpop.f32.mrb[0].mxu0
    %1978 = vmatprep.mubr.f32.mxu0 0.0
    %1979 = vmatmul.mubr.f32.gmra.mrb[0].mxu0 %v1907
    %v1980 = vpop.f32.mrb[0].mxu0
    %v1981 = vadd.f32 0.0, %v1980
    %v1982 = vpop.f32.mrb[0].mxu0
    %1983 = vdwg.mxu0
    %v1985 = vsel %vm220, %v1703, 0
    %v1988 = vsel %vm220, %v1708, 0
    %1990 = vmatprep.subr.mxu0 0.0
    %1991 = vmatpush1.msra.mxu0 %v1519
    %1992 = vmatprep.subr.mxu0 0.0
    %1993 = vmatpush1.msra.mxu0 0.0
    %1994 = vmatprep.subr.mxu0 0.0
    %1995 = vmatpush1.msra.mxu0 0.0
    %1996 = vmatprep.subr.mxu0 0.0
    %1997 = vmatpush1.msra.mxu0 0.0
    %1998 = vmatprep.subr.mxu0 0.0
    %1999 = vmatpush1.msra.mxu0 0.0
    %2000 = vmatprep.subr.mxu0 0.0
    %2001 = vmatpush1.msra.mxu0 0.0
    %2002 = vmatprep.subr.mxu0 0.0
    %2003 = vmatpush1.msra.mxu0 0.0
    %2004 = vmatprep.subr.mxu0 0.0
    %2005 = vmatpush1.msra.mxu0 0.0
    %2006 = vmatprep.subr.mxu0 0.0
    %2007 = vmatpush1.msra.mxu0 0.0
    %2008 = vmatprep.subr.mxu0 0.0
    %2009 = vmatpush1.msra.mxu0 0.0
    %2010 = vmatprep.subr.mxu0 0.0
    %2011 = vmatpush1.msra.mxu0 0.0
    %2012 = vmatprep.subr.mxu0 0.0
    %2013 = vmatpush1.msra.mxu0 0.0
    %2014 = vmatprep.subr.mxu0 0.0
    %2015 = vmatpush1.msra.mxu0 0.0
    %2016 = vmatprep.subr.mxu0 0.0
    %2017 = vmatpush1.msra.mxu0 0.0
    %2018 = vmatprep.subr.mxu0 0.0
    %2019 = vmatpush1.msra.mxu0 0.0
    %2020 = vmatprep.subr.mxu0 0.0
    %2021 = vmatpush1.msra.mxu0 0.0
    %2022 = vmatprep.subr.mxu0 0.0
    %2023 = vmatpush1.msra.mxu0 0.0
    %2024 = vmatprep.subr.mxu0 0.0
    %2025 = vmatpush1.msra.mxu0 0.0
    %2026 = vmatprep.subr.mxu0 0.0
    %2027 = vmatpush1.msra.mxu0 0.0
    %2028 = vmatprep.subr.mxu0 0.0
    %2029 = vmatpush1.msra.mxu0 0.0
    %2030 = vmatprep.subr.mxu0 0.0
    %2031 = vmatpush1.msra.mxu0 0.0
    %2032 = vmatprep.subr.mxu0 0.0
    %2033 = vmatpush1.msra.mxu0 0.0
    %2034 = vmatprep.subr.mxu0 0.0
    %2035 = vmatpush1.msra.mxu0 0.0
    %2036 = vmatprep.subr.mxu0 0.0
    %2037 = vmatpush1.msra.mxu0 0.0
    %2038 = vmatprep.subr.mxu0 0.0
    %2039 = vmatpush1.msra.mxu0 0.0
    %2040 = vmatprep.subr.mxu0 0.0
    %2041 = vmatpush1.msra.mxu0 0.0
    %2042 = vmatprep.subr.mxu0 0.0
    %2043 = vmatpush1.msra.mxu0 0.0
    %2044 = vmatprep.subr.mxu0 0.0
    %2045 = vmatpush1.msra.mxu0 0.0
    %2046 = vmatprep.subr.mxu0 0.0
    %2047 = vmatpush1.msra.mxu0 0.0
    %2048 = vmatprep.subr.mxu0 0.0
    %2049 = vmatpush1.msra.mxu0 0.0
    %2050 = vmatprep.subr.mxu0 0.0
    %2051 = vmatpush1.msra.mxu0 0.0
    %2052 = vmatprep.subr.mxu0 0.0
    %2053 = vmatpush1.msra.mxu0 0.0
    %2054 = vmatprep.mubr.f32.mxu0 0.0
    %2055 = vmatmul.mubr.f32.gmra.mrb[0].mxu0 %v1985
    %v2056 = vpop.f32.mrb[0].mxu0
    %v2057 = vadd.f32 %v1976, %v2056
    %v2058 = vpop.f32.mrb[0].mxu0
    %2059 = vmatprep.mubr.f32.mxu0 0.0
    %2060 = vmatmul.mubr.f32.gmra.mrb[0].mxu0 %v1988
    %v2061 = vpop.f32.mrb[0].mxu0
    %v2062 = vadd.f32 %v1981, %v2061
    %v2063 = vpop.f32.mrb[0].mxu0
    %2064 = vdwg.mxu0
    %2065 = vrot.lane.b32.xlu0 %v1424, 112
    %v2066 = vpop.permute.xlu0 %2065
    %2067 = vrot.lane.b32.xlu0 %v1429, 112
    %v2068 = vpop.permute.xlu0 %2067
    %2069 = vrot.lane.b32.xlu0 %v1510, 112
    %v2070 = vpop.permute.xlu0 %2069
    %2071 = vrot.lane.b32.xlu0 %v1515, 112
    %v2072 = vpop.permute.xlu0 %2071
    %v2073 = vsel %vm220, %v2066, 0
    %v2075 = vsel %vm220, %v2068, 0
    %v2077 = vsel %vm220, %v2070, 0
    %v2079 = vsel %vm220, %v2072, 0
    %2081 = vmatprep.subr.mxu0 0.0
    %2082 = vmatpush1.xpose.msra.mxu0 %v2077
    %2083 = vmatprep.subr.mxu0 0.0
    %2084 = vmatpush1.xpose.msra.mxu0 %v2079
    %2085 = vmatprep.subr.mxu0 0.0
    %2086 = vmatpush1.xpose.msra.mxu0 0.0
    %2087 = vmatprep.subr.mxu0 0.0
    %2088 = vmatpush1.xpose.msra.mxu0 0.0
    %2089 = vmatprep.subr.mxu0 0.0
    %2090 = vmatpush1.xpose.msra.mxu0 0.0
    %2091 = vmatprep.subr.mxu0 0.0
    %2092 = vmatpush1.xpose.msra.mxu0 0.0
    %2093 = vmatprep.subr.mxu0 0.0
    %2094 = vmatpush1.xpose.msra.mxu0 0.0
    %2095 = vmatprep.subr.mxu0 0.0
    %2096 = vmatpush1.xpose.msra.mxu0 0.0
    %2097 = vmatprep.subr.mxu0 0.0
    %2098 = vmatpush1.xpose.msra.mxu0 0.0
    %2099 = vmatprep.subr.mxu0 0.0
    %2100 = vmatpush1.xpose.msra.mxu0 0.0
    %2101 = vmatprep.subr.mxu0 0.0
    %2102 = vmatpush1.xpose.msra.mxu0 0.0
    %2103 = vmatprep.subr.mxu0 0.0
    %2104 = vmatpush1.xpose.msra.mxu0 0.0
    %2105 = vmatprep.subr.mxu0 0.0
    %2106 = vmatpush1.xpose.msra.mxu0 0.0
    %2107 = vmatprep.subr.mxu0 0.0
    %2108 = vmatpush1.xpose.msra.mxu0 0.0
    %2109 = vmatprep.subr.mxu0 0.0
    %2110 = vmatpush1.xpose.msra.mxu0 0.0
    %2111 = vmatprep.subr.mxu0 0.0
    %2112 = vmatpush1.xpose.msra.mxu0 0.0
    %2113 = vmatprep.subr.mxu0 0.0
    %2114 = vmatpush1.xpose.msra.mxu0 0.0
    %2115 = vmatprep.subr.mxu0 0.0
    %2116 = vmatpush1.xpose.msra.mxu0 0.0
    %2117 = vmatprep.subr.mxu0 0.0
    %2118 = vmatpush1.xpose.msra.mxu0 0.0
    %2119 = vmatprep.subr.mxu0 0.0
    %2120 = vmatpush1.xpose.msra.mxu0 0.0
    %2121 = vmatprep.subr.mxu0 0.0
    %2122 = vmatpush1.xpose.msra.mxu0 0.0
    %2123 = vmatprep.subr.mxu0 0.0
    %2124 = vmatpush1.xpose.msra.mxu0 0.0
    %2125 = vmatprep.subr.mxu0 0.0
    %2126 = vmatpush1.xpose.msra.mxu0 0.0
    %2127 = vmatprep.subr.mxu0 0.0
    %2128 = vmatpush1.xpose.msra.mxu0 0.0
    %2129 = vmatprep.subr.mxu0 0.0
    %2130 = vmatpush1.xpose.msra.mxu0 0.0
    %2131 = vmatprep.subr.mxu0 0.0
    %2132 = vmatpush1.xpose.msra.mxu0 0.0
    %2133 = vmatprep.subr.mxu0 0.0
    %2134 = vmatpush1.xpose.msra.mxu0 0.0
    %2135 = vmatprep.subr.mxu0 0.0
    %2136 = vmatpush1.xpose.msra.mxu0 0.0
    %2137 = vmatprep.subr.mxu0 0.0
    %2138 = vmatpush1.xpose.msra.mxu0 0.0
    %2139 = vmatprep.subr.mxu0 0.0
    %2140 = vmatpush1.xpose.msra.mxu0 0.0
    %2141 = vmatprep.subr.mxu0 0.0
    %2142 = vmatpush1.xpose.msra.mxu0 0.0
    %2143 = vmatprep.subr.mxu0 0.0
    %2144 = vmatpush1.xpose.msra.mxu0 0.0
    %2145 = vmatprep.mubr.f32.mxu0 0.0
    %2146 = vmatmul.mubr.f32.gmra.mrb[0].mxu0 %v2073
    %v2147 = vpop.f32.mrb[0].mxu0
    %v2148 = vadd.f32 %v69, %v2147
    %v2149 = vpop.f32.mrb[0].mxu0
    %2150 = vmatprep.mubr.f32.mxu0 0.0
    %2151 = vmatmul.mubr.f32.gmra.mrb[0].mxu0 %v2075
    %v2152 = vpop.f32.mrb[0].mxu0
    %v2153 = vadd.f32 %v70, %v2152
    %v2154 = vpop.f32.mrb[0].mxu0
    %2155 = vdwg.mxu0
    %v2156 = vmul.f32 %v2148, 1.442695
    %v2157 = vpow.pop %v2156
    %v2158 = vmul.f32 %v2153, 1.442695
    %v2159 = vpow.pop %v2158
    %v2160 = vsel %vm308, %v2157, 0.0
    %2161 = vadd.xlane.f32.xlu0 %v2160
    %v2162 = vpop.xlane.xlu0 %2161
    %v2163 = vsel %vm308, %v2159, 0.0
    %2164 = vadd.xlane.f32.xlu0 %v2163
    %v2165 = vpop.xlane.xlu0 %2164
    %v2166 = vrcp.pop %v2162
    %v2167 = vrcp.pop %v2165
    %v2168 = vmul.f32 %v2157, %v2166
    %v2169 = vmul.f32 %v2159, %v2167
    %2170 = vrot.lane.b32.xlu0 %v1510, 80
    %v2171 = vpop.permute.xlu0 %2170
    %2172 = vrot.lane.b32.xlu0 %v1515, 80
    %v2173 = vpop.permute.xlu0 %2172
    %v2177 = vsel %vm308, %v2168, 0
    %v2180 = vsel %vm308, %v2169, 0
    %2182 = vmatprep.subr.mxu0 0.0
    %2183 = vmatpush1.msra.mxu0 %v2171
    %2184 = vmatprep.subr.mxu0 0.0
    %2185 = vmatpush1.msra.mxu0 %v2173
    %2186 = vmatprep.subr.mxu0 0.0
    %2187 = vmatpush1.msra.mxu0 0.0
    %2188 = vmatprep.subr.mxu0 0.0
    %2189 = vmatpush1.msra.mxu0 0.0
    %2190 = vmatprep.subr.mxu0 0.0
    %2191 = vmatpush1.msra.mxu0 0.0
    %2192 = vmatprep.subr.mxu0 0.0
    %2193 = vmatpush1.msra.mxu0 0.0
    %2194 = vmatprep.subr.mxu0 0.0
    %2195 = vmatpush1.msra.mxu0 0.0
    %2196 = vmatprep.subr.mxu0 0.0
    %2197 = vmatpush1.msra.mxu0 0.0
    %2198 = vmatprep.subr.mxu0 0.0
    %2199 = vmatpush1.msra.mxu0 0.0
    %2200 = vmatprep.subr.mxu0 0.0
    %2201 = vmatpush1.msra.mxu0 0.0
    %2202 = vmatprep.subr.mxu0 0.0
    %2203 = vmatpush1.msra.mxu0 0.0
    %2204 = vmatprep.subr.mxu0 0.0
    %2205 = vmatpush1.msra.mxu0 0.0
    %2206 = vmatprep.subr.mxu0 0.0
    %2207 = vmatpush1.msra.mxu0 0.0
    %2208 = vmatprep.subr.mxu0 0.0
    %2209 = vmatpush1.msra.mxu0 0.0
    %2210 = vmatprep.subr.mxu0 0.0
    %2211 = vmatpush1.msra.mxu0 0.0
    %2212 = vmatprep.subr.mxu0 0.0
    %2213 = vmatpush1.msra.mxu0 0.0
    %2214 = vmatprep.subr.mxu0 0.0
    %2215 = vmatpush1.msra.mxu0 0.0
    %2216 = vmatprep.subr.mxu0 0.0
    %2217 = vmatpush1.msra.mxu0 0.0
    %2218 = vmatprep.subr.mxu0 0.0
    %2219 = vmatpush1.msra.mxu0 0.0
    %2220 = vmatprep.subr.mxu0 0.0
    %2221 = vmatpush1.msra.mxu0 0.0
    %2222 = vmatprep.subr.mxu0 0.0
    %2223 = vmatpush1.msra.mxu0 0.0
    %2224 = vmatprep.subr.mxu0 0.0
    %2225 = vmatpush1.msra.mxu0 0.0
    %2226 = vmatprep.subr.mxu0 0.0
    %2227 = vmatpush1.msra.mxu0 0.0
    %2228 = vmatprep.subr.mxu0 0.0
    %2229 = vmatpush1.msra.mxu0 0.0
    %2230 = vmatprep.subr.mxu0 0.0
    %2231 = vmatpush1.msra.mxu0 0.0
    %2232 = vmatprep.subr.mxu0 0.0
    %2233 = vmatpush1.msra.mxu0 0.0
    %2234 = vmatprep.subr.mxu0 0.0
    %2235 = vmatpush1.msra.mxu0 0.0
    %2236 = vmatprep.subr.mxu0 0.0
    %2237 = vmatpush1.msra.mxu0 0.0
    %2238 = vmatprep.subr.mxu0 0.0
    %2239 = vmatpush1.msra.mxu0 0.0
    %2240 = vmatprep.subr.mxu0 0.0
    %2241 = vmatpush1.msra.mxu0 0.0
    %2242 = vmatprep.subr.mxu0 0.0
    %2243 = vmatpush1.msra.mxu0 0.0
    %2244 = vmatprep.subr.mxu0 0.0
    %2245 = vmatpush1.msra.mxu0 0.0
    %2246 = vmatprep.mubr.f32.mxu0 0.0
    %2247 = vmatmul.mubr.f32.gmra.mrb[0].mxu0 %v2177
    %v2248 = vpop.f32.mrb[0].mxu0
    %v2249 = vadd.f32 0.0, %v2248
    %v2250 = vpop.f32.mrb[0].mxu0
    %2251 = vmatprep.mubr.f32.mxu0 0.0
    %2252 = vmatmul.mubr.f32.gmra.mrb[0].mxu0 %v2180
    %v2253 = vpop.f32.mrb[0].mxu0
    %v2254 = vadd.f32 0.0, %v2253
    %v2255 = vpop.f32.mrb[0].mxu0
    %2256 = vdwg.mxu0
    %v2258 = vsel %vm220, %v2249, 0
    %v2261 = vsel %vm220, %v2254, 0
    %2263 = vmatprep.subr.mxu0 0.0
    %2264 = vmatpush1.msra.mxu0 %v1521
    %2265 = vmatprep.subr.mxu0 0.0
    %2266 = vmatpush1.msra.mxu0 0.0
    %2267 = vmatprep.subr.mxu0 0.0
    %2268 = vmatpush1.msra.mxu0 0.0
    %2269 = vmatprep.subr.mxu0 0.0
    %2270 = vmatpush1.msra.mxu0 0.0
    %2271 = vmatprep.subr.mxu0 0.0
    %2272 = vmatpush1.msra.mxu0 0.0
    %2273 = vmatprep.subr.mxu0 0.0
    %2274 = vmatpush1.msra.mxu0 0.0
    %2275 = vmatprep.subr.mxu0 0.0
    %2276 = vmatpush1.msra.mxu0 0.0
    %2277 = vmatprep.subr.mxu0 0.0
    %2278 = vmatpush1.msra.mxu0 0.0
    %2279 = vmatprep.subr.mxu0 0.0
    %2280 = vmatpush1.msra.mxu0 0.0
    %2281 = vmatprep.subr.mxu0 0.0
    %2282 = vmatpush1.msra.mxu0 0.0
    %2283 = vmatprep.subr.mxu0 0.0
    %2284 = vmatpush1.msra.mxu0 0.0
    %2285 = vmatprep.subr.mxu0 0.0
    %2286 = vmatpush1.msra.mxu0 0.0
    %2287 = vmatprep.subr.mxu0 0.0
    %2288 = vmatpush1.msra.mxu0 0.0
    %2289 = vmatprep.subr.mxu0 0.0
    %2290 = vmatpush1.msra.mxu0 0.0
    %2291 = vmatprep.subr.mxu0 0.0
    %2292 = vmatpush1.msra.mxu0 0.0
    %2293 = vmatprep.subr.mxu0 0.0
    %2294 = vmatpush1.msra.mxu0 0.0
    %2295 = vmatprep.subr.mxu0 0.0
    %2296 = vmatpush1.msra.mxu0 0.0
    %2297 = vmatprep.subr.mxu0 0.0
    %2298 = vmatpush1.msra.mxu0 0.0
    %2299 = vmatprep.subr.mxu0 0.0
    %2300 = vmatpush1.msra.mxu0 0.0
    %2301 = vmatprep.subr.mxu0 0.0
    %2302 = vmatpush1.msra.mxu0 0.0
    %2303 = vmatprep.subr.mxu0 0.0
    %2304 = vmatpush1.msra.mxu0 0.0
    %2305 = vmatprep.subr.mxu0 0.0
    %2306 = vmatpush1.msra.mxu0 0.0
    %2307 = vmatprep.subr.mxu0 0.0
    %2308 = vmatpush1.msra.mxu0 0.0
    %2309 = vmatprep.subr.mxu0 0.0
    %2310 = vmatpush1.msra.mxu0 0.0
    %2311 = vmatprep.subr.mxu0 0.0
    %2312 = vmatpush1.msra.mxu0 0.0
    %2313 = vmatprep.subr.mxu0 0.0
    %2314 = vmatpush1.msra.mxu0 0.0
    %2315 = vmatprep.subr.mxu0 0.0
    %2316 = vmatpush1.msra.mxu0 0.0
    %2317 = vmatprep.subr.mxu0 0.0
    %2318 = vmatpush1.msra.mxu0 0.0
    %2319 = vmatprep.subr.mxu0 0.0
    %2320 = vmatpush1.msra.mxu0 0.0
    %2321 = vmatprep.subr.mxu0 0.0
    %2322 = vmatpush1.msra.mxu0 0.0
    %2323 = vmatprep.subr.mxu0 0.0
    %2324 = vmatpush1.msra.mxu0 0.0
    %2325 = vmatprep.subr.mxu0 0.0
    %2326 = vmatpush1.msra.mxu0 0.0
    %2327 = vmatprep.mubr.f32.mxu0 0.0
    %2328 = vmatmul.mubr.f32.gmra.mrb[0].mxu0 %v2258
    %v2329 = vpop.f32.mrb[0].mxu0
    %v2330 = vadd.f32 0.0, %v2329
    %v2331 = vpop.f32.mrb[0].mxu0
    %2332 = vmatprep.mubr.f32.mxu0 0.0
    %2333 = vmatmul.mubr.f32.gmra.mrb[0].mxu0 %v2261
    %v2334 = vpop.f32.mrb[0].mxu0
    %v2335 = vadd.f32 0.0, %v2334
    %v2336 = vpop.f32.mrb[0].mxu0
    %2337 = vdwg.mxu0
    %v2338 = vadd.f32 %v2057, %v2330
    %v2339 = vadd.f32 %v2062, %v2335
    %2340 = vrot.lane.b32.xlu0 %v1424, 104
    %v2341 = vpop.permute.xlu0 %2340
    %2342 = vrot.lane.b32.xlu0 %v1429, 104
    %v2343 = vpop.permute.xlu0 %2342
    %2344 = vrot.lane.b32.xlu0 %v1510, 104
    %v2345 = vpop.permute.xlu0 %2344
    %2346 = vrot.lane.b32.xlu0 %v1515, 104
    %v2347 = vpop.permute.xlu0 %2346
    %v2348 = vsel %vm220, %v2341, 0
    %v2350 = vsel %vm220, %v2343, 0
    %v2352 = vsel %vm220, %v2345, 0
    %v2354 = vsel %vm220, %v2347, 0
    %2356 = vmatprep.subr.mxu0 0.0
    %2357 = vmatpush1.xpose.msra.mxu0 %v2352
    %2358 = vmatprep.subr.mxu0 0.0
    %2359 = vmatpush1.xpose.msra.mxu0 %v2354
    %2360 = vmatprep.subr.mxu0 0.0
    %2361 = vmatpush1.xpose.msra.mxu0 0.0
    %2362 = vmatprep.subr.mxu0 0.0
    %2363 = vmatpush1.xpose.msra.mxu0 0.0
    %2364 = vmatprep.subr.mxu0 0.0
    %2365 = vmatpush1.xpose.msra.mxu0 0.0
    %2366 = vmatprep.subr.mxu0 0.0
    %2367 = vmatpush1.xpose.msra.mxu0 0.0
    %2368 = vmatprep.subr.mxu0 0.0
    %2369 = vmatpush1.xpose.msra.mxu0 0.0
    %2370 = vmatprep.subr.mxu0 0.0
    %2371 = vmatpush1.xpose.msra.mxu0 0.0
    %2372 = vmatprep.subr.mxu0 0.0
    %2373 = vmatpush1.xpose.msra.mxu0 0.0
    %2374 = vmatprep.subr.mxu0 0.0
    %2375 = vmatpush1.xpose.msra.mxu0 0.0
    %2376 = vmatprep.subr.mxu0 0.0
    %2377 = vmatpush1.xpose.msra.mxu0 0.0
    %2378 = vmatprep.subr.mxu0 0.0
    %2379 = vmatpush1.xpose.msra.mxu0 0.0
    %2380 = vmatprep.subr.mxu0 0.0
    %2381 = vmatpush1.xpose.msra.mxu0 0.0
    %2382 = vmatprep.subr.mxu0 0.0
    %2383 = vmatpush1.xpose.msra.mxu0 0.0
    %2384 = vmatprep.subr.mxu0 0.0
    %2385 = vmatpush1.xpose.msra.mxu0 0.0
    %2386 = vmatprep.subr.mxu0 0.0
    %2387 = vmatpush1.xpose.msra.mxu0 0.0
    %2388 = vmatprep.subr.mxu0 0.0
    %2389 = vmatpush1.xpose.msra.mxu0 0.0
    %2390 = vmatprep.subr.mxu0 0.0
    %2391 = vmatpush1.xpose.msra.mxu0 0.0
    %2392 = vmatprep.subr.mxu0 0.0
    %2393 = vmatpush1.xpose.msra.mxu0 0.0
    %2394 = vmatprep.subr.mxu0 0.0
    %2395 = vmatpush1.xpose.msra.mxu0 0.0
    %2396 = vmatprep.subr.mxu0 0.0
    %2397 = vmatpush1.xpose.msra.mxu0 0.0
    %2398 = vmatprep.subr.mxu0 0.0
    %2399 = vmatpush1.xpose.msra.mxu0 0.0
    %2400 = vmatprep.subr.mxu0 0.0
    %2401 = vmatpush1.xpose.msra.mxu0 0.0
    %2402 = vmatprep.subr.mxu0 0.0
    %2403 = vmatpush1.xpose.msra.mxu0 0.0
    %2404 = vmatprep.subr.mxu0 0.0
    %2405 = vmatpush1.xpose.msra.mxu0 0.0
    %2406 = vmatprep.subr.mxu0 0.0
    %2407 = vmatpush1.xpose.msra.mxu0 0.0
    %2408 = vmatprep.subr.mxu0 0.0
    %2409 = vmatpush1.xpose.msra.mxu0 0.0
    %2410 = vmatprep.subr.mxu0 0.0
    %2411 = vmatpush1.xpose.msra.mxu0 0.0
    %2412 = vmatprep.subr.mxu0 0.0
    %2413 = vmatpush1.xpose.msra.mxu0 0.0
    %2414 = vmatprep.subr.mxu0 0.0
    %2415 = vmatpush1.xpose.msra.mxu0 0.0
    %2416 = vmatprep.subr.mxu0 0.0
    %2417 = vmatpush1.xpose.msra.mxu0 0.0
    %2418 = vmatprep.subr.mxu0 0.0
    %2419 = vmatpush1.xpose.msra.mxu0 0.0
    %2420 = vmatprep.mubr.f32.mxu0 0.0
    %2421 = vmatmul.mubr.f32.gmra.mrb[0].mxu0 %v2348
    %v2422 = vpop.f32.mrb[0].mxu0
    %v2423 = vadd.f32 %v69, %v2422
    %v2424 = vpop.f32.mrb[0].mxu0
    %2425 = vmatprep.mubr.f32.mxu0 0.0
    %2426 = vmatmul.mubr.f32.gmra.mrb[0].mxu0 %v2350
    %v2427 = vpop.f32.mrb[0].mxu0
    %v2428 = vadd.f32 %v70, %v2427
    %v2429 = vpop.f32.mrb[0].mxu0
    %2430 = vdwg.mxu0
    %v2431 = vmul.f32 %v2423, 1.442695
    %v2432 = vpow.pop %v2431
    %v2433 = vmul.f32 %v2428, 1.442695
    %v2434 = vpow.pop %v2433
    %v2435 = vsel %vm308, %v2432, 0.0
    %2436 = vadd.xlane.f32.xlu0 %v2435
    %v2437 = vpop.xlane.xlu0 %2436
    %v2438 = vsel %vm308, %v2434, 0.0
    %2439 = vadd.xlane.f32.xlu0 %v2438
    %v2440 = vpop.xlane.xlu0 %2439
    %v2441 = vrcp.pop %v2437
    %v2442 = vrcp.pop %v2440
    %v2443 = vmul.f32 %v2432, %v2441
    %v2444 = vmul.f32 %v2434, %v2442
    %2445 = vrot.lane.b32.xlu0 %v1510, 72
    %v2446 = vpop.permute.xlu0 %2445
    %2447 = vrot.lane.b32.xlu0 %v1515, 72
    %v2448 = vpop.permute.xlu0 %2447
    %v2452 = vsel %vm308, %v2443, 0
    %v2455 = vsel %vm308, %v2444, 0
    %2457 = vmatprep.subr.mxu0 0.0
    %2458 = vmatpush1.msra.mxu0 %v2446
    %2459 = vmatprep.subr.mxu0 0.0
    %2460 = vmatpush1.msra.mxu0 %v2448
    %2461 = vmatprep.subr.mxu0 0.0
    %2462 = vmatpush1.msra.mxu0 0.0
    %2463 = vmatprep.subr.mxu0 0.0
    %2464 = vmatpush1.msra.mxu0 0.0
    %2465 = vmatprep.subr.mxu0 0.0
    %2466 = vmatpush1.msra.mxu0 0.0
    %2467 = vmatprep.subr.mxu0 0.0
    %2468 = vmatpush1.msra.mxu0 0.0
    %2469 = vmatprep.subr.mxu0 0.0
    %2470 = vmatpush1.msra.mxu0 0.0
    %2471 = vmatprep.subr.mxu0 0.0
    %2472 = vmatpush1.msra.mxu0 0.0
    %2473 = vmatprep.subr.mxu0 0.0
    %2474 = vmatpush1.msra.mxu0 0.0
    %2475 = vmatprep.subr.mxu0 0.0
    %2476 = vmatpush1.msra.mxu0 0.0
    %2477 = vmatprep.subr.mxu0 0.0
    %2478 = vmatpush1.msra.mxu0 0.0
    %2479 = vmatprep.subr.mxu0 0.0
    %2480 = vmatpush1.msra.mxu0 0.0
    %2481 = vmatprep.subr.mxu0 0.0
    %2482 = vmatpush1.msra.mxu0 0.0
    %2483 = vmatprep.subr.mxu0 0.0
    %2484 = vmatpush1.msra.mxu0 0.0
    %2485 = vmatprep.subr.mxu0 0.0
    %2486 = vmatpush1.msra.mxu0 0.0
    %2487 = vmatprep.subr.mxu0 0.0
    %2488 = vmatpush1.msra.mxu0 0.0
    %2489 = vmatprep.subr.mxu0 0.0
    %2490 = vmatpush1.msra.mxu0 0.0
    %2491 = vmatprep.subr.mxu0 0.0
    %2492 = vmatpush1.msra.mxu0 0.0
    %2493 = vmatprep.subr.mxu0 0.0
    %2494 = vmatpush1.msra.mxu0 0.0
    %2495 = vmatprep.subr.mxu0 0.0
    %2496 = vmatpush1.msra.mxu0 0.0
    %2497 = vmatprep.subr.mxu0 0.0
    %2498 = vmatpush1.msra.mxu0 0.0
    %2499 = vmatprep.subr.mxu0 0.0
    %2500 = vmatpush1.msra.mxu0 0.0
    %2501 = vmatprep.subr.mxu0 0.0
    %2502 = vmatpush1.msra.mxu0 0.0
    %2503 = vmatprep.subr.mxu0 0.0
    %2504 = vmatpush1.msra.mxu0 0.0
    %2505 = vmatprep.subr.mxu0 0.0
    %2506 = vmatpush1.msra.mxu0 0.0
    %2507 = vmatprep.subr.mxu0 0.0
    %2508 = vmatpush1.msra.mxu0 0.0
    %2509 = vmatprep.subr.mxu0 0.0
    %2510 = vmatpush1.msra.mxu0 0.0
    %2511 = vmatprep.subr.mxu0 0.0
    %2512 = vmatpush1.msra.mxu0 0.0
    %2513 = vmatprep.subr.mxu0 0.0
    %2514 = vmatpush1.msra.mxu0 0.0
    %2515 = vmatprep.subr.mxu0 0.0
    %2516 = vmatpush1.msra.mxu0 0.0
    %2517 = vmatprep.subr.mxu0 0.0
    %2518 = vmatpush1.msra.mxu0 0.0
    %2519 = vmatprep.subr.mxu0 0.0
    %2520 = vmatpush1.msra.mxu0 0.0
    %2521 = vmatprep.mubr.f32.mxu0 0.0
    %2522 = vmatmul.mubr.f32.gmra.mrb[0].mxu0 %v2452
    %v2523 = vpop.f32.mrb[0].mxu0
    %v2524 = vadd.f32 0.0, %v2523
    %v2525 = vpop.f32.mrb[0].mxu0
    %2526 = vmatprep.mubr.f32.mxu0 0.0
    %2527 = vmatmul.mubr.f32.gmra.mrb[0].mxu0 %v2455
    %v2528 = vpop.f32.mrb[0].mxu0
    %v2529 = vadd.f32 0.0, %v2528
    %v2530 = vpop.f32.mrb[0].mxu0
    %2531 = vdwg.mxu0
    %v2533 = vsel %vm220, %v2524, 0
    %v2536 = vsel %vm220, %v2529, 0
    %2538 = vmatprep.subr.mxu0 0.0
    %2539 = vmatpush1.msra.mxu0 %v1522
    %2540 = vmatprep.subr.mxu0 0.0
    %2541 = vmatpush1.msra.mxu0 0.0
    %2542 = vmatprep.subr.mxu0 0.0
    %2543 = vmatpush1.msra.mxu0 0.0
    %2544 = vmatprep.subr.mxu0 0.0
    %2545 = vmatpush1.msra.mxu0 0.0
    %2546 = vmatprep.subr.mxu0 0.0
    %2547 = vmatpush1.msra.mxu0 0.0
    %2548 = vmatprep.subr.mxu0 0.0
    %2549 = vmatpush1.msra.mxu0 0.0
    %2550 = vmatprep.subr.mxu0 0.0
    %2551 = vmatpush1.msra.mxu0 0.0
    %2552 = vmatprep.subr.mxu0 0.0
    %2553 = vmatpush1.msra.mxu0 0.0
    %2554 = vmatprep.subr.mxu0 0.0
    %2555 = vmatpush1.msra.mxu0 0.0
    %2556 = vmatprep.subr.mxu0 0.0
    %2557 = vmatpush1.msra.mxu0 0.0
    %2558 = vmatprep.subr.mxu0 0.0
    %2559 = vmatpush1.msra.mxu0 0.0
    %2560 = vmatprep.subr.mxu0 0.0
    %2561 = vmatpush1.msra.mxu0 0.0
    %2562 = vmatprep.subr.mxu0 0.0
    %2563 = vmatpush1.msra.mxu0 0.0
    %2564 = vmatprep.subr.mxu0 0.0
    %2565 = vmatpush1.msra.mxu0 0.0
    %2566 = vmatprep.subr.mxu0 0.0
    %2567 = vmatpush1.msra.mxu0 0.0
    %2568 = vmatprep.subr.mxu0 0.0
    %2569 = vmatpush1.msra.mxu0 0.0
    %2570 = vmatprep.subr.mxu0 0.0
    %2571 = vmatpush1.msra.mxu0 0.0
    %2572 = vmatprep.subr.mxu0 0.0
    %2573 = vmatpush1.msra.mxu0 0.0
    %2574 = vmatprep.subr.mxu0 0.0
    %2575 = vmatpush1.msra.mxu0 0.0
    %2576 = vmatprep.subr.mxu0 0.0
    %2577 = vmatpush1.msra.mxu0 0.0
    %2578 = vmatprep.subr.mxu0 0.0
    %2579 = vmatpush1.msra.mxu0 0.0
    %2580 = vmatprep.subr.mxu0 0.0
    %2581 = vmatpush1.msra.mxu0 0.0
    %2582 = vmatprep.subr.mxu0 0.0
    %2583 = vmatpush1.msra.mxu0 0.0
    %2584 = vmatprep.subr.mxu0 0.0
    %2585 = vmatpush1.msra.mxu0 0.0
    %2586 = vmatprep.subr.mxu0 0.0
    %2587 = vmatpush1.msra.mxu0 0.0
    %2588 = vmatprep.subr.mxu0 0.0
    %2589 = vmatpush1.msra.mxu0 0.0
    %2590 = vmatprep.subr.mxu0 0.0
    %2591 = vmatpush1.msra.mxu0 0.0
    %2592 = vmatprep.subr.mxu0 0.0
    %2593 = vmatpush1.msra.mxu0 0.0
    %2594 = vmatprep.subr.mxu0 0.0
    %2595 = vmatpush1.msra.mxu0 0.0
    %2596 = vmatprep.subr.mxu0 0.0
    %2597 = vmatpush1.msra.mxu0 0.0
    %2598 = vmatprep.subr.mxu0 0.0
    %2599 = vmatpush1.msra.mxu0 0.0
    %2600 = vmatprep.subr.mxu0 0.0
    %2601 = vmatpush1.msra.mxu0 0.0
    %2602 = vmatprep.mubr.f32.mxu0 0.0
    %2603 = vmatmul.mubr.f32.gmra.mrb[0].mxu0 %v2533
    %v2604 = vpop.f32.mrb[0].mxu0
    %v2605 = vadd.f32 0.0, %v2604
    %v2606 = vpop.f32.mrb[0].mxu0
    %2607 = vmatprep.mubr.f32.mxu0 0.0
    %2608 = vmatmul.mubr.f32.gmra.mrb[0].mxu0 %v2536
    %v2609 = vpop.f32.mrb[0].mxu0
    %v2610 = vadd.f32 0.0, %v2609
    %v2611 = vpop.f32.mrb[0].mxu0
    %2612 = vdwg.mxu0
    %v2613 = vadd.f32 %v2338, %v2605
    %v2614 = vadd.f32 %v2339, %v2610
    %v2615 = vadd.f32 %v1310, %v2613
    %v2616 = vadd.f32 %v1311, %v2614
    %v2617 = vsel %vm75, %v2615, 0.0
    %2618 = vadd.xlane.f32.xlu0 %v2617
    %v2619 = vpop.xlane.xlu0 %2618
    %v2620 = vsel %vm75, %v2616, 0.0
    %2621 = vadd.xlane.f32.xlu0 %v2620
    %v2622 = vpop.xlane.xlu0 %2621
    %v2623 = vmul.f32 %v2619, %v82
    %v2624 = vmul.f32 %v2622, %v82
    %v2625 = vmul.f32 %v2615, %v2615
    %v2626 = vmul.f32 %v2616, %v2616
    %v2627 = vsel %vm75, %v2625, 0.0
    %2628 = vadd.xlane.f32.xlu0 %v2627
    %v2629 = vpop.xlane.xlu0 %2628
    %v2630 = vsel %vm75, %v2626, 0.0
    %2631 = vadd.xlane.f32.xlu0 %v2630
    %v2632 = vpop.xlane.xlu0 %2631
    %v2633 = vmul.f32 %v2629, %v82
    %v2634 = vmul.f32 %v2632, %v82
    %v2635 = vmul.f32 %v2623, %v2623
    %v2636 = vmul.f32 %v2624, %v2624
    %v2637 = vsub.f32 %v2633, %v2635
    %v2638 = vsub.f32 %v2634, %v2636
    %v2639 = vsub.f32 %v2615, %v2623
    %v2640 = vsub.f32 %v2616, %v2624
    %v2641 = vadd.f32 %v2637, 1e-06
    %v2642 = vadd.f32 %v2638, 1e-06
    %v2643 = vrsqrt.pop %v2641
    %v2644 = vrsqrt.pop %v2642
    %v2645 = vmul.f32 %v2639, %v2643
    %v2646 = vmul.f32 %v2640, %v2644
    %v2647 = vmul.f32 %v2645, %v111
    %v2648 = vmul.f32 %v2646, %v111
    %v2649 = vadd.f32 %v2647, %v119
    %v2650 = vadd.f32 %v2648, %v119
    %s2651 = scalar_lea.vmem %s11, 32
    %v2652 = vld [vmem:[%s2651] sm:$0xff]
    %v2653 = vld [vmem:[%s2651 + $0x8] sm:$0xff]
    %v2654 = vld [vmem:[%s2651 + $0x10] sm:$0xff]
    %v2655 = vld [vmem:[%s2651 + $0x18] sm:$0xff]
    %s2656 = scalar_lea.vmem %s12, 1
    %v2657 = vld [vmem:[%s2656] sm:$0x1]
    %v2659 = vlaneseq
    %v2660 = vshrl.u32 %v2659, 7
    %v2661 = vsub.s32 0, %v2660
    %v2662 = vrot.slane %v2657, %v2661
    %v2665 = vsel %vm75, %v2649, 0
    %v2668 = vsel %vm75, %v2650, 0
    %2670 = vmatprep.subr.mxu0 0.0
    %2671 = vmatpush1.msra.mxu0 %v2652
    %2672 = vmatprep.subr.mxu0 0.0
    %2673 = vmatpush1.msra.mxu0 %v2653
    %2674 = vmatprep.subr.mxu0 0.0
    %2675 = vmatpush1.msra.mxu0 %v2654
    %2676 = vmatprep.subr.mxu0 0.0
    %2677 = vmatpush1.msra.mxu0 %v2655
    %2678 = vmatprep.subr.mxu0 0.0
    %2679 = vmatpush1.msra.mxu0 0.0
    %2680 = vmatprep.subr.mxu0 0.0
    %2681 = vmatpush1.msra.mxu0 0.0
    %2682 = vmatprep.subr.mxu0 0.0
    %2683 = vmatpush1.msra.mxu0 0.0
    %2684 = vmatprep.subr.mxu0 0.0
    %2685 = vmatpush1.msra.mxu0 0.0
    %2686 = vmatprep.subr.mxu0 0.0
    %2687 = vmatpush1.msra.mxu0 0.0
    %2688 = vmatprep.subr.mxu0 0.0
    %2689 = vmatpush1.msra.mxu0 0.0
    %2690 = vmatprep.subr.mxu0 0.0
    %2691 = vmatpush1.msra.mxu0 0.0
    %2692 = vmatprep.subr.mxu0 0.0
    %2693 = vmatpush1.msra.mxu0 0.0
    %2694 = vmatprep.subr.mxu0 0.0
    %2695 = vmatpush1.msra.mxu0 0.0
    %2696 = vmatprep.subr.mxu0 0.0
    %2697 = vmatpush1.msra.mxu0 0.0
    %2698 = vmatprep.subr.mxu0 0.0
    %2699 = vmatpush1.msra.mxu0 0.0
    %2700 = vmatprep.subr.mxu0 0.0
    %2701 = vmatpush1.msra.mxu0 0.0
    %2702 = vmatprep.subr.mxu0 0.0
    %2703 = vmatpush1.msra.mxu0 0.0
    %2704 = vmatprep.subr.mxu0 0.0
    %2705 = vmatpush1.msra.mxu0 0.0
    %2706 = vmatprep.subr.mxu0 0.0
    %2707 = vmatpush1.msra.mxu0 0.0
    %2708 = vmatprep.subr.mxu0 0.0
    %2709 = vmatpush1.msra.mxu0 0.0
    %2710 = vmatprep.subr.mxu0 0.0
    %2711 = vmatpush1.msra.mxu0 0.0
    %2712 = vmatprep.subr.mxu0 0.0
    %2713 = vmatpush1.msra.mxu0 0.0
    %2714 = vmatprep.subr.mxu0 0.0
    %2715 = vmatpush1.msra.mxu0 0.0
    %2716 = vmatprep.subr.mxu0 0.0
    %2717 = vmatpush1.msra.mxu0 0.0
    %2718 = vmatprep.subr.mxu0 0.0
    %2719 = vmatpush1.msra.mxu0 0.0
    %2720 = vmatprep.subr.mxu0 0.0
    %2721 = vmatpush1.msra.mxu0 0.0
    %2722 = vmatprep.subr.mxu0 0.0
    %2723 = vmatpush1.msra.mxu0 0.0
    %2724 = vmatprep.subr.mxu0 0.0
    %2725 = vmatpush1.msra.mxu0 0.0
    %2726 = vmatprep.subr.mxu0 0.0
    %2727 = vmatpush1.msra.mxu0 0.0
    %2728 = vmatprep.subr.mxu0 0.0
    %2729 = vmatpush1.msra.mxu0 0.0
    %2730 = vmatprep.subr.mxu0 0.0
    %2731 = vmatpush1.msra.mxu0 0.0
    %2732 = vmatprep.subr.mxu0 0.0
    %2733 = vmatpush1.msra.mxu0 0.0
    %2734 = vmatprep.mubr.f32.mxu0 0.0
    %2735 = vmatmul.mubr.f32.gmra.mrb[0].mxu0 %v2665
    %v2736 = vpop.f32.mrb[0].mxu0
    %v2737 = vadd.f32 %v2662, %v2736
    %v2738 = vpop.f32.mrb[0].mxu0
    %2739 = vmatprep.mubr.f32.mxu0 0.0
    %2740 = vmatmul.mubr.f32.gmra.mrb[0].mxu0 %v2668
    %v2741 = vpop.f32.mrb[0].mxu0
    %v2742 = vadd.f32 %v2662, %v2741
    %v2743 = vpop.f32.mrb[0].mxu0
    %2744 = vdwg.mxu0
    %v2745 = vmax.f32 %v2737, 0.0
    %v2746 = vmax.f32 %v2742, 0.0
    %s2747 = scalar_lea.vmem %s13, 64
    %v2748 = vld [vmem:[%s2747] sm:$0xff]
    %v2749 = vld [vmem:[%s2747 + $0x8] sm:$0xff]
    %v2750 = vld [vmem:[%s2747 + $0x10] sm:$0xff]
    %v2751 = vld [vmem:[%s2747 + $0x18] sm:$0xff]
    %v2752 = vld [vmem:[%s2747 + $0x20] sm:$0xff]
    %v2753 = vld [vmem:[%s2747 + $0x28] sm:$0xff]
    %v2754 = vld [vmem:[%s2747 + $0x30] sm:$0xff]
    %v2755 = vld [vmem:[%s2747 + $0x38] sm:$0xff]
    %s2756 = scalar_lea.vmem %s14, 1
    %v2757 = vld [vmem:[%s2756] sm:$0x1]
    %v2759 = vlaneseq
    %v2760 = vshrl.u32 %v2759, 7
    %v2761 = vsub.s32 0, %v2760
    %v2762 = vrot.slane %v2757, %v2761
    %vm2764 = vcmask 523264
    %v2766 = vsel %vm2764, %v2745, 0
    %v2769 = vsel %vm2764, %v2746, 0
    %2771 = vmatprep.subr.mxu0 0.0
    %2772 = vmatpush1.msra.mxu0 %v2748
    %2773 = vmatprep.subr.mxu0 0.0
    %2774 = vmatpush1.msra.mxu0 %v2749
    %2775 = vmatprep.subr.mxu0 0.0
    %2776 = vmatpush1.msra.mxu0 %v2750
    %2777 = vmatprep.subr.mxu0 0.0
    %2778 = vmatpush1.msra.mxu0 %v2751
    %2779 = vmatprep.subr.mxu0 0.0
    %2780 = vmatpush1.msra.mxu0 %v2752
    %2781 = vmatprep.subr.mxu0 0.0
    %2782 = vmatpush1.msra.mxu0 %v2753
    %2783 = vmatprep.subr.mxu0 0.0
    %2784 = vmatpush1.msra.mxu0 %v2754
    %2785 = vmatprep.subr.mxu0 0.0
    %2786 = vmatpush1.msra.mxu0 %v2755
    %2787 = vmatprep.subr.mxu0 0.0
    %2788 = vmatpush1.msra.mxu0 0.0
    %2789 = vmatprep.subr.mxu0 0.0
    %2790 = vmatpush1.msra.mxu0 0.0
    %2791 = vmatprep.subr.mxu0 0.0
    %2792 = vmatpush1.msra.mxu0 0.0
    %2793 = vmatprep.subr.mxu0 0.0
    %2794 = vmatpush1.msra.mxu0 0.0
    %2795 = vmatprep.subr.mxu0 0.0
    %2796 = vmatpush1.msra.mxu0 0.0
    %2797 = vmatprep.subr.mxu0 0.0
    %2798 = vmatpush1.msra.mxu0 0.0
    %2799 = vmatprep.subr.mxu0 0.0
    %2800 = vmatpush1.msra.mxu0 0.0
    %2801 = vmatprep.subr.mxu0 0.0
    %2802 = vmatpush1.msra.mxu0 0.0
    %2803 = vmatprep.subr.mxu0 0.0
    %2804 = vmatpush1.msra.mxu0 0.0
    %2805 = vmatprep.subr.mxu0 0.0
    %2806 = vmatpush1.msra.mxu0 0.0
    %2807 = vmatprep.subr.mxu0 0.0
    %2808 = vmatpush1.msra.mxu0 0.0
    %2809 = vmatprep.subr.mxu0 0.0
    %2810 = vmatpush1.msra.mxu0 0.0
    %2811 = vmatprep.subr.mxu0 0.0
    %2812 = vmatpush1.msra.mxu0 0.0
    %2813 = vmatprep.subr.mxu0 0.0
    %2814 = vmatpush1.msra.mxu0 0.0
    %2815 = vmatprep.subr.mxu0 0.0
    %2816 = vmatpush1.msra.mxu0 0.0
    %2817 = vmatprep.subr.mxu0 0.0
    %2818 = vmatpush1.msra.mxu0 0.0
    %2819 = vmatprep.subr.mxu0 0.0
    %2820 = vmatpush1.msra.mxu0 0.0
    %2821 = vmatprep.subr.mxu0 0.0
    %2822 = vmatpush1.msra.mxu0 0.0
    %2823 = vmatprep.subr.mxu0 0.0
    %2824 = vmatpush1.msra.mxu0 0.0
    %2825 = vmatprep.subr.mxu0 0.0
    %2826 = vmatpush1.msra.mxu0 0.0
    %2827 = vmatprep.subr.mxu0 0.0
    %2828 = vmatpush1.msra.mxu0 0.0
    %2829 = vmatprep.subr.mxu0 0.0
    %2830 = vmatpush1.msra.mxu0 0.0
    %2831 = vmatprep.subr.mxu0 0.0
    %2832 = vmatpush1.msra.mxu0 0.0
    %2833 = vmatprep.subr.mxu0 0.0
    %2834 = vmatpush1.msra.mxu0 0.0
    %2835 = vmatprep.mubr.f32.mxu0 0.0
    %2836 = vmatmul.mubr.f32.gmra.mrb[0].mxu0 %v2766
    %v2837 = vpop.f32.mrb[0].mxu0
    %v2838 = vadd.f32 %v2762, %v2837
    %v2839 = vpop.f32.mrb[0].mxu0
    %2840 = vmatprep.mubr.f32.mxu0 0.0
    %2841 = vmatmul.mubr.f32.gmra.mrb[0].mxu0 %v2769
    %v2842 = vpop.f32.mrb[0].mxu0
    %v2843 = vadd.f32 %v2762, %v2842
    %v2844 = vpop.f32.mrb[0].mxu0
    %2845 = vdwg.mxu0
    %v2846 = vadd.f32 %v2615, %v2838
    %v2847 = vadd.f32 %v2616, %v2843
    %v2848 = vld [vmem:[%s15] sm:$0x1]
    %v2849 = vld [vmem:[%s16] sm:$0x1]
    %v2850 = vsel %vm75, %v2846, 0.0
    %2851 = vadd.xlane.f32.xlu0 %v2850
    %v2852 = vpop.xlane.xlu0 %2851
    %v2853 = vsel %vm75, %v2847, 0.0
    %2854 = vadd.xlane.f32.xlu0 %v2853
    %v2855 = vpop.xlane.xlu0 %2854
    %v2856 = vmul.f32 %v2852, %v82
    %v2857 = vmul.f32 %v2855, %v82
    %v2858 = vmul.f32 %v2846, %v2846
    %v2859 = vmul.f32 %v2847, %v2847
    %v2860 = vsel %vm75, %v2858, 0.0
    %2861 = vadd.xlane.f32.xlu0 %v2860
    %v2862 = vpop.xlane.xlu0 %2861
    %v2863 = vsel %vm75, %v2859, 0.0
    %2864 = vadd.xlane.f32.xlu0 %v2863
    %v2865 = vpop.xlane.xlu0 %2864
    %v2866 = vmul.f32 %v2862, %v82
    %v2867 = vmul.f32 %v2865, %v82
    %v2868 = vmul.f32 %v2856, %v2856
    %v2869 = vmul.f32 %v2857, %v2857
    %v2870 = vsub.f32 %v2866, %v2868
    %v2871 = vsub.f32 %v2867, %v2869
    %v2872 = vsub.f32 %v2846, %v2856
    %v2873 = vsub.f32 %v2847, %v2857
    %v2874 = vadd.f32 %v2870, 1e-06
    %v2875 = vadd.f32 %v2871, 1e-06
    %v2876 = vrsqrt.pop %v2874
    %v2877 = vrsqrt.pop %v2875
    %v2878 = vmul.f32 %v2872, %v2876
    %v2879 = vmul.f32 %v2873, %v2877
    %v2881 = vlaneseq
    %v2882 = vshrl.u32 %v2881, 7
    %v2883 = vsub.s32 0, %v2882
    %v2884 = vrot.slane %v2848, %v2883
    %v2886 = vmul.f32 %v2878, %v2884
    %v2887 = vmul.f32 %v2879, %v2884
    %v2889 = vlaneseq
    %v2890 = vshrl.u32 %v2889, 7
    %v2891 = vsub.s32 0, %v2890
    %v2892 = vrot.slane %v2849, %v2891
    %v2894 = vadd.f32 %v2886, %v2892
    %v2895 = vadd.f32 %v2887, %v2892
    %v2896 = vld [vmem:[%s17] sm:$0xff]
    %v2897 = vld [vmem:[%s17 + $0x8] sm:$0xff]
    %v2898 = vld [vmem:[%s17 + $0x10] sm:$0xff]
    %v2899 = vld [vmem:[%s17 + $0x18] sm:$0xff]
    %v2901 = vsel %vm75, %v2894, 0
    %v2904 = vsel %vm75, %v2895, 0
    %2906 = vmatprep.subr.mxu0 0.0
    %2907 = vmatpush1.msra.mxu0 %v2896
    %2908 = vmatprep.subr.mxu0 0.0
    %2909 = vmatpush1.msra.mxu0 %v2897
    %2910 = vmatprep.subr.mxu0 0.0
    %2911 = vmatpush1.msra.mxu0 %v2898
    %2912 = vmatprep.subr.mxu0 0.0
    %2913 = vmatpush1.msra.mxu0 %v2899
    %2914 = vmatprep.subr.mxu0 0.0
    %2915 = vmatpush1.msra.mxu0 0.0
    %2916 = vmatprep.subr.mxu0 0.0
    %2917 = vmatpush1.msra.mxu0 0.0
    %2918 = vmatprep.subr.mxu0 0.0
    %2919 = vmatpush1.msra.mxu0 0.0
    %2920 = vmatprep.subr.mxu0 0.0
    %2921 = vmatpush1.msra.mxu0 0.0
    %2922 = vmatprep.subr.mxu0 0.0
    %2923 = vmatpush1.msra.mxu0 0.0
    %2924 = vmatprep.subr.mxu0 0.0
    %2925 = vmatpush1.msra.mxu0 0.0
    %2926 = vmatprep.subr.mxu0 0.0
    %2927 = vmatpush1.msra.mxu0 0.0
    %2928 = vmatprep.subr.mxu0 0.0
    %2929 = vmatpush1.msra.mxu0 0.0
    %2930 = vmatprep.subr.mxu0 0.0
    %2931 = vmatpush1.msra.mxu0 0.0
    %2932 = vmatprep.subr.mxu0 0.0
    %2933 = vmatpush1.msra.mxu0 0.0
    %2934 = vmatprep.subr.mxu0 0.0
    %2935 = vmatpush1.msra.mxu0 0.0
    %2936 = vmatprep.subr.mxu0 0.0
    %2937 = vmatpush1.msra.mxu0 0.0
    %2938 = vmatprep.subr.mxu0 0.0
    %2939 = vmatpush1.msra.mxu0 0.0
    %2940 = vmatprep.subr.mxu0 0.0
    %2941 = vmatpush1.msra.mxu0 0.0
    %2942 = vmatprep.subr.mxu0 0.0
    %2943 = vmatpush1.msra.mxu0 0.0
    %2944 = vmatprep.subr.mxu0 0.0
    %2945 = vmatpush1.msra.mxu0 0.0
    %2946 = vmatprep.subr.mxu0 0.0
    %2947 = vmatpush1.msra.mxu0 0.0
    %2948 = vmatprep.subr.mxu0 0.0
    %2949 = vmatpush1.msra.mxu0 0.0
    %2950 = vmatprep.subr.mxu0 0.0
    %2951 = vmatpush1.msra.mxu0 0.0
    %2952 = vmatprep.subr.mxu0 0.0
    %2953 = vmatpush1.msra.mxu0 0.0
    %2954 = vmatprep.subr.mxu0 0.0
    %2955 = vmatpush1.msra.mxu0 0.0
    %2956 = vmatprep.subr.mxu0 0.0
    %2957 = vmatpush1.msra.mxu0 0.0
    %2958 = vmatprep.subr.mxu0 0.0
    %2959 = vmatpush1.msra.mxu0 0.0
    %2960 = vmatprep.subr.mxu0 0.0
    %2961 = vmatpush1.msra.mxu0 0.0
    %2962 = vmatprep.subr.mxu0 0.0
    %2963 = vmatpush1.msra.mxu0 0.0
    %2964 = vmatprep.subr.mxu0 0.0
    %2965 = vmatpush1.msra.mxu0 0.0
    %2966 = vmatprep.subr.mxu0 0.0
    %2967 = vmatpush1.msra.mxu0 0.0
    %2968 = vmatprep.subr.mxu0 0.0
    %2969 = vmatpush1.msra.mxu0 0.0
    %2970 = vmatprep.mubr.f32.mxu0 0.0
    %2971 = vmatmul.mubr.f32.gmra.mrb[0].mxu0 %v2901
    %v2972 = vpop.f32.mrb[0].mxu0
    %v2973 = vadd.f32 0.0, %v2972
    %v2974 = vpop.f32.mrb[0].mxu0
    %2975 = vmatprep.mubr.f32.mxu0 0.0
    %2976 = vmatmul.mubr.f32.gmra.mrb[0].mxu0 %v2904
    %v2977 = vpop.f32.mrb[0].mxu0
    %v2978 = vadd.f32 0.0, %v2977
    %v2979 = vpop.f32.mrb[0].mxu0
    %2980 = vdwg.mxu0
    %2981 = vst [vmem:[#allocation2] sm:$0xff] %v2973
    %2982 = vst [vmem:[#allocation2 + $0x8] sm:$0xff] %v2978
    %2983 = vst.msk [vmem:[#allocation4] sm:$0xff] %vm220, %v1622
    %2984 = vrot.lane.b32.xlu0 %v1623, 120
    %v2985 = vpop.permute.xlu0 %2984
    %s2987 = scalar_lea.vmem [#allocation4], 32
    %2988 = vst.msk [vmem:[%s2987] sm:$0xff] %vm220, %v2985
    %s2989 = scalar_lea.vmem [#allocation4], 8
    %2990 = vst.msk [vmem:[%s2989] sm:$0xff] %vm220, %v1814
    %2991 = vrot.lane.b32.xlu0 %v1815, 120
    %v2992 = vpop.permute.xlu0 %2991
    %s2994 = scalar_lea.vmem [#allocation4], 40
    %2995 = vst.msk [vmem:[%s2994] sm:$0xff] %vm220, %v2992
    %s2996 = scalar_lea.vmem [#allocation4], 16
    %2997 = vst.msk [vmem:[%s2996] sm:$0xff] %vm220, %v2168
    %2998 = vrot.lane.b32.xlu0 %v2169, 120
    %v2999 = vpop.permute.xlu0 %2998
    %s3001 = scalar_lea.vmem [#allocation4], 48
    %3002 = vst.msk [vmem:[%s3001] sm:$0xff] %vm220, %v2999
    %s3003 = scalar_lea.vmem [#allocation4], 24
    %3004 = vst.msk [vmem:[%s3003] sm:$0xff] %vm220, %v2443
    %3005 = vrot.lane.b32.xlu0 %v2444, 120
    %v3006 = vpop.permute.xlu0 %3005
    %s3008 = scalar_lea.vmem [#allocation4], 56
    %3009 = vst.msk [vmem:[%s3008] sm:$0xff] %vm220, %v3006
    // Predicated region
    $region74: #{decoder_forward.1} parent=1 // pred_check
      _
    $region75: #{decoder_forward.1} parent=1 // pred_check_branch
      %3011 = sbr.rel (0) target = $region77
    $region76: #{decoder_forward.1} parent=1 // pred_region
      %s3013 = ssub.s32 256, 256
      %3014 = vsyncadd [#allocation3], %s3013
      %s3015 = sshll.u32 [#allocation2], 4
      %s3016 = int_to_ptr.vmem [resolvable:$true] %s3015
      %3021 = dma.vmem_to_hbm [thread:$0]  %s3016, 256, %s18, [#allocation3], 128, 128, 8
    $region77: #{decoder_forward.1} parent=1 // pred_fallthru
      _
    // Predicated region
    $region78: #{decoder_forward.1} parent=1 // pred_check
      _
    $region79: #{decoder_forward.1} parent=1 // pred_check_branch
      %3023 = sbr.rel (0) target = $region81
    $region80: #{decoder_forward.1} parent=1 // pred_region
      %s3025 = ssub.s32 1024, 1024
      %3026 = vsyncadd [#allocation5], %s3025
      %s3027 = sshll.u32 [#allocation4], 4
      %s3028 = int_to_ptr.vmem [resolvable:$true] %s3027
      %3033 = dma.vmem_to_hbm [thread:$0]  %s3028, 1024, %s19, [#allocation5], 128, 128, 8
    $region81: #{decoder_forward.1} parent=1 // pred_fallthru
      _
    // Predicated region
    $region82: #{decoder_forward.1} parent=1 // pred_check
      _
    $region83: #{decoder_forward.1} parent=1 // pred_check_branch
      %3035 = sbr.rel (0) target = $region85
    $region84: #{decoder_forward.1} parent=1 // pred_region
      %3036 = dma.done [#allocation3], 256
    $region85: #{decoder_forward.1} parent=1 // pred_fallthru
      _
    // Predicated region
    $region86: #{decoder_forward.1} parent=1 // pred_check
      _
    $region87: #{decoder_forward.1} parent=1 // pred_check_branch
      %3038 = sbr.rel (0) target = $region89
    $region88: #{decoder_forward.1} parent=1 // pred_region
      %3039 = dma.done [#allocation5], 1024
    $region89: #{decoder_forward.1} parent=1 // pred_fallthru
      _
    %3040 = vsyncpa [#allocation3], 1
    %3041 = vsyncpa [#allocation5], 1

</llo_original>
